<compile_context>
chip_gen: v7x
topology: tpu7x:2x2x1
jax: 0.10.0
libtpu: 0.0.40
codegen_flags: <defaults>
</compile_context>

<pallas_src>
import jax
import jax.numpy as jnp
import numpy as np
from jax.experimental import pallas as pl
from jax.experimental.pallas import tpu as pltpu

HIDDEN = 400   # hidden1 from the PyTorch module
LANE = 128


def _round_up(x, m):
    return (x + m - 1) // m * m


# ---------------------------------------------------------------------------
# Kernel: for one batch tile (tb rows), compute Q for all (padded) atoms.
#   xa_ref    [tb, d_xa]        f32   (x and a concatenated)
#   noise_ref [tb, A_pad, 1]    f32
#   w1xa_ref  [d_xa, 512]       f32   (fc1 weights for the [x, a] columns)
#   b1_ref    [1, 512]          f32   (b1 + b_noise * W1[noise row], padded)
#   w1n_ref   [1, 1, 512]       f32   (w_noise * W1[noise row], padded)
#   w2_ref    [512, 512]        bf16
#   b2_ref    [1, 512]          f32
#   w3_ref    [1, 512]          f32
#   b3_ref    [1, 1]            f32
#   out_ref   [tb*A_pad, 1]     f32   (row r = batch_local*A_pad + atom)
#   h1xa_scr  [tb, 1, 512]      f32   VMEM scratch (16 KiB) for a cheap relayout
# ---------------------------------------------------------------------------
def critic_mlp_kernel(xa_ref, noise_ref, w1xa_ref, b1_ref, w1n_ref,
                      w2_ref, b2_ref, w3_ref, b3_ref, out_ref, h1xa_scr):
    tb = noise_ref.shape[0]
    a_pad = noise_ref.shape[1]
    h_pad = w2_ref.shape[1]

    # fc1, [x, a] part: once per *batch row* (not per (batch, atom) row).  K = 23.
    h1xa = jnp.dot(xa_ref[...], w1xa_ref[...],
                   preferred_element_type=jnp.float32) + b1_ref[...]          # [tb, 512]
    # Go through a tiny VMEM scratch to get a [tb, 1, 512] view, so the atom
    # broadcast below is a plain size-1-dim broadcast (no rank-changing relayout).
    h1xa_scr[:, 0, :] = h1xa

    # fc1, noise part: rank-1 VPU update over all atoms, then ReLU.
    h1 = jnp.maximum(h1xa_scr[...] + noise_ref[...] * w1n_ref[...], 0.0)      # [tb, A_pad, 512] f32

    # Collapse (batch, atom) into matmul rows.  A_pad % 8 == 0 keeps this a pure
    # re-tiling for the f32 layout; the bf16 cast happens after the reshape.
    h1_2d = h1.reshape(tb * a_pad, h_pad).astype(jnp.bfloat16)

    # fc2: the flop-dominant matmul (bf16 inputs, f32 accumulation).
    h2 = jnp.dot(h1_2d, w2_ref[...], preferred_element_type=jnp.float32)
    h2 = jnp.maximum(h2 + b2_ref[...], 0.0)

    # fc3 as a lane reduction: output width 1, no 128-lane padded column of FLOPs.
    out_ref[...] = jnp.sum(h2 * w3_ref[...], axis=-1, keepdims=True) + b3_ref[...]


# ---------------------------------------------------------------------------
# One-time parameter preparation (hoisted off the forward path):
#   * fold fc_noise (1 -> 1 linear) into fc1,
#   * split fc1 into its [x, a] part and its rank-1 noise part,
#   * zero-pad hidden 400 -> 512 lanes (mathematically inert: padded columns stay 0),
#   * cast the fc2 weights to bf16 for the MXU.
# ---------------------------------------------------------------------------
def prepare_critic_params(params):
    f32, bf16 = jnp.float32, jnp.bfloat16
    d_in = params["w1"].shape[0]
    noise_dim = params["w_noise"].shape[1]
    assert noise_dim == 1, "rank-1 fc_noise fold assumes noise_dim == 1 (module default)"
    d_xa = d_in - noise_dim
    h_pad = _round_up(HIDDEN, LANE)

    w1 = params["w1"].astype(f32)
    w1_noise_row = w1[d_xa, :]                                           # [HIDDEN]
    # noise_emb = noise * w_noise + b_noise (scalars), hence:
    #   fc1(ego) = xa @ W1[:d_xa] + noise * (w_noise * W1[d_xa]) + (b1 + b_noise * W1[d_xa])
    b1_eff = params["b1"].astype(f32) + params["b_noise"].astype(f32)[0] * w1_noise_row
    w1n_eff = params["w_noise"].astype(f32)[0, 0] * w1_noise_row

    pad_h = ((0, 0), (0, h_pad - HIDDEN))
    w1xa = jnp.pad(w1[:d_xa, :], pad_h)                                  # [d_xa, 512] f32
    b1p = jnp.pad(b1_eff[None, :], pad_h)                                # [1, 512]   f32
    w1n = jnp.pad(w1n_eff[None, :], pad_h).reshape(1, 1, h_pad)          # [1, 1, 512] f32
    w2p = jnp.pad(params["w2"].astype(bf16),
                  ((0, h_pad - HIDDEN), (0, h_pad - HIDDEN)))            # [512, 512] bf16
    b2p = jnp.pad(params["b2"].astype(f32)[None, :], pad_h)              # [1, 512]   f32
    w3p = jnp.pad(params["w3"].astype(f32)[:, 0][None, :], pad_h)        # [1, 512]   f32
    b3p = params["b3"].reshape(1, 1).astype(f32)                         # [1, 1]     f32
    return {"w1xa": w1xa, "b1p": b1p, "w1n": w1n, "w2p": w2p,
            "b2p": b2p, "w3p": w3p, "b3p": b3p}


def critic_forward(prep, x, a, noise, *, tb_max=16):
    """x: [m, state_dim], a: [m, 1], noise: [m, atom_num, 1] -> Q: [m, atom_num]."""
    m = x.shape[0]
    atoms = noise.shape[1]
    d_xa = prep["w1xa"].shape[0]
    h_pad = prep["w1xa"].shape[1]
    a_pad = _round_up(atoms, 8)          # keep the (batch, atom) collapse sublane-aligned

    # Batch tile: multiple of 8 sublanes.  Small batches run in ONE grid step (no
    # forced split on single-TC chips); large batches yield many "parallel" steps.
    # For very large batches, tb_max can be swept upwards (mind v5e's 16 MiB
    # scoped-VMEM default); at tb=16 the footprint is only a few MiB.
    tb = min(_round_up(m, 8), _round_up(tb_max, 8))
    m_pad = _round_up(m, tb)
    grid = (m_pad // tb,)
    rows_blk = tb * a_pad

    # Tiny per-batch-row glue (no per-(batch, atom) work, no ego materialization).
    xa = jnp.concatenate([x.astype(jnp.float32), a.astype(jnp.float32)], axis=1)
    if m_pad != m:
        xa = jnp.pad(xa, ((0, m_pad - m), (0, 0)))
    noise_p = noise.astype(jnp.float32)
    if m_pad != m or a_pad != atoms:
        noise_p = jnp.pad(noise_p, ((0, m_pad - m), (0, a_pad - atoms), (0, 0)))

    out = pl.pallas_call(
        critic_mlp_kernel,
        out_shape=jax.ShapeDtypeStruct((m_pad * a_pad, 1), jnp.float32),
        grid_spec=pltpu.PrefetchScalarGridSpec(
            num_scalar_prefetch=0,
            grid=grid,
            in_specs=[
                pl.BlockSpec((tb, d_xa), lambda i: (i, 0)),          # [x, a] rows (tiled)
                pl.BlockSpec((tb, a_pad, 1), lambda i: (i, 0, 0)),   # noise (tiled)
                pl.BlockSpec((d_xa, h_pad), lambda i: (0, 0)),       # W1[:d_xa]   (resident)
                pl.BlockSpec((1, h_pad), lambda i: (0, 0)),          # b1 (+ folded fc_noise bias)
                pl.BlockSpec((1, 1, h_pad), lambda i: (0, 0, 0)),    # w_noise * W1[noise row]
                pl.BlockSpec((h_pad, h_pad), lambda i: (0, 0)),      # W2 bf16     (resident)
                pl.BlockSpec((1, h_pad), lambda i: (0, 0)),          # b2
                pl.BlockSpec((1, h_pad), lambda i: (0, 0)),          # w3 row
                pl.BlockSpec((1, 1), lambda i: (0, 0)),              # b3
            ],
            out_specs=pl.BlockSpec((rows_blk, 1), lambda i: (i, 0)),
            scratch_shapes=[pltpu.VMEM((tb, 1, h_pad), jnp.float32)],
        ),
        compiler_params=pltpu.CompilerParams(
            dimension_semantics=("parallel",)),
    )(xa, noise_p, prep["w1xa"], prep["b1p"], prep["w1n"],
      prep["w2p"], prep["b2p"], prep["w3p"], prep["b3p"])

    # Rows are (batch-major, atom-minor); drop the batch/atom padding.
    return out.reshape(m_pad, a_pad)[:m, :atoms]


# ---------------------------------------------------------------------------
# References.
#  - critic_ref_mixed mirrors the kernel's precision policy (f32 fc1/fc3, bf16 fc2).
#  - critic_ref_f32 mirrors the PyTorch module in full f32.
# ---------------------------------------------------------------------------
def critic_ref_mixed(params, x, a, noise):
    quant_num = noise.shape[1]
    bf16 = jnp.bfloat16
    noise_emb = noise @ params["w_noise"] + params["b_noise"]
    w2 = params["w2"].astype(bf16)
    cols = []
    for n in range(quant_num):
        ego = jnp.concatenate([x, a, noise_emb[:, n, :]], axis=1)
        h1 = jnp.maximum(ego @ params["w1"] + params["b1"], 0.0)
        h2 = jnp.maximum(jnp.dot(h1.astype(bf16), w2,
                                 preferred_element_type=jnp.float32) + params["b2"], 0.0)
        cols.append(h2 @ params["w3"] + params["b3"])
    return jnp.concatenate(cols, axis=1)


def critic_ref_f32(params, x, a, noise):
    quant_num = noise.shape[1]
    noise_emb = noise @ params["w_noise"] + params["b_noise"]
    cols = []
    for n in range(quant_num):
        ego = jnp.concatenate([x, a, noise_emb[:, n, :]], axis=1)
        h1 = jnp.maximum(ego @ params["w1"] + params["b1"], 0.0)
        h2 = jnp.maximum(h1 @ params["w2"] + params["b2"], 0.0)
        cols.append(h2 @ params["w3"] + params["b3"])
    return jnp.concatenate(cols, axis=1)


if __name__ == "__main__":
    # Small, module-consistent shapes.
    state_dim = 22
    action_dim = 1
    noise_dim = 1
    atom_num = 51
    m = 2
    d_in = state_dim + action_dim + noise_dim

    key = jax.random.PRNGKey(0)
    ks = jax.random.split(key, 11)

    scale = 0.05
    params = {
        "w1": scale * jax.random.normal(ks[0], (d_in, HIDDEN), jnp.float32),
        "b1": scale * jax.random.normal(ks[1], (HIDDEN,), jnp.float32),
        "w2": scale * jax.random.normal(ks[2], (HIDDEN, HIDDEN), jnp.float32),
        "b2": scale * jax.random.normal(ks[3], (HIDDEN,), jnp.float32),
        "w3": scale * jax.random.normal(ks[4], (HIDDEN, 1), jnp.float32),
        "b3": scale * jax.random.normal(ks[5], (1,), jnp.float32),
        "w_noise": scale * jax.random.normal(ks[6], (1, noise_dim), jnp.float32),
        "b_noise": scale * jax.random.normal(ks[7], (noise_dim,), jnp.float32),
    }

    x = jax.random.normal(ks[8], (m, state_dim), jnp.float32)
    a = jax.random.normal(ks[9], (m, action_dim), jnp.float32)
    # TODO(synk): torch.normal is sampled inside forward() in the module; here the
    # noise is sampled once with a fixed jax.random key and passed in explicitly.
    noise = jax.random.normal(ks[10], (m, atom_num, 1), jnp.float32)

    prep = prepare_critic_params(params)
    fwd = jax.jit(critic_forward)

    Q = jax.block_until_ready(fwd(prep, x, a, noise))
    assert Q.shape == (m, atom_num)

    # Tight check vs. a reference matching the kernel's precision policy.
    Q_mixed = critic_ref_mixed(params, x, a, noise)
    np.testing.assert_allclose(np.asarray(Q), np.asarray(Q_mixed), rtol=2e-3, atol=5e-4)

    # Loose check vs. the full-f32 module semantics (bf16 fc2 rounding only).
    Q_f32 = critic_ref_f32(params, x, a, noise)
    np.testing.assert_allclose(np.asarray(Q), np.asarray(Q_f32), rtol=5e-2, atol=5e-2)

    print("KERNEL_OK")
</pallas_src>

<mosaic_0001>
module attributes {stable_mosaic.version = 11 : i64} {
  func.func @critic_mlp_kernel(%arg0: i32, %arg1: memref<8x23xf32, #tpu.memory_space<vmem>>, %arg2: memref<8x56x1xf32, #tpu.memory_space<vmem>>, %arg3: memref<23x512xf32, #tpu.memory_space<vmem>>, %arg4: memref<1x512xf32, #tpu.memory_space<vmem>>, %arg5: memref<1x1x512xf32, #tpu.memory_space<vmem>>, %arg6: memref<512x512xbf16, #tpu.memory_space<vmem>>, %arg7: memref<1x512xf32, #tpu.memory_space<vmem>>, %arg8: memref<1x512xf32, #tpu.memory_space<vmem>>, %arg9: memref<1x1xf32, #tpu.memory_space<vmem>>, %arg10: memref<448x1xf32, #tpu.memory_space<vmem>>, %arg11: memref<8x1x512xf32, #tpu.memory_space<vmem>>) attributes {dimension_semantics = [#tpu.dimension_semantics<parallel>], iteration_bounds = array<i64: 1>, scalar_prefetch = 0 : i64, scratch_operands = 1 : i64, tpu.core_type = #tpu.core_type<tc>, window_params = [{transform_indices = @transform_0, window_bounds = array<i64: 8, 23>}, {transform_indices = @transform_1, window_bounds = array<i64: 8, 56, 1>}, {pipeline_mode = #tpu.pipeline_mode<synchronous>, transform_indices = @transform_2, window_bounds = array<i64: 23, 512>}, {pipeline_mode = #tpu.pipeline_mode<synchronous>, transform_indices = @transform_3, window_bounds = array<i64: 1, 512>}, {pipeline_mode = #tpu.pipeline_mode<synchronous>, transform_indices = @transform_4, window_bounds = array<i64: 1, 1, 512>}, {pipeline_mode = #tpu.pipeline_mode<synchronous>, transform_indices = @transform_5, window_bounds = array<i64: 512, 512>}, {pipeline_mode = #tpu.pipeline_mode<synchronous>, transform_indices = @transform_6, window_bounds = array<i64: 1, 512>}, {pipeline_mode = #tpu.pipeline_mode<synchronous>, transform_indices = @transform_7, window_bounds = array<i64: 1, 512>}, {pipeline_mode = #tpu.pipeline_mode<synchronous>, transform_indices = @transform_8, window_bounds = array<i64: 1, 1>}, {transform_indices = @transform_9, window_bounds = array<i64: 448, 1>}]} {
    %c0 = arith.constant 0 : index
    %c0_0 = arith.constant 0 : index
    %0 = vector.load %arg1[%c0, %c0_0] : memref<8x23xf32, #tpu.memory_space<vmem>>, vector<8x23xf32>
    %c0_1 = arith.constant 0 : index
    %c0_2 = arith.constant 0 : index
    %1 = vector.load %arg3[%c0_1, %c0_2] : memref<23x512xf32, #tpu.memory_space<vmem>>, vector<23x512xf32>
    %cst = arith.constant dense<0.000000e+00> : vector<8x512xf32>
    %2 = tpu.matmul %0, %1, %cst {dimension_numbers = #tpu.dot_dimension_numbers<[1], [0], [0], [1], [0, 0, 1, 1], [], []>} : vector<8x23xf32>, vector<23x512xf32>, vector<8x512xf32> -> vector<8x512xf32>
    %c0_3 = arith.constant 0 : index
    %c0_4 = arith.constant 0 : index
    %3 = vector.load %arg4[%c0_3, %c0_4] : memref<1x512xf32, #tpu.memory_space<vmem>>, vector<1x512xf32>
    %4 = vector.broadcast %3 : vector<1x512xf32> to vector<8x512xf32>
    %5 = arith.addf %2, %4 : vector<8x512xf32>
    %c0_5 = arith.constant 0 : index
    %c0_6 = arith.constant 0 : index
    %c0_7 = arith.constant 0 : index
    %6 = vector.load %arg11[%c0_5, %c0_6, %c0_7] : memref<8x1x512xf32, #tpu.memory_space<vmem>>, vector<8x1x512xf32>
    %7 = vector.shape_cast %6 : vector<8x1x512xf32> to vector<8x512xf32>
    %8 = vector.shape_cast %5 : vector<8x512xf32> to vector<8x1x512xf32>
    tpu.vector_store %arg11[%c0_5, %c0_6, %c0_7], %8 {strides = array<i32>} : memref<8x1x512xf32, #tpu.memory_space<vmem>>, vector<8x1x512xf32>,
    %c0_8 = arith.constant 0 : index
    %c0_9 = arith.constant 0 : index
    %c0_10 = arith.constant 0 : index
    %9 = vector.load %arg11[%c0_8, %c0_9, %c0_10] : memref<8x1x512xf32, #tpu.memory_space<vmem>>, vector<8x1x512xf32>
    %c0_11 = arith.constant 0 : index
    %c0_12 = arith.constant 0 : index
    %c0_13 = arith.constant 0 : index
    %10 = vector.load %arg2[%c0_11, %c0_12, %c0_13] : memref<8x56x1xf32, #tpu.memory_space<vmem>>, vector<8x56x1xf32>
    %c0_14 = arith.constant 0 : index
    %c0_15 = arith.constant 0 : index
    %c0_16 = arith.constant 0 : index
    %11 = vector.load %arg5[%c0_14, %c0_15, %c0_16] : memref<1x1x512xf32, #tpu.memory_space<vmem>>, vector<1x1x512xf32>
    %12 = vector.broadcast %10 : vector<8x56x1xf32> to vector<8x56x512xf32>
    %13 = vector.broadcast %11 : vector<1x1x512xf32> to vector<8x56x512xf32>
    %14 = arith.mulf %12, %13 : vector<8x56x512xf32>
    %15 = vector.broadcast %9 : vector<8x1x512xf32> to vector<8x56x512xf32>
    %16 = arith.addf %15, %14 : vector<8x56x512xf32>
    %cst_17 = arith.constant 0.000000e+00 : f32
    %17 = vector.broadcast %cst_17 : f32 to vector<8x56x512xf32>
    %18 = arith.maximumf %16, %17 : vector<8x56x512xf32>
    %19 = vector.shape_cast %18 : vector<8x56x512xf32> to vector<448x512xf32>
    %20 = arith.truncf %19 : vector<448x512xf32> to vector<448x512xbf16>
    %c0_18 = arith.constant 0 : index
    %c0_19 = arith.constant 0 : index
    %21 = vector.load %arg6[%c0_18, %c0_19] : memref<512x512xbf16, #tpu.memory_space<vmem>>, vector<512x512xbf16>
    %cst_20 = arith.constant dense<0.000000e+00> : vector<448x512xf32>
    %22 = tpu.matmul %20, %21, %cst_20 {dimension_numbers = #tpu.dot_dimension_numbers<[1], [0], [0], [1], [0, 0, 1, 1], [], []>} : vector<448x512xbf16>, vector<512x512xbf16>, vector<448x512xf32> -> vector<448x512xf32>
    %c0_21 = arith.constant 0 : index
    %c0_22 = arith.constant 0 : index
    %23 = vector.load %arg7[%c0_21, %c0_22] : memref<1x512xf32, #tpu.memory_space<vmem>>, vector<1x512xf32>
    %24 = vector.broadcast %23 : vector<1x512xf32> to vector<448x512xf32>
    %25 = arith.addf %22, %24 : vector<448x512xf32>
    %cst_23 = arith.constant 0.000000e+00 : f32
    %26 = vector.broadcast %cst_23 : f32 to vector<448x512xf32>
    %27 = arith.maximumf %25, %26 : vector<448x512xf32>
    %c0_24 = arith.constant 0 : index
    %c0_25 = arith.constant 0 : index
    %28 = vector.load %arg8[%c0_24, %c0_25] : memref<1x512xf32, #tpu.memory_space<vmem>>, vector<1x512xf32>
    %29 = vector.broadcast %28 : vector<1x512xf32> to vector<448x512xf32>
    %30 = arith.mulf %27, %29 : vector<448x512xf32>
    %cst_26 = arith.constant dense<0.000000e+00> : vector<448xf32>
    %31 = vector.multi_reduction <add>, %30, %cst_26 [1] : vector<448x512xf32> to vector<448xf32>
    %32 = vector.shape_cast %31 : vector<448xf32> to vector<448x1xf32>
    %c0_27 = arith.constant 0 : index
    %c0_28 = arith.constant 0 : index
    %33 = vector.load %arg9[%c0_27, %c0_28] : memref<1x1xf32, #tpu.memory_space<vmem>>, vector<1x1xf32>
    %34 = vector.broadcast %33 : vector<1x1xf32> to vector<448x1xf32>
    %35 = arith.addf %32, %34 : vector<448x1xf32>
    %c0_29 = arith.constant 0 : index
    %c0_30 = arith.constant 0 : index
    %36 = vector.load %arg10[%c0_29, %c0_30] : memref<448x1xf32, #tpu.memory_space<vmem>>, vector<448x1xf32>
    tpu.vector_store %arg10[%c0_29, %c0_30], %35 {strides = array<i32>} : memref<448x1xf32, #tpu.memory_space<vmem>>, vector<448x1xf32>,
    return
  }
  func.func @transform_0(%arg0: i32) -> (i32, i32) {
    %c0_i32 = arith.constant 0 : i32
    %c0_i32_0 = arith.constant 0 : i32
    return %arg0, %c0_i32 : i32, i32
  }
  func.func @transform_1(%arg0: i32) -> (i32, i32, i32) {
    %c0_i32 = arith.constant 0 : i32
    %c0_i32_0 = arith.constant 0 : i32
    %c0_i32_1 = arith.constant 0 : i32
    return %arg0, %c0_i32, %c0_i32_0 : i32, i32, i32
  }
  func.func @transform_2(%arg0: i32) -> (i32, i32) {
    %c0_i32 = arith.constant 0 : i32
    %c0_i32_0 = arith.constant 0 : i32
    %c0_i32_1 = arith.constant 0 : i32
    return %c0_i32, %c0_i32_0 : i32, i32
  }
  func.func @transform_3(%arg0: i32) -> (i32, i32) {
    %c0_i32 = arith.constant 0 : i32
    %c0_i32_0 = arith.constant 0 : i32
    %c0_i32_1 = arith.constant 0 : i32
    return %c0_i32, %c0_i32_0 : i32, i32
  }
  func.func @transform_4(%arg0: i32) -> (i32, i32, i32) {
    %c0_i32 = arith.constant 0 : i32
    %c0_i32_0 = arith.constant 0 : i32
    %c0_i32_1 = arith.constant 0 : i32
    %c0_i32_2 = arith.constant 0 : i32
    return %c0_i32, %c0_i32_0, %c0_i32_1 : i32, i32, i32
  }
  func.func @transform_5(%arg0: i32) -> (i32, i32) {
    %c0_i32 = arith.constant 0 : i32
    %c0_i32_0 = arith.constant 0 : i32
    %c0_i32_1 = arith.constant 0 : i32
    return %c0_i32, %c0_i32_0 : i32, i32
  }
  func.func @transform_6(%arg0: i32) -> (i32, i32) {
    %c0_i32 = arith.constant 0 : i32
    %c0_i32_0 = arith.constant 0 : i32
    %c0_i32_1 = arith.constant 0 : i32
    return %c0_i32, %c0_i32_0 : i32, i32
  }
  func.func @transform_7(%arg0: i32) -> (i32, i32) {
    %c0_i32 = arith.constant 0 : i32
    %c0_i32_0 = arith.constant 0 : i32
    %c0_i32_1 = arith.constant 0 : i32
    return %c0_i32, %c0_i32_0 : i32, i32
  }
  func.func @transform_8(%arg0: i32) -> (i32, i32) {
    %c0_i32 = arith.constant 0 : i32
    %c0_i32_0 = arith.constant 0 : i32
    %c0_i32_1 = arith.constant 0 : i32
    return %c0_i32, %c0_i32_0 : i32, i32
  }
  func.func @transform_9(%arg0: i32) -> (i32, i32) {
    %c0_i32 = arith.constant 0 : i32
    %c0_i32_0 = arith.constant 0 : i32
    return %arg0, %c0_i32 : i32, i32
  }
}

</mosaic_0001>

<llo_original>
// kernel: critic_forward.1
$region0: #{critic_forward.1}
  #allocation0 [shape = 'u32[]', space=smem, size = 0x4, offset = 0x4, fixed_abs, tag = 'smem constant byte address 0x4 - core index']
  #allocation1 [shape = 'u32[144,128]{1,0:T(1,128)}', space=vmem, size = 0x12000, scoped, tag = 'internal scratch']
  #allocation2 [shape = 'f32[8,1,512]{2,1,0:T(1,128)}', space=vmem, size = 0x4000, scoped, tag = 'scratch operand']
  #allocation3 [shape = 'f32[1,1]{1,0:T(1,128)S(1)}', space=vmem, size = 0x200, scoped, tag = 'scoped memory for critic_forward.1']
  %s0 = inlined_call_operand.vmem [shape: f32[8,23], index: 0, kind: input, shape index: {}]
  %s1 = inlined_call_operand.vmem [shape: f32[8,56,1], index: 1, kind: input, shape index: {}]
  %s2 = inlined_call_operand.vmem [shape: f32[23,512], index: 2, kind: input, shape index: {}]
  %s3 = inlined_call_operand.vmem [shape: f32[1,512], index: 3, kind: input, shape index: {}]
  %s4 = inlined_call_operand.vmem [shape: f32[1,1,512], index: 4, kind: input, shape index: {}]
  %s5 = inlined_call_operand.hbm [shape: bf16[512,512], index: 5, kind: input, shape index: {}]
  %s6 = inlined_call_operand.vmem [shape: f32[1,512], index: 6, kind: input, shape index: {}]
  %s7 = inlined_call_operand.vmem [shape: f32[1,512], index: 7, kind: input, shape index: {}]
  %s8 = inlined_call_operand.<no memory space> [shape: f32[1,1], index: 8, kind: input, shape index: {}]
  %s9 = inlined_call_operand.vmem [shape: f32[448,1], index: 9, kind: output, shape index: {}]
  %s10 = sld [smem:[#allocation0]]
  $region50: #{critic_forward.1} parent=0
    _
  %s12 = ssub.s32 1, %s10
  %s13 = scalar_select 0, %s12, %s10
  %v14 = vstv %s8
  %15 = vst [vmem:[#allocation3] sm:$0x1] %v14
  $region1: #{critic_forward.1} parent=0
    #allocation4 [shape = 'u8[524288]{0}', space=vmem, size = 0x80000, scoped, tag = 'input window, operand 5, single buffered']
    #allocation5 [shape = 's32[1]{0}', space=sflag, size = 0x4, scoped, tag = 'scoped memory for critic_forward.1']
    %16 = vsyncpa [#allocation5], 0
    // Predicated region
    $region2: #{critic_forward.1} parent=1 // pred_check
      _
    $region3: #{critic_forward.1} parent=1 // pred_check_branch
      %18 = sbr.rel (0) target = $region5
    $region4: #{critic_forward.1} parent=1 // pred_region
      _
    $region5: #{critic_forward.1} parent=1 // pred_fallthru
      _
    // Predicated region
    $region6: #{critic_forward.1} parent=1 // pred_check
      _
    $region7: #{critic_forward.1} parent=1 // pred_check_branch
      %20 = sbr.rel (0) target = $region9
    $region8: #{critic_forward.1} parent=1 // pred_region
      _
    $region9: #{critic_forward.1} parent=1 // pred_fallthru
      _
    // Predicated region
    $region10: #{critic_forward.1} parent=1 // pred_check
      _
    $region11: #{critic_forward.1} parent=1 // pred_check_branch
      %22 = sbr.rel (0) target = $region13
    $region12: #{critic_forward.1} parent=1 // pred_region
      _
    $region13: #{critic_forward.1} parent=1 // pred_fallthru
      _
    // Predicated region
    $region14: #{critic_forward.1} parent=1 // pred_check
      _
    $region15: #{critic_forward.1} parent=1 // pred_check_branch
      %24 = sbr.rel (0) target = $region17
    $region16: #{critic_forward.1} parent=1 // pred_region
      _
    $region17: #{critic_forward.1} parent=1 // pred_fallthru
      _
    // Predicated region
    $region18: #{critic_forward.1} parent=1 // pred_check
      _
    $region19: #{critic_forward.1} parent=1 // pred_check_branch
      %26 = sbr.rel (0) target = $region21
    $region20: #{critic_forward.1} parent=1 // pred_region
      _
    $region21: #{critic_forward.1} parent=1 // pred_fallthru
      _
    // Predicated region
    $region22: #{critic_forward.1} parent=1 // pred_check
      _
    $region23: #{critic_forward.1} parent=1 // pred_check_branch
      %28 = sbr.rel (0) target = $region25
    $region24: #{critic_forward.1} parent=1 // pred_region
      %s30 = ssub.s32 16384, 16384
      %31 = vsyncadd [#allocation5], %s30
      %s32 = sshll.u32 [#allocation4], 4
      %s33 = int_to_ptr.vmem [resolvable:$true] %s32
      %38 = dma.hbm_to_vmem [thread:$0]  %s5, 16384, %s33, [#allocation5], 256, 256, 16
    $region25: #{critic_forward.1} parent=1 // pred_fallthru
      _
    // Predicated region
    $region26: #{critic_forward.1} parent=1 // pred_check
      _
    $region27: #{critic_forward.1} parent=1 // pred_check_branch
      %40 = sbr.rel (0) target = $region29
    $region28: #{critic_forward.1} parent=1 // pred_region
      _
    $region29: #{critic_forward.1} parent=1 // pred_fallthru
      _
    // Predicated region
    $region30: #{critic_forward.1} parent=1 // pred_check
      _
    $region31: #{critic_forward.1} parent=1 // pred_check_branch
      %42 = sbr.rel (0) target = $region33
    $region32: #{critic_forward.1} parent=1 // pred_region
      _
    $region33: #{critic_forward.1} parent=1 // pred_fallthru
      _
    // Predicated region
    $region34: #{critic_forward.1} parent=1 // pred_check
      _
    $region35: #{critic_forward.1} parent=1 // pred_check_branch
      %44 = sbr.rel (0) target = $region37
    $region36: #{critic_forward.1} parent=1 // pred_region
      _
    $region37: #{critic_forward.1} parent=1 // pred_fallthru
      _
    // Predicated region
    $region38: #{critic_forward.1} parent=1 // pred_check
      _
    $region39: #{critic_forward.1} parent=1 // pred_check_branch
      %46 = sbr.rel (0) target = $region41
    $region40: #{critic_forward.1} parent=1 // pred_region
      %47 = dma.done [#allocation5], 16384
    $region41: #{critic_forward.1} parent=1 // pred_fallthru
      _
    %v48 = vld [vmem:[%s0] sm:$0xff]
    %v49 = vld [vmem:[%s2] sm:$0xff]
    %v50 = vld [vmem:[%s2 + $0x8] sm:$0xff]
    %v51 = vld [vmem:[%s2 + $0x10] sm:$0xff]
    %v52 = vld [vmem:[%s2 + $0x18] sm:$0xff]
    %v53 = vld [vmem:[%s2 + $0x20] sm:$0xff]
    %v54 = vld [vmem:[%s2 + $0x28] sm:$0xff]
    %v55 = vld [vmem:[%s2 + $0x30] sm:$0xff]
    %v56 = vld [vmem:[%s2 + $0x38] sm:$0xff]
    %v57 = vld [vmem:[%s2 + $0x40] sm:$0x7f]
    %v58 = vld [vmem:[%s2 + $0x48] sm:$0x7f]
    %v59 = vld [vmem:[%s2 + $0x50] sm:$0x7f]
    %v60 = vld [vmem:[%s2 + $0x58] sm:$0x7f]
    %v61 = vld [vmem:[%s3] sm:$0xf]
    %v63 = vlaneseq
    %v64 = vshrl.u32 %v63, 7
    %v65 = vsub.s32 0, %v64
    %v66 = vrot.slane %v61, %v65
    %v67 = vlaneseq
    %v68 = vshrl.u32 %v67, 7
    %v69 = vsub.s32 1, %v68
    %v70 = vrot.slane %v61, %v69
    %v71 = vlaneseq
    %v72 = vshrl.u32 %v71, 7
    %v73 = vsub.s32 2, %v72
    %v74 = vrot.slane %v61, %v73
    %v75 = vlaneseq
    %v76 = vshrl.u32 %v75, 7
    %v77 = vsub.s32 3, %v76
    %v78 = vrot.slane %v61, %v77
    %vm83 = vcmask 187392
    %v85 = vsel %vm83, %v48, 0
    %vm87 = vcmask 1046528
    %v89 = vsel %vm87, %v57, 0
    %v92 = vsel %vm87, %v58, 0
    %v95 = vsel %vm87, %v59, 0
    %v98 = vsel %vm87, %v60, 0
    %100 = vmatprep.subr.mxu0 %v50
    %101 = vmatpush1.msra.mxu0 %v49
    %102 = vmatprep.subr.mxu0 %v54
    %103 = vmatpush1.msra.mxu0 %v53
    %104 = vmatprep.subr.mxu0 %v92
    %105 = vmatpush1.msra.mxu0 %v89
    %106 = vmatprep.subr.mxu0 0.0
    %107 = vmatpush1.msra.mxu0 0.0
    %108 = vmatprep.subr.mxu0 0.0
    %109 = vmatpush1.msra.mxu0 0.0
    %110 = vmatprep.subr.mxu0 0.0
    %111 = vmatpush1.msra.mxu0 0.0
    %112 = vmatprep.subr.mxu0 0.0
    %113 = vmatpush1.msra.mxu0 0.0
    %114 = vmatprep.subr.mxu0 0.0
    %115 = vmatpush1.msra.mxu0 0.0
    %116 = vmatprep.subr.mxu0 0.0
    %117 = vmatpush1.msra.mxu0 0.0
    %118 = vmatprep.subr.mxu0 0.0
    %119 = vmatpush1.msra.mxu0 0.0
    %120 = vmatprep.subr.mxu0 0.0
    %121 = vmatpush1.msra.mxu0 0.0
    %122 = vmatprep.subr.mxu0 0.0
    %123 = vmatpush1.msra.mxu0 0.0
    %124 = vmatprep.subr.mxu0 0.0
    %125 = vmatpush1.msra.mxu0 0.0
    %126 = vmatprep.subr.mxu0 0.0
    %127 = vmatpush1.msra.mxu0 0.0
    %128 = vmatprep.subr.mxu0 0.0
    %129 = vmatpush1.msra.mxu0 0.0
    %130 = vmatprep.subr.mxu0 0.0
    %131 = vmatpush1.msra.mxu0 0.0
    %132 = vmatprep.subr.mxu0 0.0
    %133 = vmatpush1.msra.mxu0 0.0
    %134 = vmatprep.subr.mxu0 0.0
    %135 = vmatpush1.msra.mxu0 0.0
    %136 = vmatprep.subr.mxu0 0.0
    %137 = vmatpush1.msra.mxu0 0.0
    %138 = vmatprep.subr.mxu0 0.0
    %139 = vmatpush1.msra.mxu0 0.0
    %140 = vmatprep.subr.mxu0 0.0
    %141 = vmatpush1.msra.mxu0 0.0
    %142 = vmatprep.subr.mxu0 0.0
    %143 = vmatpush1.msra.mxu0 0.0
    %144 = vmatprep.subr.mxu0 0.0
    %145 = vmatpush1.msra.mxu0 0.0
    %146 = vmatprep.subr.mxu0 0.0
    %147 = vmatpush1.msra.mxu0 0.0
    %148 = vmatprep.subr.mxu0 0.0
    %149 = vmatpush1.msra.mxu0 0.0
    %150 = vmatprep.subr.mxu0 0.0
    %151 = vmatpush1.msra.mxu0 0.0
    %152 = vmatprep.subr.mxu0 0.0
    %153 = vmatpush1.msra.mxu0 0.0
    %154 = vmatprep.subr.mxu0 0.0
    %155 = vmatpush1.msra.mxu0 0.0
    %156 = vmatprep.subr.mxu0 0.0
    %157 = vmatpush1.msra.mxu0 0.0
    %158 = vmatprep.subr.mxu0 0.0
    %159 = vmatpush1.msra.mxu0 0.0
    %160 = vmatprep.subr.mxu0 0.0
    %161 = vmatpush1.msra.mxu0 0.0
    %162 = vmatprep.subr.mxu0 0.0
    %163 = vmatpush1.msra.mxu0 0.0
    %164 = vmatprep.mubr.f32.mxu0 0.0
    %165 = vmatmul.mubr.f32.gmra.mrb[0].mxu0 %v85
    %v166 = vpop.f32.mrb[0].mxu0
    %v167 = vadd.f32 %v66, %v166
    %v168 = vpop.f32.mrb[0].mxu0
    %v169 = vadd.f32 %v70, %v168
    %170 = vdwg.mxu0
    %171 = vmatprep.subr.mxu0 %v52
    %172 = vmatpush1.msra.mxu0 %v51
    %173 = vmatprep.subr.mxu0 %v56
    %174 = vmatpush1.msra.mxu0 %v55
    %175 = vmatprep.subr.mxu0 %v98
    %176 = vmatpush1.msra.mxu0 %v95
    %177 = vmatprep.subr.mxu0 0.0
    %178 = vmatpush1.msra.mxu0 0.0
    %179 = vmatprep.subr.mxu0 0.0
    %180 = vmatpush1.msra.mxu0 0.0
    %181 = vmatprep.subr.mxu0 0.0
    %182 = vmatpush1.msra.mxu0 0.0
    %183 = vmatprep.subr.mxu0 0.0
    %184 = vmatpush1.msra.mxu0 0.0
    %185 = vmatprep.subr.mxu0 0.0
    %186 = vmatpush1.msra.mxu0 0.0
    %187 = vmatprep.subr.mxu0 0.0
    %188 = vmatpush1.msra.mxu0 0.0
    %189 = vmatprep.subr.mxu0 0.0
    %190 = vmatpush1.msra.mxu0 0.0
    %191 = vmatprep.subr.mxu0 0.0
    %192 = vmatpush1.msra.mxu0 0.0
    %193 = vmatprep.subr.mxu0 0.0
    %194 = vmatpush1.msra.mxu0 0.0
    %195 = vmatprep.subr.mxu0 0.0
    %196 = vmatpush1.msra.mxu0 0.0
    %197 = vmatprep.subr.mxu0 0.0
    %198 = vmatpush1.msra.mxu0 0.0
    %199 = vmatprep.subr.mxu0 0.0
    %200 = vmatpush1.msra.mxu0 0.0
    %201 = vmatprep.subr.mxu0 0.0
    %202 = vmatpush1.msra.mxu0 0.0
    %203 = vmatprep.subr.mxu0 0.0
    %204 = vmatpush1.msra.mxu0 0.0
    %205 = vmatprep.subr.mxu0 0.0
    %206 = vmatpush1.msra.mxu0 0.0
    %207 = vmatprep.subr.mxu0 0.0
    %208 = vmatpush1.msra.mxu0 0.0
    %209 = vmatprep.subr.mxu0 0.0
    %210 = vmatpush1.msra.mxu0 0.0
    %211 = vmatprep.subr.mxu0 0.0
    %212 = vmatpush1.msra.mxu0 0.0
    %213 = vmatprep.subr.mxu0 0.0
    %214 = vmatpush1.msra.mxu0 0.0
    %215 = vmatprep.subr.mxu0 0.0
    %216 = vmatpush1.msra.mxu0 0.0
    %217 = vmatprep.subr.mxu0 0.0
    %218 = vmatpush1.msra.mxu0 0.0
    %219 = vmatprep.subr.mxu0 0.0
    %220 = vmatpush1.msra.mxu0 0.0
    %221 = vmatprep.subr.mxu0 0.0
    %222 = vmatpush1.msra.mxu0 0.0
    %223 = vmatprep.subr.mxu0 0.0
    %224 = vmatpush1.msra.mxu0 0.0
    %225 = vmatprep.subr.mxu0 0.0
    %226 = vmatpush1.msra.mxu0 0.0
    %227 = vmatprep.subr.mxu0 0.0
    %228 = vmatpush1.msra.mxu0 0.0
    %229 = vmatprep.subr.mxu0 0.0
    %230 = vmatpush1.msra.mxu0 0.0
    %231 = vmatprep.subr.mxu0 0.0
    %232 = vmatpush1.msra.mxu0 0.0
    %233 = vmatprep.subr.mxu0 0.0
    %234 = vmatpush1.msra.mxu0 0.0
    %235 = vmatprep.mubr.f32.mxu0 0.0
    %236 = vmatmul.mubr.f32.gmra.mrb[0].mxu0 %v85
    %v237 = vpop.f32.mrb[0].mxu0
    %v238 = vadd.f32 %v74, %v237
    %v239 = vpop.f32.mrb[0].mxu0
    %v240 = vadd.f32 %v78, %v239
    %241 = vdwg.mxu0
    %v246 = vcombine.low %v167, %v169
    %v247 = vcombine.high %v167, %v169
    %v248 = vcombine.low %v238, %v240
    %v249 = vcombine.high %v238, %v240
    %v251 = vunpack.c.l.s4 1966171168
    %v252 = vunpack.c.0.s8 %v251
    %v253 = vlaneseq
    %v254 = vshrl.u32 %v253, 7
    %v255 = vsub.s32 %v252, %v254
    %v256 = vrot.slane %v246, %v255
    %v258 = vunpack.c.l.s4 1966171168
    %v259 = vunpack.c.0.s8 %v258
    %v260 = vlaneseq
    %v261 = vshrl.u32 %v260, 7
    %v262 = vsub.s32 %v259, %v261
    %v263 = vrot.slane %v247, %v262
    %v265 = vunpack.c.l.s4 1966171168
    %v266 = vunpack.c.0.s8 %v265
    %v267 = vlaneseq
    %v268 = vshrl.u32 %v267, 7
    %v269 = vsub.s32 %v266, %v268
    %v270 = vrot.slane %v248, %v269
    %v272 = vunpack.c.l.s4 1966171168
    %v273 = vunpack.c.0.s8 %v272
    %v274 = vlaneseq
    %v275 = vshrl.u32 %v274, 7
    %v276 = vsub.s32 %v273, %v275
    %v277 = vrot.slane %v249, %v276
    %v278 = vcombine.low %v256, %v270
    %v279 = vcombine.high %v256, %v270
    %v280 = vcombine.low %v263, %v277
    %v281 = vcombine.high %v263, %v277
    %v283 = vunpack.c.l.s4 1966171168
    %v284 = vunpack.c.0.s8 %v283
    %v285 = vlaneseq
    %v286 = vshrl.u32 %v285, 7
    %v287 = vsub.s32 %v284, %v286
    %v288 = vrot.slane %v278, %v287
    %v290 = vunpack.c.l.s4 1966171168
    %v291 = vunpack.c.0.s8 %v290
    %v292 = vlaneseq
    %v293 = vshrl.u32 %v292, 7
    %v294 = vsub.s32 %v291, %v293
    %v295 = vrot.slane %v280, %v294
    %v297 = vunpack.c.l.s4 1966171168
    %v298 = vunpack.c.0.s8 %v297
    %v299 = vlaneseq
    %v300 = vshrl.u32 %v299, 7
    %v301 = vsub.s32 %v298, %v300
    %v302 = vrot.slane %v279, %v301
    %v304 = vunpack.c.l.s4 1966171168
    %v305 = vunpack.c.0.s8 %v304
    %v306 = vlaneseq
    %v307 = vshrl.u32 %v306, 7
    %v308 = vsub.s32 %v305, %v307
    %v309 = vrot.slane %v281, %v308
    %v310 = vcombine.high %v288, %v288
    %v311 = vcombine.high %v295, %v295
    %v312 = vcombine.high %v302, %v302
    %v313 = vcombine.high %v309, %v309
    %v322 = vlaneseq
    %vm323 = vcmp.ge.s32.totalorder %v322, 0
    %vm324 = vcmp.lt.s32.totalorder %v322, 512
    %vm325 = vmand %vm323, %vm324
    %326 = vst.msk [vmem:[#allocation2] sm:$0xf] %vm325, %v288
    %327 = vst.msk [vmem:[#allocation2 + $0x4] sm:$0xf] %vm325, %v302
    %328 = vst.msk [vmem:[#allocation2 + $0x8] sm:$0xf] %vm325, %v310
    %329 = vst.msk [vmem:[#allocation2 + $0xc] sm:$0xf] %vm325, %v312
    %330 = vst.msk [vmem:[#allocation2 + $0x10] sm:$0xf] %vm325, %v295
    %331 = vst.msk [vmem:[#allocation2 + $0x14] sm:$0xf] %vm325, %v309
    %332 = vst.msk [vmem:[#allocation2 + $0x18] sm:$0xf] %vm325, %v311
    %333 = vst.msk [vmem:[#allocation2 + $0x1c] sm:$0xf] %vm325, %v313
    %v334 = vld [vmem:[#allocation2] sm:$0xf]
    %v335 = vld [vmem:[#allocation2 + $0x4] sm:$0xf]
    %v336 = vld [vmem:[#allocation2 + $0x8] sm:$0xf]
    %v337 = vld [vmem:[#allocation2 + $0xc] sm:$0xf]
    %v338 = vld [vmem:[#allocation2 + $0x10] sm:$0xf]
    %v339 = vld [vmem:[#allocation2 + $0x14] sm:$0xf]
    %v340 = vld [vmem:[#allocation2 + $0x18] sm:$0xf]
    %v341 = vld [vmem:[#allocation2 + $0x1c] sm:$0xf]
    %v342 = vld [vmem:[%s1] sm:$0xff]
    %v343 = vld [vmem:[%s1 + $0x8] sm:$0xff]
    %v344 = vld [vmem:[%s1 + $0x10] sm:$0xff]
    %v345 = vld [vmem:[%s1 + $0x18] sm:$0xff]
    %v346 = vld [vmem:[%s1 + $0x20] sm:$0xff]
    %v347 = vld [vmem:[%s1 + $0x28] sm:$0xff]
    %v348 = vld [vmem:[%s1 + $0x30] sm:$0xff]
    %v349 = vld [vmem:[%s1 + $0x38] sm:$0xff]
    %v350 = vld [vmem:[%s1 + $0x40] sm:$0xff]
    %v351 = vld [vmem:[%s1 + $0x48] sm:$0xff]
    %v352 = vld [vmem:[%s1 + $0x50] sm:$0xff]
    %v353 = vld [vmem:[%s1 + $0x58] sm:$0xff]
    %v354 = vld [vmem:[%s1 + $0x60] sm:$0xff]
    %v355 = vld [vmem:[%s1 + $0x68] sm:$0xff]
    %v356 = vld [vmem:[%s1 + $0x70] sm:$0xff]
    %v357 = vld [vmem:[%s1 + $0x78] sm:$0xff]
    %v358 = vld [vmem:[%s1 + $0x80] sm:$0xff]
    %v359 = vld [vmem:[%s1 + $0x88] sm:$0xff]
    %v360 = vld [vmem:[%s1 + $0x90] sm:$0xff]
    %v361 = vld [vmem:[%s1 + $0x98] sm:$0xff]
    %v362 = vld [vmem:[%s1 + $0xa0] sm:$0xff]
    %v363 = vld [vmem:[%s1 + $0xa8] sm:$0xff]
    %v364 = vld [vmem:[%s1 + $0xb0] sm:$0xff]
    %v365 = vld [vmem:[%s1 + $0xb8] sm:$0xff]
    %v366 = vld [vmem:[%s1 + $0xc0] sm:$0xff]
    %v367 = vld [vmem:[%s1 + $0xc8] sm:$0xff]
    %v368 = vld [vmem:[%s1 + $0xd0] sm:$0xff]
    %v369 = vld [vmem:[%s1 + $0xd8] sm:$0xff]
    %v370 = vld [vmem:[%s1 + $0xe0] sm:$0xff]
    %v371 = vld [vmem:[%s1 + $0xe8] sm:$0xff]
    %v372 = vld [vmem:[%s1 + $0xf0] sm:$0xff]
    %v373 = vld [vmem:[%s1 + $0xf8] sm:$0xff]
    %v374 = vld [vmem:[%s1 + $0x100] sm:$0xff]
    %v375 = vld [vmem:[%s1 + $0x108] sm:$0xff]
    %v376 = vld [vmem:[%s1 + $0x110] sm:$0xff]
    %v377 = vld [vmem:[%s1 + $0x118] sm:$0xff]
    %v378 = vld [vmem:[%s1 + $0x120] sm:$0xff]
    %v379 = vld [vmem:[%s1 + $0x128] sm:$0xff]
    %v380 = vld [vmem:[%s1 + $0x130] sm:$0xff]
    %v381 = vld [vmem:[%s1 + $0x138] sm:$0xff]
    %v382 = vld [vmem:[%s1 + $0x140] sm:$0xff]
    %v383 = vld [vmem:[%s1 + $0x148] sm:$0xff]
    %v384 = vld [vmem:[%s1 + $0x150] sm:$0xff]
    %v385 = vld [vmem:[%s1 + $0x158] sm:$0xff]
    %v386 = vld [vmem:[%s1 + $0x160] sm:$0xff]
    %v387 = vld [vmem:[%s1 + $0x168] sm:$0xff]
    %v388 = vld [vmem:[%s1 + $0x170] sm:$0xff]
    %v389 = vld [vmem:[%s1 + $0x178] sm:$0xff]
    %v390 = vld [vmem:[%s1 + $0x180] sm:$0xff]
    %v391 = vld [vmem:[%s1 + $0x188] sm:$0xff]
    %v392 = vld [vmem:[%s1 + $0x190] sm:$0xff]
    %v393 = vld [vmem:[%s1 + $0x198] sm:$0xff]
    %v394 = vld [vmem:[%s1 + $0x1a0] sm:$0xff]
    %v395 = vld [vmem:[%s1 + $0x1a8] sm:$0xff]
    %v396 = vld [vmem:[%s1 + $0x1b0] sm:$0xff]
    %v397 = vld [vmem:[%s1 + $0x1b8] sm:$0xff]
    %v398 = vld [vmem:[%s4] sm:$0xf]
    %400 = vset.pattern.permute.xlu0 0
    %401 = vperm.xlu0 %400, %v342
    %v402 = vpop.permute.xlu0 %401
    %405 = vset.pattern.permute.xlu0 0
    %406 = vperm.xlu0 %405, %v343
    %v407 = vpop.permute.xlu0 %406
    %410 = vset.pattern.permute.xlu0 0
    %411 = vperm.xlu0 %410, %v344
    %v412 = vpop.permute.xlu0 %411
    %415 = vset.pattern.permute.xlu0 0
    %416 = vperm.xlu0 %415, %v345
    %v417 = vpop.permute.xlu0 %416
    %420 = vset.pattern.permute.xlu0 0
    %421 = vperm.xlu0 %420, %v346
    %v422 = vpop.permute.xlu0 %421
    %425 = vset.pattern.permute.xlu0 0
    %426 = vperm.xlu0 %425, %v347
    %v427 = vpop.permute.xlu0 %426
    %430 = vset.pattern.permute.xlu0 0
    %431 = vperm.xlu0 %430, %v348
    %v432 = vpop.permute.xlu0 %431
    %435 = vset.pattern.permute.xlu0 0
    %436 = vperm.xlu0 %435, %v349
    %v437 = vpop.permute.xlu0 %436
    %440 = vset.pattern.permute.xlu0 0
    %441 = vperm.xlu0 %440, %v350
    %v442 = vpop.permute.xlu0 %441
    %445 = vset.pattern.permute.xlu0 0
    %446 = vperm.xlu0 %445, %v351
    %v447 = vpop.permute.xlu0 %446
    %450 = vset.pattern.permute.xlu0 0
    %451 = vperm.xlu0 %450, %v352
    %v452 = vpop.permute.xlu0 %451
    %455 = vset.pattern.permute.xlu0 0
    %456 = vperm.xlu0 %455, %v353
    %v457 = vpop.permute.xlu0 %456
    %460 = vset.pattern.permute.xlu0 0
    %461 = vperm.xlu0 %460, %v354
    %v462 = vpop.permute.xlu0 %461
    %465 = vset.pattern.permute.xlu0 0
    %466 = vperm.xlu0 %465, %v355
    %v467 = vpop.permute.xlu0 %466
    %470 = vset.pattern.permute.xlu0 0
    %471 = vperm.xlu0 %470, %v356
    %v472 = vpop.permute.xlu0 %471
    %475 = vset.pattern.permute.xlu0 0
    %476 = vperm.xlu0 %475, %v357
    %v477 = vpop.permute.xlu0 %476
    %480 = vset.pattern.permute.xlu0 0
    %481 = vperm.xlu0 %480, %v358
    %v482 = vpop.permute.xlu0 %481
    %485 = vset.pattern.permute.xlu0 0
    %486 = vperm.xlu0 %485, %v359
    %v487 = vpop.permute.xlu0 %486
    %490 = vset.pattern.permute.xlu0 0
    %491 = vperm.xlu0 %490, %v360
    %v492 = vpop.permute.xlu0 %491
    %495 = vset.pattern.permute.xlu0 0
    %496 = vperm.xlu0 %495, %v361
    %v497 = vpop.permute.xlu0 %496
    %500 = vset.pattern.permute.xlu0 0
    %501 = vperm.xlu0 %500, %v362
    %v502 = vpop.permute.xlu0 %501
    %505 = vset.pattern.permute.xlu0 0
    %506 = vperm.xlu0 %505, %v363
    %v507 = vpop.permute.xlu0 %506
    %510 = vset.pattern.permute.xlu0 0
    %511 = vperm.xlu0 %510, %v364
    %v512 = vpop.permute.xlu0 %511
    %515 = vset.pattern.permute.xlu0 0
    %516 = vperm.xlu0 %515, %v365
    %v517 = vpop.permute.xlu0 %516
    %520 = vset.pattern.permute.xlu0 0
    %521 = vperm.xlu0 %520, %v366
    %v522 = vpop.permute.xlu0 %521
    %525 = vset.pattern.permute.xlu0 0
    %526 = vperm.xlu0 %525, %v367
    %v527 = vpop.permute.xlu0 %526
    %530 = vset.pattern.permute.xlu0 0
    %531 = vperm.xlu0 %530, %v368
    %v532 = vpop.permute.xlu0 %531
    %535 = vset.pattern.permute.xlu0 0
    %536 = vperm.xlu0 %535, %v369
    %v537 = vpop.permute.xlu0 %536
    %540 = vset.pattern.permute.xlu0 0
    %541 = vperm.xlu0 %540, %v370
    %v542 = vpop.permute.xlu0 %541
    %545 = vset.pattern.permute.xlu0 0
    %546 = vperm.xlu0 %545, %v371
    %v547 = vpop.permute.xlu0 %546
    %550 = vset.pattern.permute.xlu0 0
    %551 = vperm.xlu0 %550, %v372
    %v552 = vpop.permute.xlu0 %551
    %555 = vset.pattern.permute.xlu0 0
    %556 = vperm.xlu0 %555, %v373
    %v557 = vpop.permute.xlu0 %556
    %560 = vset.pattern.permute.xlu0 0
    %561 = vperm.xlu0 %560, %v374
    %v562 = vpop.permute.xlu0 %561
    %565 = vset.pattern.permute.xlu0 0
    %566 = vperm.xlu0 %565, %v375
    %v567 = vpop.permute.xlu0 %566
    %570 = vset.pattern.permute.xlu0 0
    %571 = vperm.xlu0 %570, %v376
    %v572 = vpop.permute.xlu0 %571
    %575 = vset.pattern.permute.xlu0 0
    %576 = vperm.xlu0 %575, %v377
    %v577 = vpop.permute.xlu0 %576
    %580 = vset.pattern.permute.xlu0 0
    %581 = vperm.xlu0 %580, %v378
    %v582 = vpop.permute.xlu0 %581
    %585 = vset.pattern.permute.xlu0 0
    %586 = vperm.xlu0 %585, %v379
    %v587 = vpop.permute.xlu0 %586
    %590 = vset.pattern.permute.xlu0 0
    %591 = vperm.xlu0 %590, %v380
    %v592 = vpop.permute.xlu0 %591
    %595 = vset.pattern.permute.xlu0 0
    %596 = vperm.xlu0 %595, %v381
    %v597 = vpop.permute.xlu0 %596
    %600 = vset.pattern.permute.xlu0 0
    %601 = vperm.xlu0 %600, %v382
    %v602 = vpop.permute.xlu0 %601
    %605 = vset.pattern.permute.xlu0 0
    %606 = vperm.xlu0 %605, %v383
    %v607 = vpop.permute.xlu0 %606
    %610 = vset.pattern.permute.xlu0 0
    %611 = vperm.xlu0 %610, %v384
    %v612 = vpop.permute.xlu0 %611
    %615 = vset.pattern.permute.xlu0 0
    %616 = vperm.xlu0 %615, %v385
    %v617 = vpop.permute.xlu0 %616
    %620 = vset.pattern.permute.xlu0 0
    %621 = vperm.xlu0 %620, %v386
    %v622 = vpop.permute.xlu0 %621
    %625 = vset.pattern.permute.xlu0 0
    %626 = vperm.xlu0 %625, %v387
    %v627 = vpop.permute.xlu0 %626
    %630 = vset.pattern.permute.xlu0 0
    %631 = vperm.xlu0 %630, %v388
    %v632 = vpop.permute.xlu0 %631
    %635 = vset.pattern.permute.xlu0 0
    %636 = vperm.xlu0 %635, %v389
    %v637 = vpop.permute.xlu0 %636
    %640 = vset.pattern.permute.xlu0 0
    %641 = vperm.xlu0 %640, %v390
    %v642 = vpop.permute.xlu0 %641
    %645 = vset.pattern.permute.xlu0 0
    %646 = vperm.xlu0 %645, %v391
    %v647 = vpop.permute.xlu0 %646
    %650 = vset.pattern.permute.xlu0 0
    %651 = vperm.xlu0 %650, %v392
    %v652 = vpop.permute.xlu0 %651
    %655 = vset.pattern.permute.xlu0 0
    %656 = vperm.xlu0 %655, %v393
    %v657 = vpop.permute.xlu0 %656
    %660 = vset.pattern.permute.xlu0 0
    %661 = vperm.xlu0 %660, %v394
    %v662 = vpop.permute.xlu0 %661
    %665 = vset.pattern.permute.xlu0 0
    %666 = vperm.xlu0 %665, %v395
    %v667 = vpop.permute.xlu0 %666
    %670 = vset.pattern.permute.xlu0 0
    %671 = vperm.xlu0 %670, %v396
    %v672 = vpop.permute.xlu0 %671
    %675 = vset.pattern.permute.xlu0 0
    %676 = vperm.xlu0 %675, %v397
    %v677 = vpop.permute.xlu0 %676
    %v680 = vlaneseq
    %v681 = vshrl.u32 %v680, 7
    %v682 = vsub.s32 0, %v681
    %v683 = vrot.slane %v398, %v682
    %v684 = vlaneseq
    %v685 = vshrl.u32 %v684, 7
    %v686 = vsub.s32 1, %v685
    %v687 = vrot.slane %v398, %v686
    %v688 = vlaneseq
    %v689 = vshrl.u32 %v688, 7
    %v690 = vsub.s32 2, %v689
    %v691 = vrot.slane %v398, %v690
    %v692 = vlaneseq
    %v693 = vshrl.u32 %v692, 7
    %v694 = vsub.s32 3, %v693
    %v695 = vrot.slane %v398, %v694
    %v700 = vmul.f32 %v402, %v683
    %v701 = vmul.f32 %v402, %v687
    %v702 = vmul.f32 %v402, %v691
    %v703 = vmul.f32 %v402, %v695
    %v704 = vmul.f32 %v407, %v683
    %v705 = vmul.f32 %v407, %v687
    %v706 = vmul.f32 %v407, %v691
    %v707 = vmul.f32 %v407, %v695
    %v708 = vmul.f32 %v412, %v683
    %v709 = vmul.f32 %v412, %v687
    %v710 = vmul.f32 %v412, %v691
    %v711 = vmul.f32 %v412, %v695
    %v712 = vmul.f32 %v417, %v683
    %v713 = vmul.f32 %v417, %v687
    %v714 = vmul.f32 %v417, %v691
    %v715 = vmul.f32 %v417, %v695
    %v716 = vmul.f32 %v422, %v683
    %v717 = vmul.f32 %v422, %v687
    %v718 = vmul.f32 %v422, %v691
    %v719 = vmul.f32 %v422, %v695
    %v720 = vmul.f32 %v427, %v683
    %v721 = vmul.f32 %v427, %v687
    %v722 = vmul.f32 %v427, %v691
    %v723 = vmul.f32 %v427, %v695
    %v724 = vmul.f32 %v432, %v683
    %v725 = vmul.f32 %v432, %v687
    %v726 = vmul.f32 %v432, %v691
    %v727 = vmul.f32 %v432, %v695
    %v728 = vmul.f32 %v437, %v683
    %v729 = vmul.f32 %v437, %v687
    %v730 = vmul.f32 %v437, %v691
    %v731 = vmul.f32 %v437, %v695
    %v732 = vmul.f32 %v442, %v683
    %v733 = vmul.f32 %v442, %v687
    %v734 = vmul.f32 %v442, %v691
    %v735 = vmul.f32 %v442, %v695
    %v736 = vmul.f32 %v447, %v683
    %v737 = vmul.f32 %v447, %v687
    %v738 = vmul.f32 %v447, %v691
    %v739 = vmul.f32 %v447, %v695
    %v740 = vmul.f32 %v452, %v683
    %v741 = vmul.f32 %v452, %v687
    %v742 = vmul.f32 %v452, %v691
    %v743 = vmul.f32 %v452, %v695
    %v744 = vmul.f32 %v457, %v683
    %v745 = vmul.f32 %v457, %v687
    %v746 = vmul.f32 %v457, %v691
    %v747 = vmul.f32 %v457, %v695
    %v748 = vmul.f32 %v462, %v683
    %v749 = vmul.f32 %v462, %v687
    %v750 = vmul.f32 %v462, %v691
    %v751 = vmul.f32 %v462, %v695
    %v752 = vmul.f32 %v467, %v683
    %v753 = vmul.f32 %v467, %v687
    %v754 = vmul.f32 %v467, %v691
    %v755 = vmul.f32 %v467, %v695
    %v756 = vmul.f32 %v472, %v683
    %v757 = vmul.f32 %v472, %v687
    %v758 = vmul.f32 %v472, %v691
    %v759 = vmul.f32 %v472, %v695
    %v760 = vmul.f32 %v477, %v683
    %v761 = vmul.f32 %v477, %v687
    %v762 = vmul.f32 %v477, %v691
    %v763 = vmul.f32 %v477, %v695
    %v764 = vmul.f32 %v482, %v683
    %v765 = vmul.f32 %v482, %v687
    %v766 = vmul.f32 %v482, %v691
    %v767 = vmul.f32 %v482, %v695
    %v768 = vmul.f32 %v487, %v683
    %v769 = vmul.f32 %v487, %v687
    %v770 = vmul.f32 %v487, %v691
    %v771 = vmul.f32 %v487, %v695
    %v772 = vmul.f32 %v492, %v683
    %v773 = vmul.f32 %v492, %v687
    %v774 = vmul.f32 %v492, %v691
    %v775 = vmul.f32 %v492, %v695
    %v776 = vmul.f32 %v497, %v683
    %v777 = vmul.f32 %v497, %v687
    %v778 = vmul.f32 %v497, %v691
    %v779 = vmul.f32 %v497, %v695
    %v780 = vmul.f32 %v502, %v683
    %v781 = vmul.f32 %v502, %v687
    %v782 = vmul.f32 %v502, %v691
    %v783 = vmul.f32 %v502, %v695
    %v784 = vmul.f32 %v507, %v683
    %v785 = vmul.f32 %v507, %v687
    %v786 = vmul.f32 %v507, %v691
    %v787 = vmul.f32 %v507, %v695
    %v788 = vmul.f32 %v512, %v683
    %v789 = vmul.f32 %v512, %v687
    %v790 = vmul.f32 %v512, %v691
    %v791 = vmul.f32 %v512, %v695
    %v792 = vmul.f32 %v517, %v683
    %v793 = vmul.f32 %v517, %v687
    %v794 = vmul.f32 %v517, %v691
    %v795 = vmul.f32 %v517, %v695
    %v796 = vmul.f32 %v522, %v683
    %v797 = vmul.f32 %v522, %v687
    %v798 = vmul.f32 %v522, %v691
    %v799 = vmul.f32 %v522, %v695
    %v800 = vmul.f32 %v527, %v683
    %v801 = vmul.f32 %v527, %v687
    %v802 = vmul.f32 %v527, %v691
    %v803 = vmul.f32 %v527, %v695
    %v804 = vmul.f32 %v532, %v683
    %v805 = vmul.f32 %v532, %v687
    %v806 = vmul.f32 %v532, %v691
    %v807 = vmul.f32 %v532, %v695
    %v808 = vmul.f32 %v537, %v683
    %v809 = vmul.f32 %v537, %v687
    %v810 = vmul.f32 %v537, %v691
    %v811 = vmul.f32 %v537, %v695
    %v812 = vmul.f32 %v542, %v683
    %v813 = vmul.f32 %v542, %v687
    %v814 = vmul.f32 %v542, %v691
    %v815 = vmul.f32 %v542, %v695
    %v816 = vmul.f32 %v547, %v683
    %v817 = vmul.f32 %v547, %v687
    %v818 = vmul.f32 %v547, %v691
    %v819 = vmul.f32 %v547, %v695
    %v820 = vmul.f32 %v552, %v683
    %v821 = vmul.f32 %v552, %v687
    %v822 = vmul.f32 %v552, %v691
    %v823 = vmul.f32 %v552, %v695
    %v824 = vmul.f32 %v557, %v683
    %v825 = vmul.f32 %v557, %v687
    %v826 = vmul.f32 %v557, %v691
    %v827 = vmul.f32 %v557, %v695
    %v828 = vmul.f32 %v562, %v683
    %v829 = vmul.f32 %v562, %v687
    %v830 = vmul.f32 %v562, %v691
    %v831 = vmul.f32 %v562, %v695
    %v832 = vmul.f32 %v567, %v683
    %v833 = vmul.f32 %v567, %v687
    %v834 = vmul.f32 %v567, %v691
    %v835 = vmul.f32 %v567, %v695
    %v836 = vmul.f32 %v572, %v683
    %v837 = vmul.f32 %v572, %v687
    %v838 = vmul.f32 %v572, %v691
    %v839 = vmul.f32 %v572, %v695
    %v840 = vmul.f32 %v577, %v683
    %v841 = vmul.f32 %v577, %v687
    %v842 = vmul.f32 %v577, %v691
    %v843 = vmul.f32 %v577, %v695
    %v844 = vmul.f32 %v582, %v683
    %v845 = vmul.f32 %v582, %v687
    %v846 = vmul.f32 %v582, %v691
    %v847 = vmul.f32 %v582, %v695
    %v848 = vmul.f32 %v587, %v683
    %v849 = vmul.f32 %v587, %v687
    %v850 = vmul.f32 %v587, %v691
    %v851 = vmul.f32 %v587, %v695
    %v852 = vmul.f32 %v592, %v683
    %v853 = vmul.f32 %v592, %v687
    %v854 = vmul.f32 %v592, %v691
    %v855 = vmul.f32 %v592, %v695
    %v856 = vmul.f32 %v597, %v683
    %v857 = vmul.f32 %v597, %v687
    %v858 = vmul.f32 %v597, %v691
    %v859 = vmul.f32 %v597, %v695
    %v860 = vmul.f32 %v602, %v683
    %v861 = vmul.f32 %v602, %v687
    %v862 = vmul.f32 %v602, %v691
    %v863 = vmul.f32 %v602, %v695
    %v864 = vmul.f32 %v607, %v683
    %v865 = vmul.f32 %v607, %v687
    %v866 = vmul.f32 %v607, %v691
    %v867 = vmul.f32 %v607, %v695
    %v868 = vmul.f32 %v612, %v683
    %v869 = vmul.f32 %v612, %v687
    %v870 = vmul.f32 %v612, %v691
    %v871 = vmul.f32 %v612, %v695
    %v872 = vmul.f32 %v617, %v683
    %v873 = vmul.f32 %v617, %v687
    %v874 = vmul.f32 %v617, %v691
    %v875 = vmul.f32 %v617, %v695
    %v876 = vmul.f32 %v622, %v683
    %v877 = vmul.f32 %v622, %v687
    %v878 = vmul.f32 %v622, %v691
    %v879 = vmul.f32 %v622, %v695
    %v880 = vmul.f32 %v627, %v683
    %v881 = vmul.f32 %v627, %v687
    %v882 = vmul.f32 %v627, %v691
    %v883 = vmul.f32 %v627, %v695
    %v884 = vmul.f32 %v632, %v683
    %v885 = vmul.f32 %v632, %v687
    %v886 = vmul.f32 %v632, %v691
    %v887 = vmul.f32 %v632, %v695
    %v888 = vmul.f32 %v637, %v683
    %v889 = vmul.f32 %v637, %v687
    %v890 = vmul.f32 %v637, %v691
    %v891 = vmul.f32 %v637, %v695
    %v892 = vmul.f32 %v642, %v683
    %v893 = vmul.f32 %v642, %v687
    %v894 = vmul.f32 %v642, %v691
    %v895 = vmul.f32 %v642, %v695
    %v896 = vmul.f32 %v647, %v683
    %v897 = vmul.f32 %v647, %v687
    %v898 = vmul.f32 %v647, %v691
    %v899 = vmul.f32 %v647, %v695
    %v900 = vmul.f32 %v652, %v683
    %v901 = vmul.f32 %v652, %v687
    %v902 = vmul.f32 %v652, %v691
    %v903 = vmul.f32 %v652, %v695
    %v904 = vmul.f32 %v657, %v683
    %v905 = vmul.f32 %v657, %v687
    %v906 = vmul.f32 %v657, %v691
    %v907 = vmul.f32 %v657, %v695
    %v908 = vmul.f32 %v662, %v683
    %v909 = vmul.f32 %v662, %v687
    %v910 = vmul.f32 %v662, %v691
    %v911 = vmul.f32 %v662, %v695
    %v912 = vmul.f32 %v667, %v683
    %v913 = vmul.f32 %v667, %v687
    %v914 = vmul.f32 %v667, %v691
    %v915 = vmul.f32 %v667, %v695
    %v916 = vmul.f32 %v672, %v683
    %v917 = vmul.f32 %v672, %v687
    %v918 = vmul.f32 %v672, %v691
    %v919 = vmul.f32 %v672, %v695
    %v920 = vmul.f32 %v677, %v683
    %v921 = vmul.f32 %v677, %v687
    %v922 = vmul.f32 %v677, %v691
    %v923 = vmul.f32 %v677, %v695
    %v932 = vlaneseq
    %v933 = vshrl.u32 %v932, 7
    %v934 = vsub.s32 0, %v933
    %v935 = vrot.slane %v334, %v934
    %v936 = vlaneseq
    %v937 = vshrl.u32 %v936, 7
    %v938 = vsub.s32 1, %v937
    %v939 = vrot.slane %v334, %v938
    %v940 = vlaneseq
    %v941 = vshrl.u32 %v940, 7
    %v942 = vsub.s32 2, %v941
    %v943 = vrot.slane %v334, %v942
    %v944 = vlaneseq
    %v945 = vshrl.u32 %v944, 7
    %v946 = vsub.s32 3, %v945
    %v947 = vrot.slane %v334, %v946
    %v948 = vlaneseq
    %v949 = vshrl.u32 %v948, 7
    %v950 = vsub.s32 0, %v949
    %v951 = vrot.slane %v335, %v950
    %v952 = vlaneseq
    %v953 = vshrl.u32 %v952, 7
    %v954 = vsub.s32 1, %v953
    %v955 = vrot.slane %v335, %v954
    %v956 = vlaneseq
    %v957 = vshrl.u32 %v956, 7
    %v958 = vsub.s32 2, %v957
    %v959 = vrot.slane %v335, %v958
    %v960 = vlaneseq
    %v961 = vshrl.u32 %v960, 7
    %v962 = vsub.s32 3, %v961
    %v963 = vrot.slane %v335, %v962
    %v964 = vlaneseq
    %v965 = vshrl.u32 %v964, 7
    %v966 = vsub.s32 0, %v965
    %v967 = vrot.slane %v336, %v966
    %v968 = vlaneseq
    %v969 = vshrl.u32 %v968, 7
    %v970 = vsub.s32 1, %v969
    %v971 = vrot.slane %v336, %v970
    %v972 = vlaneseq
    %v973 = vshrl.u32 %v972, 7
    %v974 = vsub.s32 2, %v973
    %v975 = vrot.slane %v336, %v974
    %v976 = vlaneseq
    %v977 = vshrl.u32 %v976, 7
    %v978 = vsub.s32 3, %v977
    %v979 = vrot.slane %v336, %v978
    %v980 = vlaneseq
    %v981 = vshrl.u32 %v980, 7
    %v982 = vsub.s32 0, %v981
    %v983 = vrot.slane %v337, %v982
    %v984 = vlaneseq
    %v985 = vshrl.u32 %v984, 7
    %v986 = vsub.s32 1, %v985
    %v987 = vrot.slane %v337, %v986
    %v988 = vlaneseq
    %v989 = vshrl.u32 %v988, 7
    %v990 = vsub.s32 2, %v989
    %v991 = vrot.slane %v337, %v990
    %v992 = vlaneseq
    %v993 = vshrl.u32 %v992, 7
    %v994 = vsub.s32 3, %v993
    %v995 = vrot.slane %v337, %v994
    %v996 = vlaneseq
    %v997 = vshrl.u32 %v996, 7
    %v998 = vsub.s32 0, %v997
    %v999 = vrot.slane %v338, %v998
    %v1000 = vlaneseq
    %v1001 = vshrl.u32 %v1000, 7
    %v1002 = vsub.s32 1, %v1001
    %v1003 = vrot.slane %v338, %v1002
    %v1004 = vlaneseq
    %v1005 = vshrl.u32 %v1004, 7
    %v1006 = vsub.s32 2, %v1005
    %v1007 = vrot.slane %v338, %v1006
    %v1008 = vlaneseq
    %v1009 = vshrl.u32 %v1008, 7
    %v1010 = vsub.s32 3, %v1009
    %v1011 = vrot.slane %v338, %v1010
    %v1012 = vlaneseq
    %v1013 = vshrl.u32 %v1012, 7
    %v1014 = vsub.s32 0, %v1013
    %v1015 = vrot.slane %v339, %v1014
    %v1016 = vlaneseq
    %v1017 = vshrl.u32 %v1016, 7
    %v1018 = vsub.s32 1, %v1017
    %v1019 = vrot.slane %v339, %v1018
    %v1020 = vlaneseq
    %v1021 = vshrl.u32 %v1020, 7
    %v1022 = vsub.s32 2, %v1021
    %v1023 = vrot.slane %v339, %v1022
    %v1024 = vlaneseq
    %v1025 = vshrl.u32 %v1024, 7
    %v1026 = vsub.s32 3, %v1025
    %v1027 = vrot.slane %v339, %v1026
    %v1028 = vlaneseq
    %v1029 = vshrl.u32 %v1028, 7
    %v1030 = vsub.s32 0, %v1029
    %v1031 = vrot.slane %v340, %v1030
    %v1032 = vlaneseq
    %v1033 = vshrl.u32 %v1032, 7
    %v1034 = vsub.s32 1, %v1033
    %v1035 = vrot.slane %v340, %v1034
    %v1036 = vlaneseq
    %v1037 = vshrl.u32 %v1036, 7
    %v1038 = vsub.s32 2, %v1037
    %v1039 = vrot.slane %v340, %v1038
    %v1040 = vlaneseq
    %v1041 = vshrl.u32 %v1040, 7
    %v1042 = vsub.s32 3, %v1041
    %v1043 = vrot.slane %v340, %v1042
    %v1044 = vlaneseq
    %v1045 = vshrl.u32 %v1044, 7
    %v1046 = vsub.s32 0, %v1045
    %v1047 = vrot.slane %v341, %v1046
    %v1048 = vlaneseq
    %v1049 = vshrl.u32 %v1048, 7
    %v1050 = vsub.s32 1, %v1049
    %v1051 = vrot.slane %v341, %v1050
    %v1052 = vlaneseq
    %v1053 = vshrl.u32 %v1052, 7
    %v1054 = vsub.s32 2, %v1053
    %v1055 = vrot.slane %v341, %v1054
    %v1056 = vlaneseq
    %v1057 = vshrl.u32 %v1056, 7
    %v1058 = vsub.s32 3, %v1057
    %v1059 = vrot.slane %v341, %v1058
    %v1092 = vadd.f32 %v935, %v700
    %v1093 = vadd.f32 %v939, %v701
    %v1094 = vadd.f32 %v943, %v702
    %v1095 = vadd.f32 %v947, %v703
    %v1096 = vadd.f32 %v935, %v704
    %v1097 = vadd.f32 %v939, %v705
    %v1098 = vadd.f32 %v943, %v706
    %v1099 = vadd.f32 %v947, %v707
    %v1100 = vadd.f32 %v935, %v708
    %v1101 = vadd.f32 %v939, %v709
    %v1102 = vadd.f32 %v943, %v710
    %v1103 = vadd.f32 %v947, %v711
    %v1104 = vadd.f32 %v935, %v712
    %v1105 = vadd.f32 %v939, %v713
    %v1106 = vadd.f32 %v943, %v714
    %v1107 = vadd.f32 %v947, %v715
    %v1108 = vadd.f32 %v935, %v716
    %v1109 = vadd.f32 %v939, %v717
    %v1110 = vadd.f32 %v943, %v718
    %v1111 = vadd.f32 %v947, %v719
    %v1112 = vadd.f32 %v935, %v720
    %v1113 = vadd.f32 %v939, %v721
    %v1114 = vadd.f32 %v943, %v722
    %v1115 = vadd.f32 %v947, %v723
    %v1116 = vadd.f32 %v935, %v724
    %v1117 = vadd.f32 %v939, %v725
    %v1118 = vadd.f32 %v943, %v726
    %v1119 = vadd.f32 %v947, %v727
    %v1120 = vadd.f32 %v951, %v728
    %v1121 = vadd.f32 %v955, %v729
    %v1122 = vadd.f32 %v959, %v730
    %v1123 = vadd.f32 %v963, %v731
    %v1124 = vadd.f32 %v951, %v732
    %v1125 = vadd.f32 %v955, %v733
    %v1126 = vadd.f32 %v959, %v734
    %v1127 = vadd.f32 %v963, %v735
    %v1128 = vadd.f32 %v951, %v736
    %v1129 = vadd.f32 %v955, %v737
    %v1130 = vadd.f32 %v959, %v738
    %v1131 = vadd.f32 %v963, %v739
    %v1132 = vadd.f32 %v951, %v740
    %v1133 = vadd.f32 %v955, %v741
    %v1134 = vadd.f32 %v959, %v742
    %v1135 = vadd.f32 %v963, %v743
    %v1136 = vadd.f32 %v951, %v744
    %v1137 = vadd.f32 %v955, %v745
    %v1138 = vadd.f32 %v959, %v746
    %v1139 = vadd.f32 %v963, %v747
    %v1140 = vadd.f32 %v951, %v748
    %v1141 = vadd.f32 %v955, %v749
    %v1142 = vadd.f32 %v959, %v750
    %v1143 = vadd.f32 %v963, %v751
    %v1144 = vadd.f32 %v951, %v752
    %v1145 = vadd.f32 %v955, %v753
    %v1146 = vadd.f32 %v959, %v754
    %v1147 = vadd.f32 %v963, %v755
    %v1148 = vadd.f32 %v967, %v756
    %v1149 = vadd.f32 %v971, %v757
    %v1150 = vadd.f32 %v975, %v758
    %v1151 = vadd.f32 %v979, %v759
    %v1152 = vadd.f32 %v967, %v760
    %v1153 = vadd.f32 %v971, %v761
    %v1154 = vadd.f32 %v975, %v762
    %v1155 = vadd.f32 %v979, %v763
    %v1156 = vadd.f32 %v967, %v764
    %v1157 = vadd.f32 %v971, %v765
    %v1158 = vadd.f32 %v975, %v766
    %v1159 = vadd.f32 %v979, %v767
    %v1160 = vadd.f32 %v967, %v768
    %v1161 = vadd.f32 %v971, %v769
    %v1162 = vadd.f32 %v975, %v770
    %v1163 = vadd.f32 %v979, %v771
    %v1164 = vadd.f32 %v967, %v772
    %v1165 = vadd.f32 %v971, %v773
    %v1166 = vadd.f32 %v975, %v774
    %v1167 = vadd.f32 %v979, %v775
    %v1168 = vadd.f32 %v967, %v776
    %v1169 = vadd.f32 %v971, %v777
    %v1170 = vadd.f32 %v975, %v778
    %v1171 = vadd.f32 %v979, %v779
    %v1172 = vadd.f32 %v967, %v780
    %v1173 = vadd.f32 %v971, %v781
    %v1174 = vadd.f32 %v975, %v782
    %v1175 = vadd.f32 %v979, %v783
    %v1176 = vadd.f32 %v983, %v784
    %v1177 = vadd.f32 %v987, %v785
    %v1178 = vadd.f32 %v991, %v786
    %v1179 = vadd.f32 %v995, %v787
    %v1180 = vadd.f32 %v983, %v788
    %v1181 = vadd.f32 %v987, %v789
    %v1182 = vadd.f32 %v991, %v790
    %v1183 = vadd.f32 %v995, %v791
    %v1184 = vadd.f32 %v983, %v792
    %v1185 = vadd.f32 %v987, %v793
    %v1186 = vadd.f32 %v991, %v794
    %v1187 = vadd.f32 %v995, %v795
    %v1188 = vadd.f32 %v983, %v796
    %v1189 = vadd.f32 %v987, %v797
    %v1190 = vadd.f32 %v991, %v798
    %v1191 = vadd.f32 %v995, %v799
    %v1192 = vadd.f32 %v983, %v800
    %v1193 = vadd.f32 %v987, %v801
    %v1194 = vadd.f32 %v991, %v802
    %v1195 = vadd.f32 %v995, %v803
    %v1196 = vadd.f32 %v983, %v804
    %v1197 = vadd.f32 %v987, %v805
    %v1198 = vadd.f32 %v991, %v806
    %v1199 = vadd.f32 %v995, %v807
    %v1200 = vadd.f32 %v983, %v808
    %v1201 = vadd.f32 %v987, %v809
    %v1202 = vadd.f32 %v991, %v810
    %v1203 = vadd.f32 %v995, %v811
    %v1204 = vadd.f32 %v999, %v812
    %v1205 = vadd.f32 %v1003, %v813
    %v1206 = vadd.f32 %v1007, %v814
    %v1207 = vadd.f32 %v1011, %v815
    %v1208 = vadd.f32 %v999, %v816
    %v1209 = vadd.f32 %v1003, %v817
    %v1210 = vadd.f32 %v1007, %v818
    %v1211 = vadd.f32 %v1011, %v819
    %v1212 = vadd.f32 %v999, %v820
    %v1213 = vadd.f32 %v1003, %v821
    %v1214 = vadd.f32 %v1007, %v822
    %v1215 = vadd.f32 %v1011, %v823
    %v1216 = vadd.f32 %v999, %v824
    %v1217 = vadd.f32 %v1003, %v825
    %v1218 = vadd.f32 %v1007, %v826
    %v1219 = vadd.f32 %v1011, %v827
    %v1220 = vadd.f32 %v999, %v828
    %v1221 = vadd.f32 %v1003, %v829
    %v1222 = vadd.f32 %v1007, %v830
    %v1223 = vadd.f32 %v1011, %v831
    %v1224 = vadd.f32 %v999, %v832
    %v1225 = vadd.f32 %v1003, %v833
    %v1226 = vadd.f32 %v1007, %v834
    %v1227 = vadd.f32 %v1011, %v835
    %v1228 = vadd.f32 %v999, %v836
    %v1229 = vadd.f32 %v1003, %v837
    %v1230 = vadd.f32 %v1007, %v838
    %v1231 = vadd.f32 %v1011, %v839
    %v1232 = vadd.f32 %v1015, %v840
    %v1233 = vadd.f32 %v1019, %v841
    %v1234 = vadd.f32 %v1023, %v842
    %v1235 = vadd.f32 %v1027, %v843
    %v1236 = vadd.f32 %v1015, %v844
    %v1237 = vadd.f32 %v1019, %v845
    %v1238 = vadd.f32 %v1023, %v846
    %v1239 = vadd.f32 %v1027, %v847
    %v1240 = vadd.f32 %v1015, %v848
    %v1241 = vadd.f32 %v1019, %v849
    %v1242 = vadd.f32 %v1023, %v850
    %v1243 = vadd.f32 %v1027, %v851
    %v1244 = vadd.f32 %v1015, %v852
    %v1245 = vadd.f32 %v1019, %v853
    %v1246 = vadd.f32 %v1023, %v854
    %v1247 = vadd.f32 %v1027, %v855
    %v1248 = vadd.f32 %v1015, %v856
    %v1249 = vadd.f32 %v1019, %v857
    %v1250 = vadd.f32 %v1023, %v858
    %v1251 = vadd.f32 %v1027, %v859
    %v1252 = vadd.f32 %v1015, %v860
    %v1253 = vadd.f32 %v1019, %v861
    %v1254 = vadd.f32 %v1023, %v862
    %v1255 = vadd.f32 %v1027, %v863
    %v1256 = vadd.f32 %v1015, %v864
    %v1257 = vadd.f32 %v1019, %v865
    %v1258 = vadd.f32 %v1023, %v866
    %v1259 = vadd.f32 %v1027, %v867
    %v1260 = vadd.f32 %v1031, %v868
    %v1261 = vadd.f32 %v1035, %v869
    %v1262 = vadd.f32 %v1039, %v870
    %v1263 = vadd.f32 %v1043, %v871
    %v1264 = vadd.f32 %v1031, %v872
    %v1265 = vadd.f32 %v1035, %v873
    %v1266 = vadd.f32 %v1039, %v874
    %v1267 = vadd.f32 %v1043, %v875
    %v1268 = vadd.f32 %v1031, %v876
    %v1269 = vadd.f32 %v1035, %v877
    %v1270 = vadd.f32 %v1039, %v878
    %v1271 = vadd.f32 %v1043, %v879
    %v1272 = vadd.f32 %v1031, %v880
    %v1273 = vadd.f32 %v1035, %v881
    %v1274 = vadd.f32 %v1039, %v882
    %v1275 = vadd.f32 %v1043, %v883
    %v1276 = vadd.f32 %v1031, %v884
    %v1277 = vadd.f32 %v1035, %v885
    %v1278 = vadd.f32 %v1039, %v886
    %v1279 = vadd.f32 %v1043, %v887
    %v1280 = vadd.f32 %v1031, %v888
    %v1281 = vadd.f32 %v1035, %v889
    %v1282 = vadd.f32 %v1039, %v890
    %v1283 = vadd.f32 %v1043, %v891
    %v1284 = vadd.f32 %v1031, %v892
    %v1285 = vadd.f32 %v1035, %v893
    %v1286 = vadd.f32 %v1039, %v894
    %v1287 = vadd.f32 %v1043, %v895
    %v1288 = vadd.f32 %v1047, %v896
    %v1289 = vadd.f32 %v1051, %v897
    %v1290 = vadd.f32 %v1055, %v898
    %v1291 = vadd.f32 %v1059, %v899
    %v1292 = vadd.f32 %v1047, %v900
    %v1293 = vadd.f32 %v1051, %v901
    %v1294 = vadd.f32 %v1055, %v902
    %v1295 = vadd.f32 %v1059, %v903
    %v1296 = vadd.f32 %v1047, %v904
    %v1297 = vadd.f32 %v1051, %v905
    %v1298 = vadd.f32 %v1055, %v906
    %v1299 = vadd.f32 %v1059, %v907
    %v1300 = vadd.f32 %v1047, %v908
    %v1301 = vadd.f32 %v1051, %v909
    %v1302 = vadd.f32 %v1055, %v910
    %v1303 = vadd.f32 %v1059, %v911
    %v1304 = vadd.f32 %v1047, %v912
    %v1305 = vadd.f32 %v1051, %v913
    %v1306 = vadd.f32 %v1055, %v914
    %v1307 = vadd.f32 %v1059, %v915
    %v1308 = vadd.f32 %v1047, %v916
    %v1309 = vadd.f32 %v1051, %v917
    %v1310 = vadd.f32 %v1055, %v918
    %v1311 = vadd.f32 %v1059, %v919
    %v1312 = vadd.f32 %v1047, %v920
    %v1313 = vadd.f32 %v1051, %v921
    %v1314 = vadd.f32 %v1055, %v922
    %v1315 = vadd.f32 %v1059, %v923
    %v1316 = vmax.f32 %v1092, 0.0
    %v1317 = vmax.f32 %v1093, 0.0
    %v1318 = vmax.f32 %v1094, 0.0
    %v1319 = vmax.f32 %v1095, 0.0
    %v1320 = vmax.f32 %v1096, 0.0
    %v1321 = vmax.f32 %v1097, 0.0
    %v1322 = vmax.f32 %v1098, 0.0
    %v1323 = vmax.f32 %v1099, 0.0
    %v1324 = vmax.f32 %v1100, 0.0
    %v1325 = vmax.f32 %v1101, 0.0
    %v1326 = vmax.f32 %v1102, 0.0
    %v1327 = vmax.f32 %v1103, 0.0
    %v1328 = vmax.f32 %v1104, 0.0
    %v1329 = vmax.f32 %v1105, 0.0
    %v1330 = vmax.f32 %v1106, 0.0
    %v1331 = vmax.f32 %v1107, 0.0
    %v1332 = vmax.f32 %v1108, 0.0
    %v1333 = vmax.f32 %v1109, 0.0
    %v1334 = vmax.f32 %v1110, 0.0
    %v1335 = vmax.f32 %v1111, 0.0
    %v1336 = vmax.f32 %v1112, 0.0
    %v1337 = vmax.f32 %v1113, 0.0
    %v1338 = vmax.f32 %v1114, 0.0
    %v1339 = vmax.f32 %v1115, 0.0
    %v1340 = vmax.f32 %v1116, 0.0
    %v1341 = vmax.f32 %v1117, 0.0
    %v1342 = vmax.f32 %v1118, 0.0
    %v1343 = vmax.f32 %v1119, 0.0
    %v1344 = vmax.f32 %v1120, 0.0
    %v1345 = vmax.f32 %v1121, 0.0
    %v1346 = vmax.f32 %v1122, 0.0
    %v1347 = vmax.f32 %v1123, 0.0
    %v1348 = vmax.f32 %v1124, 0.0
    %v1349 = vmax.f32 %v1125, 0.0
    %v1350 = vmax.f32 %v1126, 0.0
    %v1351 = vmax.f32 %v1127, 0.0
    %v1352 = vmax.f32 %v1128, 0.0
    %v1353 = vmax.f32 %v1129, 0.0
    %v1354 = vmax.f32 %v1130, 0.0
    %v1355 = vmax.f32 %v1131, 0.0
    %v1356 = vmax.f32 %v1132, 0.0
    %v1357 = vmax.f32 %v1133, 0.0
    %v1358 = vmax.f32 %v1134, 0.0
    %v1359 = vmax.f32 %v1135, 0.0
    %v1360 = vmax.f32 %v1136, 0.0
    %v1361 = vmax.f32 %v1137, 0.0
    %v1362 = vmax.f32 %v1138, 0.0
    %v1363 = vmax.f32 %v1139, 0.0
    %v1364 = vmax.f32 %v1140, 0.0
    %v1365 = vmax.f32 %v1141, 0.0
    %v1366 = vmax.f32 %v1142, 0.0
    %v1367 = vmax.f32 %v1143, 0.0
    %v1368 = vmax.f32 %v1144, 0.0
    %v1369 = vmax.f32 %v1145, 0.0
    %v1370 = vmax.f32 %v1146, 0.0
    %v1371 = vmax.f32 %v1147, 0.0
    %v1372 = vmax.f32 %v1148, 0.0
    %v1373 = vmax.f32 %v1149, 0.0
    %v1374 = vmax.f32 %v1150, 0.0
    %v1375 = vmax.f32 %v1151, 0.0
    %v1376 = vmax.f32 %v1152, 0.0
    %v1377 = vmax.f32 %v1153, 0.0
    %v1378 = vmax.f32 %v1154, 0.0
    %v1379 = vmax.f32 %v1155, 0.0
    %v1380 = vmax.f32 %v1156, 0.0
    %v1381 = vmax.f32 %v1157, 0.0
    %v1382 = vmax.f32 %v1158, 0.0
    %v1383 = vmax.f32 %v1159, 0.0
    %v1384 = vmax.f32 %v1160, 0.0
    %v1385 = vmax.f32 %v1161, 0.0
    %v1386 = vmax.f32 %v1162, 0.0
    %v1387 = vmax.f32 %v1163, 0.0
    %v1388 = vmax.f32 %v1164, 0.0
    %v1389 = vmax.f32 %v1165, 0.0
    %v1390 = vmax.f32 %v1166, 0.0
    %v1391 = vmax.f32 %v1167, 0.0
    %v1392 = vmax.f32 %v1168, 0.0
    %v1393 = vmax.f32 %v1169, 0.0
    %v1394 = vmax.f32 %v1170, 0.0
    %v1395 = vmax.f32 %v1171, 0.0
    %v1396 = vmax.f32 %v1172, 0.0
    %v1397 = vmax.f32 %v1173, 0.0
    %v1398 = vmax.f32 %v1174, 0.0
    %v1399 = vmax.f32 %v1175, 0.0
    %v1400 = vmax.f32 %v1176, 0.0
    %v1401 = vmax.f32 %v1177, 0.0
    %v1402 = vmax.f32 %v1178, 0.0
    %v1403 = vmax.f32 %v1179, 0.0
    %v1404 = vmax.f32 %v1180, 0.0
    %v1405 = vmax.f32 %v1181, 0.0
    %v1406 = vmax.f32 %v1182, 0.0
    %v1407 = vmax.f32 %v1183, 0.0
    %v1408 = vmax.f32 %v1184, 0.0
    %v1409 = vmax.f32 %v1185, 0.0
    %v1410 = vmax.f32 %v1186, 0.0
    %v1411 = vmax.f32 %v1187, 0.0
    %v1412 = vmax.f32 %v1188, 0.0
    %v1413 = vmax.f32 %v1189, 0.0
    %v1414 = vmax.f32 %v1190, 0.0
    %v1415 = vmax.f32 %v1191, 0.0
    %v1416 = vmax.f32 %v1192, 0.0
    %v1417 = vmax.f32 %v1193, 0.0
    %v1418 = vmax.f32 %v1194, 0.0
    %v1419 = vmax.f32 %v1195, 0.0
    %v1420 = vmax.f32 %v1196, 0.0
    %v1421 = vmax.f32 %v1197, 0.0
    %v1422 = vmax.f32 %v1198, 0.0
    %v1423 = vmax.f32 %v1199, 0.0
    %v1424 = vmax.f32 %v1200, 0.0
    %v1425 = vmax.f32 %v1201, 0.0
    %v1426 = vmax.f32 %v1202, 0.0
    %v1427 = vmax.f32 %v1203, 0.0
    %v1428 = vmax.f32 %v1204, 0.0
    %v1429 = vmax.f32 %v1205, 0.0
    %v1430 = vmax.f32 %v1206, 0.0
    %v1431 = vmax.f32 %v1207, 0.0
    %v1432 = vmax.f32 %v1208, 0.0
    %v1433 = vmax.f32 %v1209, 0.0
    %v1434 = vmax.f32 %v1210, 0.0
    %v1435 = vmax.f32 %v1211, 0.0
    %v1436 = vmax.f32 %v1212, 0.0
    %v1437 = vmax.f32 %v1213, 0.0
    %v1438 = vmax.f32 %v1214, 0.0
    %v1439 = vmax.f32 %v1215, 0.0
    %v1440 = vmax.f32 %v1216, 0.0
    %v1441 = vmax.f32 %v1217, 0.0
    %v1442 = vmax.f32 %v1218, 0.0
    %v1443 = vmax.f32 %v1219, 0.0
    %v1444 = vmax.f32 %v1220, 0.0
    %v1445 = vmax.f32 %v1221, 0.0
    %v1446 = vmax.f32 %v1222, 0.0
    %v1447 = vmax.f32 %v1223, 0.0
    %v1448 = vmax.f32 %v1224, 0.0
    %v1449 = vmax.f32 %v1225, 0.0
    %v1450 = vmax.f32 %v1226, 0.0
    %v1451 = vmax.f32 %v1227, 0.0
    %v1452 = vmax.f32 %v1228, 0.0
    %v1453 = vmax.f32 %v1229, 0.0
    %v1454 = vmax.f32 %v1230, 0.0
    %v1455 = vmax.f32 %v1231, 0.0
    %v1456 = vmax.f32 %v1232, 0.0
    %v1457 = vmax.f32 %v1233, 0.0
    %v1458 = vmax.f32 %v1234, 0.0
    %v1459 = vmax.f32 %v1235, 0.0
    %v1460 = vmax.f32 %v1236, 0.0
    %v1461 = vmax.f32 %v1237, 0.0
    %v1462 = vmax.f32 %v1238, 0.0
    %v1463 = vmax.f32 %v1239, 0.0
    %v1464 = vmax.f32 %v1240, 0.0
    %v1465 = vmax.f32 %v1241, 0.0
    %v1466 = vmax.f32 %v1242, 0.0
    %v1467 = vmax.f32 %v1243, 0.0
    %v1468 = vmax.f32 %v1244, 0.0
    %v1469 = vmax.f32 %v1245, 0.0
    %v1470 = vmax.f32 %v1246, 0.0
    %v1471 = vmax.f32 %v1247, 0.0
    %v1472 = vmax.f32 %v1248, 0.0
    %v1473 = vmax.f32 %v1249, 0.0
    %v1474 = vmax.f32 %v1250, 0.0
    %v1475 = vmax.f32 %v1251, 0.0
    %v1476 = vmax.f32 %v1252, 0.0
    %v1477 = vmax.f32 %v1253, 0.0
    %v1478 = vmax.f32 %v1254, 0.0
    %v1479 = vmax.f32 %v1255, 0.0
    %v1480 = vmax.f32 %v1256, 0.0
    %v1481 = vmax.f32 %v1257, 0.0
    %v1482 = vmax.f32 %v1258, 0.0
    %v1483 = vmax.f32 %v1259, 0.0
    %v1484 = vmax.f32 %v1260, 0.0
    %v1485 = vmax.f32 %v1261, 0.0
    %v1486 = vmax.f32 %v1262, 0.0
    %v1487 = vmax.f32 %v1263, 0.0
    %v1488 = vmax.f32 %v1264, 0.0
    %v1489 = vmax.f32 %v1265, 0.0
    %v1490 = vmax.f32 %v1266, 0.0
    %v1491 = vmax.f32 %v1267, 0.0
    %v1492 = vmax.f32 %v1268, 0.0
    %v1493 = vmax.f32 %v1269, 0.0
    %v1494 = vmax.f32 %v1270, 0.0
    %v1495 = vmax.f32 %v1271, 0.0
    %v1496 = vmax.f32 %v1272, 0.0
    %v1497 = vmax.f32 %v1273, 0.0
    %v1498 = vmax.f32 %v1274, 0.0
    %v1499 = vmax.f32 %v1275, 0.0
    %v1500 = vmax.f32 %v1276, 0.0
    %v1501 = vmax.f32 %v1277, 0.0
    %v1502 = vmax.f32 %v1278, 0.0
    %v1503 = vmax.f32 %v1279, 0.0
    %v1504 = vmax.f32 %v1280, 0.0
    %v1505 = vmax.f32 %v1281, 0.0
    %v1506 = vmax.f32 %v1282, 0.0
    %v1507 = vmax.f32 %v1283, 0.0
    %v1508 = vmax.f32 %v1284, 0.0
    %v1509 = vmax.f32 %v1285, 0.0
    %v1510 = vmax.f32 %v1286, 0.0
    %v1511 = vmax.f32 %v1287, 0.0
    %v1512 = vmax.f32 %v1288, 0.0
    %v1513 = vmax.f32 %v1289, 0.0
    %v1514 = vmax.f32 %v1290, 0.0
    %v1515 = vmax.f32 %v1291, 0.0
    %v1516 = vmax.f32 %v1292, 0.0
    %v1517 = vmax.f32 %v1293, 0.0
    %v1518 = vmax.f32 %v1294, 0.0
    %v1519 = vmax.f32 %v1295, 0.0
    %v1520 = vmax.f32 %v1296, 0.0
    %v1521 = vmax.f32 %v1297, 0.0
    %v1522 = vmax.f32 %v1298, 0.0
    %v1523 = vmax.f32 %v1299, 0.0
    %v1524 = vmax.f32 %v1300, 0.0
    %v1525 = vmax.f32 %v1301, 0.0
    %v1526 = vmax.f32 %v1302, 0.0
    %v1527 = vmax.f32 %v1303, 0.0
    %v1528 = vmax.f32 %v1304, 0.0
    %v1529 = vmax.f32 %v1305, 0.0
    %v1530 = vmax.f32 %v1306, 0.0
    %v1531 = vmax.f32 %v1307, 0.0
    %v1532 = vmax.f32 %v1308, 0.0
    %v1533 = vmax.f32 %v1309, 0.0
    %v1534 = vmax.f32 %v1310, 0.0
    %v1535 = vmax.f32 %v1311, 0.0
    %v1536 = vmax.f32 %v1312, 0.0
    %v1537 = vmax.f32 %v1313, 0.0
    %v1538 = vmax.f32 %v1314, 0.0
    %v1539 = vmax.f32 %v1315, 0.0
    %v1540 = vpack.c.bf16 %v1320, %v1316
    %v1541 = vpack.c.bf16 %v1321, %v1317
    %v1542 = vpack.c.bf16 %v1322, %v1318
    %v1543 = vpack.c.bf16 %v1323, %v1319
    %v1544 = vpack.c.bf16 %v1328, %v1324
    %v1545 = vpack.c.bf16 %v1329, %v1325
    %v1546 = vpack.c.bf16 %v1330, %v1326
    %v1547 = vpack.c.bf16 %v1331, %v1327
    %v1548 = vpack.c.bf16 %v1336, %v1332
    %v1549 = vpack.c.bf16 %v1337, %v1333
    %v1550 = vpack.c.bf16 %v1338, %v1334
    %v1551 = vpack.c.bf16 %v1339, %v1335
    %v1552 = vpack.c.bf16 %v1344, %v1340
    %v1553 = vpack.c.bf16 %v1345, %v1341
    %v1554 = vpack.c.bf16 %v1346, %v1342
    %v1555 = vpack.c.bf16 %v1347, %v1343
    %v1556 = vpack.c.bf16 %v1352, %v1348
    %v1557 = vpack.c.bf16 %v1353, %v1349
    %v1558 = vpack.c.bf16 %v1354, %v1350
    %v1559 = vpack.c.bf16 %v1355, %v1351
    %v1560 = vpack.c.bf16 %v1360, %v1356
    %v1561 = vpack.c.bf16 %v1361, %v1357
    %v1562 = vpack.c.bf16 %v1362, %v1358
    %v1563 = vpack.c.bf16 %v1363, %v1359
    %v1564 = vpack.c.bf16 %v1368, %v1364
    %v1565 = vpack.c.bf16 %v1369, %v1365
    %v1566 = vpack.c.bf16 %v1370, %v1366
    %v1567 = vpack.c.bf16 %v1371, %v1367
    %v1568 = vpack.c.bf16 %v1376, %v1372
    %v1569 = vpack.c.bf16 %v1377, %v1373
    %v1570 = vpack.c.bf16 %v1378, %v1374
    %v1571 = vpack.c.bf16 %v1379, %v1375
    %v1572 = vpack.c.bf16 %v1384, %v1380
    %v1573 = vpack.c.bf16 %v1385, %v1381
    %v1574 = vpack.c.bf16 %v1386, %v1382
    %v1575 = vpack.c.bf16 %v1387, %v1383
    %v1576 = vpack.c.bf16 %v1392, %v1388
    %v1577 = vpack.c.bf16 %v1393, %v1389
    %v1578 = vpack.c.bf16 %v1394, %v1390
    %v1579 = vpack.c.bf16 %v1395, %v1391
    %v1580 = vpack.c.bf16 %v1400, %v1396
    %v1581 = vpack.c.bf16 %v1401, %v1397
    %v1582 = vpack.c.bf16 %v1402, %v1398
    %v1583 = vpack.c.bf16 %v1403, %v1399
    %v1584 = vpack.c.bf16 %v1408, %v1404
    %v1585 = vpack.c.bf16 %v1409, %v1405
    %v1586 = vpack.c.bf16 %v1410, %v1406
    %v1587 = vpack.c.bf16 %v1411, %v1407
    %v1588 = vpack.c.bf16 %v1416, %v1412
    %v1589 = vpack.c.bf16 %v1417, %v1413
    %v1590 = vpack.c.bf16 %v1418, %v1414
    %v1591 = vpack.c.bf16 %v1419, %v1415
    %v1592 = vpack.c.bf16 %v1424, %v1420
    %v1593 = vpack.c.bf16 %v1425, %v1421
    %v1594 = vpack.c.bf16 %v1426, %v1422
    %v1595 = vpack.c.bf16 %v1427, %v1423
    %v1596 = vpack.c.bf16 %v1432, %v1428
    %v1597 = vpack.c.bf16 %v1433, %v1429
    %v1598 = vpack.c.bf16 %v1434, %v1430
    %v1599 = vpack.c.bf16 %v1435, %v1431
    %v1600 = vpack.c.bf16 %v1440, %v1436
    %v1601 = vpack.c.bf16 %v1441, %v1437
    %v1602 = vpack.c.bf16 %v1442, %v1438
    %v1603 = vpack.c.bf16 %v1443, %v1439
    %v1604 = vpack.c.bf16 %v1448, %v1444
    %v1605 = vpack.c.bf16 %v1449, %v1445
    %v1606 = vpack.c.bf16 %v1450, %v1446
    %v1607 = vpack.c.bf16 %v1451, %v1447
    %v1608 = vpack.c.bf16 %v1456, %v1452
    %v1609 = vpack.c.bf16 %v1457, %v1453
    %v1610 = vpack.c.bf16 %v1458, %v1454
    %v1611 = vpack.c.bf16 %v1459, %v1455
    %v1612 = vpack.c.bf16 %v1464, %v1460
    %v1613 = vpack.c.bf16 %v1465, %v1461
    %v1614 = vpack.c.bf16 %v1466, %v1462
    %v1615 = vpack.c.bf16 %v1467, %v1463
    %v1616 = vpack.c.bf16 %v1472, %v1468
    %v1617 = vpack.c.bf16 %v1473, %v1469
    %v1618 = vpack.c.bf16 %v1474, %v1470
    %v1619 = vpack.c.bf16 %v1475, %v1471
    %v1620 = vpack.c.bf16 %v1480, %v1476
    %v1621 = vpack.c.bf16 %v1481, %v1477
    %v1622 = vpack.c.bf16 %v1482, %v1478
    %v1623 = vpack.c.bf16 %v1483, %v1479
    %v1624 = vpack.c.bf16 %v1488, %v1484
    %v1625 = vpack.c.bf16 %v1489, %v1485
    %v1626 = vpack.c.bf16 %v1490, %v1486
    %v1627 = vpack.c.bf16 %v1491, %v1487
    %v1628 = vpack.c.bf16 %v1496, %v1492
    %v1629 = vpack.c.bf16 %v1497, %v1493
    %v1630 = vpack.c.bf16 %v1498, %v1494
    %v1631 = vpack.c.bf16 %v1499, %v1495
    %v1632 = vpack.c.bf16 %v1504, %v1500
    %v1633 = vpack.c.bf16 %v1505, %v1501
    %v1634 = vpack.c.bf16 %v1506, %v1502
    %v1635 = vpack.c.bf16 %v1507, %v1503
    %v1636 = vpack.c.bf16 %v1512, %v1508
    %v1637 = vpack.c.bf16 %v1513, %v1509
    %v1638 = vpack.c.bf16 %v1514, %v1510
    %v1639 = vpack.c.bf16 %v1515, %v1511
    %v1640 = vpack.c.bf16 %v1520, %v1516
    %v1641 = vpack.c.bf16 %v1521, %v1517
    %v1642 = vpack.c.bf16 %v1522, %v1518
    %v1643 = vpack.c.bf16 %v1523, %v1519
    %v1644 = vpack.c.bf16 %v1528, %v1524
    %v1645 = vpack.c.bf16 %v1529, %v1525
    %v1646 = vpack.c.bf16 %v1530, %v1526
    %v1647 = vpack.c.bf16 %v1531, %v1527
    %v1648 = vpack.c.bf16 %v1536, %v1532
    %v1649 = vpack.c.bf16 %v1537, %v1533
    %v1650 = vpack.c.bf16 %v1538, %v1534
    %v1651 = vpack.c.bf16 %v1539, %v1535
    %v1652 = vld [vmem:[#allocation4] sm:$0xff]
    %v1653 = vld [vmem:[#allocation4 + $0x8] sm:$0xff]
    %v1654 = vld [vmem:[#allocation4 + $0x10] sm:$0xff]
    %v1655 = vld [vmem:[#allocation4 + $0x18] sm:$0xff]
    %v1656 = vld [vmem:[#allocation4 + $0x20] sm:$0xff]
    %v1657 = vld [vmem:[#allocation4 + $0x28] sm:$0xff]
    %v1658 = vld [vmem:[#allocation4 + $0x30] sm:$0xff]
    %v1659 = vld [vmem:[#allocation4 + $0x38] sm:$0xff]
    %v1660 = vld [vmem:[#allocation4 + $0x40] sm:$0xff]
    %v1661 = vld [vmem:[#allocation4 + $0x48] sm:$0xff]
    %v1662 = vld [vmem:[#allocation4 + $0x50] sm:$0xff]
    %v1663 = vld [vmem:[#allocation4 + $0x58] sm:$0xff]
    %v1664 = vld [vmem:[#allocation4 + $0x60] sm:$0xff]
    %v1665 = vld [vmem:[#allocation4 + $0x68] sm:$0xff]
    %v1666 = vld [vmem:[#allocation4 + $0x70] sm:$0xff]
    %v1667 = vld [vmem:[#allocation4 + $0x78] sm:$0xff]
    %v1668 = vld [vmem:[#allocation4 + $0x80] sm:$0xff]
    %v1669 = vld [vmem:[#allocation4 + $0x88] sm:$0xff]
    %v1670 = vld [vmem:[#allocation4 + $0x90] sm:$0xff]
    %v1671 = vld [vmem:[#allocation4 + $0x98] sm:$0xff]
    %v1672 = vld [vmem:[#allocation4 + $0xa0] sm:$0xff]
    %v1673 = vld [vmem:[#allocation4 + $0xa8] sm:$0xff]
    %v1674 = vld [vmem:[#allocation4 + $0xb0] sm:$0xff]
    %v1675 = vld [vmem:[#allocation4 + $0xb8] sm:$0xff]
    %v1676 = vld [vmem:[#allocation4 + $0xc0] sm:$0xff]
    %v1677 = vld [vmem:[#allocation4 + $0xc8] sm:$0xff]
    %v1678 = vld [vmem:[#allocation4 + $0xd0] sm:$0xff]
    %v1679 = vld [vmem:[#allocation4 + $0xd8] sm:$0xff]
    %v1680 = vld [vmem:[#allocation4 + $0xe0] sm:$0xff]
    %v1681 = vld [vmem:[#allocation4 + $0xe8] sm:$0xff]
    %v1682 = vld [vmem:[#allocation4 + $0xf0] sm:$0xff]
    %v1683 = vld [vmem:[#allocation4 + $0xf8] sm:$0xff]
    %v1684 = vld [vmem:[#allocation4 + $0x100] sm:$0xff]
    %v1685 = vld [vmem:[#allocation4 + $0x108] sm:$0xff]
    %v1686 = vld [vmem:[#allocation4 + $0x110] sm:$0xff]
    %v1687 = vld [vmem:[#allocation4 + $0x118] sm:$0xff]
    %v1688 = vld [vmem:[#allocation4 + $0x120] sm:$0xff]
    %v1689 = vld [vmem:[#allocation4 + $0x128] sm:$0xff]
    %v1690 = vld [vmem:[#allocation4 + $0x130] sm:$0xff]
    %v1691 = vld [vmem:[#allocation4 + $0x138] sm:$0xff]
    %v1692 = vld [vmem:[#allocation4 + $0x140] sm:$0xff]
    %v1693 = vld [vmem:[#allocation4 + $0x148] sm:$0xff]
    %v1694 = vld [vmem:[#allocation4 + $0x150] sm:$0xff]
    %v1695 = vld [vmem:[#allocation4 + $0x158] sm:$0xff]
    %v1696 = vld [vmem:[#allocation4 + $0x160] sm:$0xff]
    %v1697 = vld [vmem:[#allocation4 + $0x168] sm:$0xff]
    %v1698 = vld [vmem:[#allocation4 + $0x170] sm:$0xff]
    %v1699 = vld [vmem:[#allocation4 + $0x178] sm:$0xff]
    %v1700 = vld [vmem:[#allocation4 + $0x180] sm:$0xff]
    %v1701 = vld [vmem:[#allocation4 + $0x188] sm:$0xff]
    %v1702 = vld [vmem:[#allocation4 + $0x190] sm:$0xff]
    %v1703 = vld [vmem:[#allocation4 + $0x198] sm:$0xff]
    %v1704 = vld [vmem:[#allocation4 + $0x1a0] sm:$0xff]
    %v1705 = vld [vmem:[#allocation4 + $0x1a8] sm:$0xff]
    %v1706 = vld [vmem:[#allocation4 + $0x1b0] sm:$0xff]
    %v1707 = vld [vmem:[#allocation4 + $0x1b8] sm:$0xff]
    %v1708 = vld [vmem:[#allocation4 + $0x1c0] sm:$0xff]
    %v1709 = vld [vmem:[#allocation4 + $0x1c8] sm:$0xff]
    %v1710 = vld [vmem:[#allocation4 + $0x1d0] sm:$0xff]
    %v1711 = vld [vmem:[#allocation4 + $0x1d8] sm:$0xff]
    %v1712 = vld [vmem:[#allocation4 + $0x1e0] sm:$0xff]
    %v1713 = vld [vmem:[#allocation4 + $0x1e8] sm:$0xff]
    %v1714 = vld [vmem:[#allocation4 + $0x1f0] sm:$0xff]
    %v1715 = vld [vmem:[#allocation4 + $0x1f8] sm:$0xff]
    %v1716 = vld [vmem:[#allocation4 + $0x200] sm:$0xff]
    %v1717 = vld [vmem:[#allocation4 + $0x208] sm:$0xff]
    %v1718 = vld [vmem:[#allocation4 + $0x210] sm:$0xff]
    %v1719 = vld [vmem:[#allocation4 + $0x218] sm:$0xff]
    %v1720 = vld [vmem:[#allocation4 + $0x220] sm:$0xff]
    %v1721 = vld [vmem:[#allocation4 + $0x228] sm:$0xff]
    %v1722 = vld [vmem:[#allocation4 + $0x230] sm:$0xff]
    %v1723 = vld [vmem:[#allocation4 + $0x238] sm:$0xff]
    %v1724 = vld [vmem:[#allocation4 + $0x240] sm:$0xff]
    %v1725 = vld [vmem:[#allocation4 + $0x248] sm:$0xff]
    %v1726 = vld [vmem:[#allocation4 + $0x250] sm:$0xff]
    %v1727 = vld [vmem:[#allocation4 + $0x258] sm:$0xff]
    %v1728 = vld [vmem:[#allocation4 + $0x260] sm:$0xff]
    %v1729 = vld [vmem:[#allocation4 + $0x268] sm:$0xff]
    %v1730 = vld [vmem:[#allocation4 + $0x270] sm:$0xff]
    %v1731 = vld [vmem:[#allocation4 + $0x278] sm:$0xff]
    %v1732 = vld [vmem:[#allocation4 + $0x280] sm:$0xff]
    %v1733 = vld [vmem:[#allocation4 + $0x288] sm:$0xff]
    %v1734 = vld [vmem:[#allocation4 + $0x290] sm:$0xff]
    %v1735 = vld [vmem:[#allocation4 + $0x298] sm:$0xff]
    %v1736 = vld [vmem:[#allocation4 + $0x2a0] sm:$0xff]
    %v1737 = vld [vmem:[#allocation4 + $0x2a8] sm:$0xff]
    %v1738 = vld [vmem:[#allocation4 + $0x2b0] sm:$0xff]
    %v1739 = vld [vmem:[#allocation4 + $0x2b8] sm:$0xff]
    %v1740 = vld [vmem:[#allocation4 + $0x2c0] sm:$0xff]
    %v1741 = vld [vmem:[#allocation4 + $0x2c8] sm:$0xff]
    %v1742 = vld [vmem:[#allocation4 + $0x2d0] sm:$0xff]
    %v1743 = vld [vmem:[#allocation4 + $0x2d8] sm:$0xff]
    %v1744 = vld [vmem:[#allocation4 + $0x2e0] sm:$0xff]
    %v1745 = vld [vmem:[#allocation4 + $0x2e8] sm:$0xff]
    %v1746 = vld [vmem:[#allocation4 + $0x2f0] sm:$0xff]
    %v1747 = vld [vmem:[#allocation4 + $0x2f8] sm:$0xff]
    %v1748 = vld [vmem:[#allocation4 + $0x300] sm:$0xff]
    %v1749 = vld [vmem:[#allocation4 + $0x308] sm:$0xff]
    %v1750 = vld [vmem:[#allocation4 + $0x310] sm:$0xff]
    %v1751 = vld [vmem:[#allocation4 + $0x318] sm:$0xff]
    %v1752 = vld [vmem:[#allocation4 + $0x320] sm:$0xff]
    %v1753 = vld [vmem:[#allocation4 + $0x328] sm:$0xff]
    %v1754 = vld [vmem:[#allocation4 + $0x330] sm:$0xff]
    %v1755 = vld [vmem:[#allocation4 + $0x338] sm:$0xff]
    %v1756 = vld [vmem:[#allocation4 + $0x340] sm:$0xff]
    %v1757 = vld [vmem:[#allocation4 + $0x348] sm:$0xff]
    %v1758 = vld [vmem:[#allocation4 + $0x350] sm:$0xff]
    %v1759 = vld [vmem:[#allocation4 + $0x358] sm:$0xff]
    %v1760 = vld [vmem:[#allocation4 + $0x360] sm:$0xff]
    %v1761 = vld [vmem:[#allocation4 + $0x368] sm:$0xff]
    %v1762 = vld [vmem:[#allocation4 + $0x370] sm:$0xff]
    %v1763 = vld [vmem:[#allocation4 + $0x378] sm:$0xff]
    %v1764 = vld [vmem:[#allocation4 + $0x380] sm:$0xff]
    %v1765 = vld [vmem:[#allocation4 + $0x388] sm:$0xff]
    %v1766 = vld [vmem:[#allocation4 + $0x390] sm:$0xff]
    %v1767 = vld [vmem:[#allocation4 + $0x398] sm:$0xff]
    %v1768 = vld [vmem:[#allocation4 + $0x3a0] sm:$0xff]
    %v1769 = vld [vmem:[#allocation4 + $0x3a8] sm:$0xff]
    %v1770 = vld [vmem:[#allocation4 + $0x3b0] sm:$0xff]
    %v1771 = vld [vmem:[#allocation4 + $0x3b8] sm:$0xff]
    %v1772 = vld [vmem:[#allocation4 + $0x3c0] sm:$0xff]
    %v1773 = vld [vmem:[#allocation4 + $0x3c8] sm:$0xff]
    %v1774 = vld [vmem:[#allocation4 + $0x3d0] sm:$0xff]
    %v1775 = vld [vmem:[#allocation4 + $0x3d8] sm:$0xff]
    %v1776 = vld [vmem:[#allocation4 + $0x3e0] sm:$0xff]
    %v1777 = vld [vmem:[#allocation4 + $0x3e8] sm:$0xff]
    %v1778 = vld [vmem:[#allocation4 + $0x3f0] sm:$0xff]
    %v1779 = vld [vmem:[#allocation4 + $0x3f8] sm:$0xff]
    %v1780 = vld [vmem:[%s6] sm:$0xf]
    %v1782 = vlaneseq
    %v1783 = vshrl.u32 %v1782, 7
    %v1784 = vsub.s32 0, %v1783
    %v1785 = vrot.slane %v1780, %v1784
    %v1786 = vlaneseq
    %v1787 = vshrl.u32 %v1786, 7
    %v1788 = vsub.s32 1, %v1787
    %v1789 = vrot.slane %v1780, %v1788
    %v1790 = vlaneseq
    %v1791 = vshrl.u32 %v1790, 7
    %v1792 = vsub.s32 2, %v1791
    %v1793 = vrot.slane %v1780, %v1792
    %v1794 = vlaneseq
    %v1795 = vshrl.u32 %v1794, 7
    %v1796 = vsub.s32 3, %v1795
    %v1797 = vrot.slane %v1780, %v1796
    %v1930 = vunpack.c.l.b16 %v1652
    %v1931 = vunpack.c.h.b16 %v1652
    %v1932 = vunpack.c.l.b16 %v1653
    %v1933 = vunpack.c.h.b16 %v1653
    %v1934 = vunpack.c.l.b16 %v1654
    %v1935 = vunpack.c.h.b16 %v1654
    %v1936 = vunpack.c.l.b16 %v1655
    %v1937 = vunpack.c.h.b16 %v1655
    %v1938 = vunpack.c.l.b16 %v1656
    %v1939 = vunpack.c.h.b16 %v1656
    %v1940 = vunpack.c.l.b16 %v1657
    %v1941 = vunpack.c.h.b16 %v1657
    %v1942 = vunpack.c.l.b16 %v1658
    %v1943 = vunpack.c.h.b16 %v1658
    %v1944 = vunpack.c.l.b16 %v1659
    %v1945 = vunpack.c.h.b16 %v1659
    %v1946 = vunpack.c.l.b16 %v1660
    %v1947 = vunpack.c.h.b16 %v1660
    %v1948 = vunpack.c.l.b16 %v1661
    %v1949 = vunpack.c.h.b16 %v1661
    %v1950 = vunpack.c.l.b16 %v1662
    %v1951 = vunpack.c.h.b16 %v1662
    %v1952 = vunpack.c.l.b16 %v1663
    %v1953 = vunpack.c.h.b16 %v1663
    %v1954 = vunpack.c.l.b16 %v1664
    %v1955 = vunpack.c.h.b16 %v1664
    %v1956 = vunpack.c.l.b16 %v1665
    %v1957 = vunpack.c.h.b16 %v1665
    %v1958 = vunpack.c.l.b16 %v1666
    %v1959 = vunpack.c.h.b16 %v1666
    %v1960 = vunpack.c.l.b16 %v1667
    %v1961 = vunpack.c.h.b16 %v1667
    %v1962 = vunpack.c.l.b16 %v1668
    %v1963 = vunpack.c.h.b16 %v1668
    %v1964 = vunpack.c.l.b16 %v1669
    %v1965 = vunpack.c.h.b16 %v1669
    %v1966 = vunpack.c.l.b16 %v1670
    %v1967 = vunpack.c.h.b16 %v1670
    %v1968 = vunpack.c.l.b16 %v1671
    %v1969 = vunpack.c.h.b16 %v1671
    %v1970 = vunpack.c.l.b16 %v1672
    %v1971 = vunpack.c.h.b16 %v1672
    %v1972 = vunpack.c.l.b16 %v1673
    %v1973 = vunpack.c.h.b16 %v1673
    %v1974 = vunpack.c.l.b16 %v1674
    %v1975 = vunpack.c.h.b16 %v1674
    %v1976 = vunpack.c.l.b16 %v1675
    %v1977 = vunpack.c.h.b16 %v1675
    %v1978 = vunpack.c.l.b16 %v1676
    %v1979 = vunpack.c.h.b16 %v1676
    %v1980 = vunpack.c.l.b16 %v1677
    %v1981 = vunpack.c.h.b16 %v1677
    %v1982 = vunpack.c.l.b16 %v1678
    %v1983 = vunpack.c.h.b16 %v1678
    %v1984 = vunpack.c.l.b16 %v1679
    %v1985 = vunpack.c.h.b16 %v1679
    %v1986 = vunpack.c.l.b16 %v1680
    %v1987 = vunpack.c.h.b16 %v1680
    %v1988 = vunpack.c.l.b16 %v1681
    %v1989 = vunpack.c.h.b16 %v1681
    %v1990 = vunpack.c.l.b16 %v1682
    %v1991 = vunpack.c.h.b16 %v1682
    %v1992 = vunpack.c.l.b16 %v1683
    %v1993 = vunpack.c.h.b16 %v1683
    %v1994 = vunpack.c.l.b16 %v1684
    %v1995 = vunpack.c.h.b16 %v1684
    %v1996 = vunpack.c.l.b16 %v1685
    %v1997 = vunpack.c.h.b16 %v1685
    %v1998 = vunpack.c.l.b16 %v1686
    %v1999 = vunpack.c.h.b16 %v1686
    %v2000 = vunpack.c.l.b16 %v1687
    %v2001 = vunpack.c.h.b16 %v1687
    %v2002 = vunpack.c.l.b16 %v1688
    %v2003 = vunpack.c.h.b16 %v1688
    %v2004 = vunpack.c.l.b16 %v1689
    %v2005 = vunpack.c.h.b16 %v1689
    %v2006 = vunpack.c.l.b16 %v1690
    %v2007 = vunpack.c.h.b16 %v1690
    %v2008 = vunpack.c.l.b16 %v1691
    %v2009 = vunpack.c.h.b16 %v1691
    %v2010 = vunpack.c.l.b16 %v1692
    %v2011 = vunpack.c.h.b16 %v1692
    %v2012 = vunpack.c.l.b16 %v1693
    %v2013 = vunpack.c.h.b16 %v1693
    %v2014 = vunpack.c.l.b16 %v1694
    %v2015 = vunpack.c.h.b16 %v1694
    %v2016 = vunpack.c.l.b16 %v1695
    %v2017 = vunpack.c.h.b16 %v1695
    %v2018 = vunpack.c.l.b16 %v1696
    %v2019 = vunpack.c.h.b16 %v1696
    %v2020 = vunpack.c.l.b16 %v1697
    %v2021 = vunpack.c.h.b16 %v1697
    %v2022 = vunpack.c.l.b16 %v1698
    %v2023 = vunpack.c.h.b16 %v1698
    %v2024 = vunpack.c.l.b16 %v1699
    %v2025 = vunpack.c.h.b16 %v1699
    %v2026 = vunpack.c.l.b16 %v1700
    %v2027 = vunpack.c.h.b16 %v1700
    %v2028 = vunpack.c.l.b16 %v1701
    %v2029 = vunpack.c.h.b16 %v1701
    %v2030 = vunpack.c.l.b16 %v1702
    %v2031 = vunpack.c.h.b16 %v1702
    %v2032 = vunpack.c.l.b16 %v1703
    %v2033 = vunpack.c.h.b16 %v1703
    %v2034 = vunpack.c.l.b16 %v1704
    %v2035 = vunpack.c.h.b16 %v1704
    %v2036 = vunpack.c.l.b16 %v1705
    %v2037 = vunpack.c.h.b16 %v1705
    %v2038 = vunpack.c.l.b16 %v1706
    %v2039 = vunpack.c.h.b16 %v1706
    %v2040 = vunpack.c.l.b16 %v1707
    %v2041 = vunpack.c.h.b16 %v1707
    %v2042 = vunpack.c.l.b16 %v1708
    %v2043 = vunpack.c.h.b16 %v1708
    %v2044 = vunpack.c.l.b16 %v1709
    %v2045 = vunpack.c.h.b16 %v1709
    %v2046 = vunpack.c.l.b16 %v1710
    %v2047 = vunpack.c.h.b16 %v1710
    %v2048 = vunpack.c.l.b16 %v1711
    %v2049 = vunpack.c.h.b16 %v1711
    %v2050 = vunpack.c.l.b16 %v1712
    %v2051 = vunpack.c.h.b16 %v1712
    %v2052 = vunpack.c.l.b16 %v1713
    %v2053 = vunpack.c.h.b16 %v1713
    %v2054 = vunpack.c.l.b16 %v1714
    %v2055 = vunpack.c.h.b16 %v1714
    %v2056 = vunpack.c.l.b16 %v1715
    %v2057 = vunpack.c.h.b16 %v1715
    %v2058 = vunpack.c.l.b16 %v1716
    %v2059 = vunpack.c.h.b16 %v1716
    %v2060 = vunpack.c.l.b16 %v1717
    %v2061 = vunpack.c.h.b16 %v1717
    %v2062 = vunpack.c.l.b16 %v1718
    %v2063 = vunpack.c.h.b16 %v1718
    %v2064 = vunpack.c.l.b16 %v1719
    %v2065 = vunpack.c.h.b16 %v1719
    %v2066 = vunpack.c.l.b16 %v1720
    %v2067 = vunpack.c.h.b16 %v1720
    %v2068 = vunpack.c.l.b16 %v1721
    %v2069 = vunpack.c.h.b16 %v1721
    %v2070 = vunpack.c.l.b16 %v1722
    %v2071 = vunpack.c.h.b16 %v1722
    %v2072 = vunpack.c.l.b16 %v1723
    %v2073 = vunpack.c.h.b16 %v1723
    %v2074 = vunpack.c.l.b16 %v1724
    %v2075 = vunpack.c.h.b16 %v1724
    %v2076 = vunpack.c.l.b16 %v1725
    %v2077 = vunpack.c.h.b16 %v1725
    %v2078 = vunpack.c.l.b16 %v1726
    %v2079 = vunpack.c.h.b16 %v1726
    %v2080 = vunpack.c.l.b16 %v1727
    %v2081 = vunpack.c.h.b16 %v1727
    %v2082 = vunpack.c.l.b16 %v1728
    %v2083 = vunpack.c.h.b16 %v1728
    %v2084 = vunpack.c.l.b16 %v1729
    %v2085 = vunpack.c.h.b16 %v1729
    %v2086 = vunpack.c.l.b16 %v1730
    %v2087 = vunpack.c.h.b16 %v1730
    %v2088 = vunpack.c.l.b16 %v1731
    %v2089 = vunpack.c.h.b16 %v1731
    %v2090 = vunpack.c.l.b16 %v1732
    %v2091 = vunpack.c.h.b16 %v1732
    %v2092 = vunpack.c.l.b16 %v1733
    %v2093 = vunpack.c.h.b16 %v1733
    %v2094 = vunpack.c.l.b16 %v1734
    %v2095 = vunpack.c.h.b16 %v1734
    %v2096 = vunpack.c.l.b16 %v1735
    %v2097 = vunpack.c.h.b16 %v1735
    %v2098 = vunpack.c.l.b16 %v1736
    %v2099 = vunpack.c.h.b16 %v1736
    %v2100 = vunpack.c.l.b16 %v1737
    %v2101 = vunpack.c.h.b16 %v1737
    %v2102 = vunpack.c.l.b16 %v1738
    %v2103 = vunpack.c.h.b16 %v1738
    %v2104 = vunpack.c.l.b16 %v1739
    %v2105 = vunpack.c.h.b16 %v1739
    %v2106 = vunpack.c.l.b16 %v1740
    %v2107 = vunpack.c.h.b16 %v1740
    %v2108 = vunpack.c.l.b16 %v1741
    %v2109 = vunpack.c.h.b16 %v1741
    %v2110 = vunpack.c.l.b16 %v1742
    %v2111 = vunpack.c.h.b16 %v1742
    %v2112 = vunpack.c.l.b16 %v1743
    %v2113 = vunpack.c.h.b16 %v1743
    %v2114 = vunpack.c.l.b16 %v1744
    %v2115 = vunpack.c.h.b16 %v1744
    %v2116 = vunpack.c.l.b16 %v1745
    %v2117 = vunpack.c.h.b16 %v1745
    %v2118 = vunpack.c.l.b16 %v1746
    %v2119 = vunpack.c.h.b16 %v1746
    %v2120 = vunpack.c.l.b16 %v1747
    %v2121 = vunpack.c.h.b16 %v1747
    %v2122 = vunpack.c.l.b16 %v1748
    %v2123 = vunpack.c.h.b16 %v1748
    %v2124 = vunpack.c.l.b16 %v1749
    %v2125 = vunpack.c.h.b16 %v1749
    %v2126 = vunpack.c.l.b16 %v1750
    %v2127 = vunpack.c.h.b16 %v1750
    %v2128 = vunpack.c.l.b16 %v1751
    %v2129 = vunpack.c.h.b16 %v1751
    %v2130 = vunpack.c.l.b16 %v1752
    %v2131 = vunpack.c.h.b16 %v1752
    %v2132 = vunpack.c.l.b16 %v1753
    %v2133 = vunpack.c.h.b16 %v1753
    %v2134 = vunpack.c.l.b16 %v1754
    %v2135 = vunpack.c.h.b16 %v1754
    %v2136 = vunpack.c.l.b16 %v1755
    %v2137 = vunpack.c.h.b16 %v1755
    %v2138 = vunpack.c.l.b16 %v1756
    %v2139 = vunpack.c.h.b16 %v1756
    %v2140 = vunpack.c.l.b16 %v1757
    %v2141 = vunpack.c.h.b16 %v1757
    %v2142 = vunpack.c.l.b16 %v1758
    %v2143 = vunpack.c.h.b16 %v1758
    %v2144 = vunpack.c.l.b16 %v1759
    %v2145 = vunpack.c.h.b16 %v1759
    %v2146 = vunpack.c.l.b16 %v1760
    %v2147 = vunpack.c.h.b16 %v1760
    %v2148 = vunpack.c.l.b16 %v1761
    %v2149 = vunpack.c.h.b16 %v1761
    %v2150 = vunpack.c.l.b16 %v1762
    %v2151 = vunpack.c.h.b16 %v1762
    %v2152 = vunpack.c.l.b16 %v1763
    %v2153 = vunpack.c.h.b16 %v1763
    %v2154 = vunpack.c.l.b16 %v1764
    %v2155 = vunpack.c.h.b16 %v1764
    %v2156 = vunpack.c.l.b16 %v1765
    %v2157 = vunpack.c.h.b16 %v1765
    %v2158 = vunpack.c.l.b16 %v1766
    %v2159 = vunpack.c.h.b16 %v1766
    %v2160 = vunpack.c.l.b16 %v1767
    %v2161 = vunpack.c.h.b16 %v1767
    %v2162 = vunpack.c.l.b16 %v1768
    %v2163 = vunpack.c.h.b16 %v1768
    %v2164 = vunpack.c.l.b16 %v1769
    %v2165 = vunpack.c.h.b16 %v1769
    %v2166 = vunpack.c.l.b16 %v1770
    %v2167 = vunpack.c.h.b16 %v1770
    %v2168 = vunpack.c.l.b16 %v1771
    %v2169 = vunpack.c.h.b16 %v1771
    %v2170 = vunpack.c.l.b16 %v1772
    %v2171 = vunpack.c.h.b16 %v1772
    %v2172 = vunpack.c.l.b16 %v1773
    %v2173 = vunpack.c.h.b16 %v1773
    %v2174 = vunpack.c.l.b16 %v1774
    %v2175 = vunpack.c.h.b16 %v1774
    %v2176 = vunpack.c.l.b16 %v1775
    %v2177 = vunpack.c.h.b16 %v1775
    %v2178 = vunpack.c.l.b16 %v1776
    %v2179 = vunpack.c.h.b16 %v1776
    %v2180 = vunpack.c.l.b16 %v1777
    %v2181 = vunpack.c.h.b16 %v1777
    %v2182 = vunpack.c.l.b16 %v1778
    %v2183 = vunpack.c.h.b16 %v1778
    %v2184 = vunpack.c.l.b16 %v1779
    %v2185 = vunpack.c.h.b16 %v1779
    %v2186 = vpack.c.b16 %v1934, %v1930
    %v2187 = vpack.c.b16 %v1935, %v1931
    %v2188 = vpack.c.b16 %v1936, %v1932
    %v2189 = vpack.c.b16 %v1937, %v1933
    %v2190 = vpack.c.b16 %v1942, %v1938
    %v2191 = vpack.c.b16 %v1943, %v1939
    %v2192 = vpack.c.b16 %v1944, %v1940
    %v2193 = vpack.c.b16 %v1945, %v1941
    %v2194 = vpack.c.b16 %v1950, %v1946
    %v2195 = vpack.c.b16 %v1951, %v1947
    %v2196 = vpack.c.b16 %v1952, %v1948
    %v2197 = vpack.c.b16 %v1953, %v1949
    %v2198 = vpack.c.b16 %v1958, %v1954
    %v2199 = vpack.c.b16 %v1959, %v1955
    %v2200 = vpack.c.b16 %v1960, %v1956
    %v2201 = vpack.c.b16 %v1961, %v1957
    %v2202 = vpack.c.b16 %v1966, %v1962
    %v2203 = vpack.c.b16 %v1967, %v1963
    %v2204 = vpack.c.b16 %v1968, %v1964
    %v2205 = vpack.c.b16 %v1969, %v1965
    %v2206 = vpack.c.b16 %v1974, %v1970
    %v2207 = vpack.c.b16 %v1975, %v1971
    %v2208 = vpack.c.b16 %v1976, %v1972
    %v2209 = vpack.c.b16 %v1977, %v1973
    %v2210 = vpack.c.b16 %v1982, %v1978
    %v2211 = vpack.c.b16 %v1983, %v1979
    %v2212 = vpack.c.b16 %v1984, %v1980
    %v2213 = vpack.c.b16 %v1985, %v1981
    %v2214 = vpack.c.b16 %v1990, %v1986
    %v2215 = vpack.c.b16 %v1991, %v1987
    %v2216 = vpack.c.b16 %v1992, %v1988
    %v2217 = vpack.c.b16 %v1993, %v1989
    %v2218 = vpack.c.b16 %v1998, %v1994
    %v2219 = vpack.c.b16 %v1999, %v1995
    %v2220 = vpack.c.b16 %v2000, %v1996
    %v2221 = vpack.c.b16 %v2001, %v1997
    %v2222 = vpack.c.b16 %v2006, %v2002
    %v2223 = vpack.c.b16 %v2007, %v2003
    %v2224 = vpack.c.b16 %v2008, %v2004
    %v2225 = vpack.c.b16 %v2009, %v2005
    %v2226 = vpack.c.b16 %v2014, %v2010
    %v2227 = vpack.c.b16 %v2015, %v2011
    %v2228 = vpack.c.b16 %v2016, %v2012
    %v2229 = vpack.c.b16 %v2017, %v2013
    %v2230 = vpack.c.b16 %v2022, %v2018
    %v2231 = vpack.c.b16 %v2023, %v2019
    %v2232 = vpack.c.b16 %v2024, %v2020
    %v2233 = vpack.c.b16 %v2025, %v2021
    %v2234 = vpack.c.b16 %v2030, %v2026
    %v2235 = vpack.c.b16 %v2031, %v2027
    %v2236 = vpack.c.b16 %v2032, %v2028
    %v2237 = vpack.c.b16 %v2033, %v2029
    %v2238 = vpack.c.b16 %v2038, %v2034
    %v2239 = vpack.c.b16 %v2039, %v2035
    %v2240 = vpack.c.b16 %v2040, %v2036
    %v2241 = vpack.c.b16 %v2041, %v2037
    %v2242 = vpack.c.b16 %v2046, %v2042
    %v2243 = vpack.c.b16 %v2047, %v2043
    %v2244 = vpack.c.b16 %v2048, %v2044
    %v2245 = vpack.c.b16 %v2049, %v2045
    %v2246 = vpack.c.b16 %v2054, %v2050
    %v2247 = vpack.c.b16 %v2055, %v2051
    %v2248 = vpack.c.b16 %v2056, %v2052
    %v2249 = vpack.c.b16 %v2057, %v2053
    %v2250 = vpack.c.b16 %v2062, %v2058
    %v2251 = vpack.c.b16 %v2063, %v2059
    %v2252 = vpack.c.b16 %v2064, %v2060
    %v2253 = vpack.c.b16 %v2065, %v2061
    %v2254 = vpack.c.b16 %v2070, %v2066
    %v2255 = vpack.c.b16 %v2071, %v2067
    %v2256 = vpack.c.b16 %v2072, %v2068
    %v2257 = vpack.c.b16 %v2073, %v2069
    %v2258 = vpack.c.b16 %v2078, %v2074
    %v2259 = vpack.c.b16 %v2079, %v2075
    %v2260 = vpack.c.b16 %v2080, %v2076
    %v2261 = vpack.c.b16 %v2081, %v2077
    %v2262 = vpack.c.b16 %v2086, %v2082
    %v2263 = vpack.c.b16 %v2087, %v2083
    %v2264 = vpack.c.b16 %v2088, %v2084
    %v2265 = vpack.c.b16 %v2089, %v2085
    %v2266 = vpack.c.b16 %v2094, %v2090
    %v2267 = vpack.c.b16 %v2095, %v2091
    %v2268 = vpack.c.b16 %v2096, %v2092
    %v2269 = vpack.c.b16 %v2097, %v2093
    %v2270 = vpack.c.b16 %v2102, %v2098
    %v2271 = vpack.c.b16 %v2103, %v2099
    %v2272 = vpack.c.b16 %v2104, %v2100
    %v2273 = vpack.c.b16 %v2105, %v2101
    %v2274 = vpack.c.b16 %v2110, %v2106
    %v2275 = vpack.c.b16 %v2111, %v2107
    %v2276 = vpack.c.b16 %v2112, %v2108
    %v2277 = vpack.c.b16 %v2113, %v2109
    %v2278 = vpack.c.b16 %v2118, %v2114
    %v2279 = vpack.c.b16 %v2119, %v2115
    %v2280 = vpack.c.b16 %v2120, %v2116
    %v2281 = vpack.c.b16 %v2121, %v2117
    %v2282 = vpack.c.b16 %v2126, %v2122
    %v2283 = vpack.c.b16 %v2127, %v2123
    %v2284 = vpack.c.b16 %v2128, %v2124
    %v2285 = vpack.c.b16 %v2129, %v2125
    %v2286 = vpack.c.b16 %v2134, %v2130
    %v2287 = vpack.c.b16 %v2135, %v2131
    %v2288 = vpack.c.b16 %v2136, %v2132
    %v2289 = vpack.c.b16 %v2137, %v2133
    %v2290 = vpack.c.b16 %v2142, %v2138
    %v2291 = vpack.c.b16 %v2143, %v2139
    %v2292 = vpack.c.b16 %v2144, %v2140
    %v2293 = vpack.c.b16 %v2145, %v2141
    %v2294 = vpack.c.b16 %v2150, %v2146
    %v2295 = vpack.c.b16 %v2151, %v2147
    %v2296 = vpack.c.b16 %v2152, %v2148
    %v2297 = vpack.c.b16 %v2153, %v2149
    %v2298 = vpack.c.b16 %v2158, %v2154
    %v2299 = vpack.c.b16 %v2159, %v2155
    %v2300 = vpack.c.b16 %v2160, %v2156
    %v2301 = vpack.c.b16 %v2161, %v2157
    %v2302 = vpack.c.b16 %v2166, %v2162
    %v2303 = vpack.c.b16 %v2167, %v2163
    %v2304 = vpack.c.b16 %v2168, %v2164
    %v2305 = vpack.c.b16 %v2169, %v2165
    %v2306 = vpack.c.b16 %v2174, %v2170
    %v2307 = vpack.c.b16 %v2175, %v2171
    %v2308 = vpack.c.b16 %v2176, %v2172
    %v2309 = vpack.c.b16 %v2177, %v2173
    %v2310 = vpack.c.b16 %v2182, %v2178
    %v2311 = vpack.c.b16 %v2183, %v2179
    %v2312 = vpack.c.b16 %v2184, %v2180
    %v2313 = vpack.c.b16 %v2185, %v2181
    %2442 = vmatprep.subr.bf16.mxu0 %v2187
    %2443 = vmatpush1.bf16.msra.mxu0 %v2186
    %2444 = vmatprep.subr.bf16.mxu0 %v2191
    %2445 = vmatpush1.bf16.msra.mxu0 %v2190
    %2446 = vmatprep.subr.bf16.mxu0 %v2195
    %2447 = vmatpush1.bf16.msra.mxu0 %v2194
    %2448 = vmatprep.subr.bf16.mxu0 %v2199
    %2449 = vmatpush1.bf16.msra.mxu0 %v2198
    %2450 = vmatprep.subr.bf16.mxu0 %v2203
    %2451 = vmatpush1.bf16.msra.mxu0 %v2202
    %2452 = vmatprep.subr.bf16.mxu0 %v2207
    %2453 = vmatpush1.bf16.msra.mxu0 %v2206
    %2454 = vmatprep.subr.bf16.mxu0 %v2211
    %2455 = vmatpush1.bf16.msra.mxu0 %v2210
    %2456 = vmatprep.subr.bf16.mxu0 %v2215
    %2457 = vmatpush1.bf16.msra.mxu0 %v2214
    %2458 = vmatprep.subr.bf16.mxu0 %v2219
    %2459 = vmatpush1.bf16.msra.mxu0 %v2218
    %2460 = vmatprep.subr.bf16.mxu0 %v2223
    %2461 = vmatpush1.bf16.msra.mxu0 %v2222
    %2462 = vmatprep.subr.bf16.mxu0 %v2227
    %2463 = vmatpush1.bf16.msra.mxu0 %v2226
    %2464 = vmatprep.subr.bf16.mxu0 %v2231
    %2465 = vmatpush1.bf16.msra.mxu0 %v2230
    %2466 = vmatprep.subr.bf16.mxu0 %v2235
    %2467 = vmatpush1.bf16.msra.mxu0 %v2234
    %2468 = vmatprep.subr.bf16.mxu0 %v2239
    %2469 = vmatpush1.bf16.msra.mxu0 %v2238
    %2470 = vmatprep.subr.bf16.mxu0 %v2243
    %2471 = vmatpush1.bf16.msra.mxu0 %v2242
    %2472 = vmatprep.subr.bf16.mxu0 %v2247
    %2473 = vmatpush1.bf16.msra.mxu0 %v2246
    %2474 = vmatprep.mubr.bf16.mxu0 %v1541
    %2475 = vmatmul.mubr.bf16.gmra.mrb[0].mxu0 %v1540
    %v2476 = vpop.f32.mrb[0].mxu0
    %v2477 = vadd.f32 %v1785, %v2476
    %v2478 = vpop.f32.mrb[0].mxu0
    %v2479 = vadd.f32 %v1789, %v2478
    %v2480 = vpop.f32.mrb[0].mxu0
    %v2481 = vadd.f32 %v1785, %v2480
    %v2482 = vpop.f32.mrb[0].mxu0
    %v2483 = vadd.f32 %v1789, %v2482
    %2484 = vmatprep.mubr.bf16.mxu0 %v1545
    %2485 = vmatmul.mubr.bf16.gmra.mrb[0].mxu0 %v1544
    %v2486 = vpop.f32.mrb[0].mxu0
    %v2487 = vadd.f32 %v1785, %v2486
    %v2488 = vpop.f32.mrb[0].mxu0
    %v2489 = vadd.f32 %v1789, %v2488
    %v2490 = vpop.f32.mrb[0].mxu0
    %v2491 = vadd.f32 %v1785, %v2490
    %v2492 = vpop.f32.mrb[0].mxu0
    %v2493 = vadd.f32 %v1789, %v2492
    %2494 = vmatprep.mubr.bf16.mxu0 %v1549
    %2495 = vmatmul.mubr.bf16.gmra.mrb[0].mxu0 %v1548
    %v2496 = vpop.f32.mrb[0].mxu0
    %v2497 = vadd.f32 %v1785, %v2496
    %v2498 = vpop.f32.mrb[0].mxu0
    %v2499 = vadd.f32 %v1789, %v2498
    %v2500 = vpop.f32.mrb[0].mxu0
    %v2501 = vadd.f32 %v1785, %v2500
    %v2502 = vpop.f32.mrb[0].mxu0
    %v2503 = vadd.f32 %v1789, %v2502
    %2504 = vmatprep.mubr.bf16.mxu0 %v1553
    %2505 = vmatmul.mubr.bf16.gmra.mrb[0].mxu0 %v1552
    %v2506 = vpop.f32.mrb[0].mxu0
    %v2507 = vadd.f32 %v1785, %v2506
    %v2508 = vpop.f32.mrb[0].mxu0
    %v2509 = vadd.f32 %v1789, %v2508
    %v2510 = vpop.f32.mrb[0].mxu0
    %v2511 = vadd.f32 %v1785, %v2510
    %v2512 = vpop.f32.mrb[0].mxu0
    %v2513 = vadd.f32 %v1789, %v2512
    %2514 = vmatprep.mubr.bf16.mxu0 %v1557
    %2515 = vmatmul.mubr.bf16.gmra.mrb[0].mxu0 %v1556
    %v2516 = vpop.f32.mrb[0].mxu0
    %v2517 = vadd.f32 %v1785, %v2516
    %v2518 = vpop.f32.mrb[0].mxu0
    %v2519 = vadd.f32 %v1789, %v2518
    %v2520 = vpop.f32.mrb[0].mxu0
    %v2521 = vadd.f32 %v1785, %v2520
    %v2522 = vpop.f32.mrb[0].mxu0
    %v2523 = vadd.f32 %v1789, %v2522
    %2524 = vmatprep.mubr.bf16.mxu0 %v1561
    %2525 = vmatmul.mubr.bf16.gmra.mrb[0].mxu0 %v1560
    %v2526 = vpop.f32.mrb[0].mxu0
    %v2527 = vadd.f32 %v1785, %v2526
    %v2528 = vpop.f32.mrb[0].mxu0
    %v2529 = vadd.f32 %v1789, %v2528
    %v2530 = vpop.f32.mrb[0].mxu0
    %v2531 = vadd.f32 %v1785, %v2530
    %v2532 = vpop.f32.mrb[0].mxu0
    %v2533 = vadd.f32 %v1789, %v2532
    %2534 = vmatprep.mubr.bf16.mxu0 %v1565
    %2535 = vmatmul.mubr.bf16.gmra.mrb[0].mxu0 %v1564
    %v2536 = vpop.f32.mrb[0].mxu0
    %v2537 = vadd.f32 %v1785, %v2536
    %v2538 = vpop.f32.mrb[0].mxu0
    %v2539 = vadd.f32 %v1789, %v2538
    %v2540 = vpop.f32.mrb[0].mxu0
    %v2541 = vadd.f32 %v1785, %v2540
    %v2542 = vpop.f32.mrb[0].mxu0
    %v2543 = vadd.f32 %v1789, %v2542
    %2544 = vmatprep.mubr.bf16.mxu0 %v1569
    %2545 = vmatmul.mubr.bf16.gmra.mrb[0].mxu0 %v1568
    %v2546 = vpop.f32.mrb[0].mxu0
    %v2547 = vadd.f32 %v1785, %v2546
    %v2548 = vpop.f32.mrb[0].mxu0
    %v2549 = vadd.f32 %v1789, %v2548
    %v2550 = vpop.f32.mrb[0].mxu0
    %v2551 = vadd.f32 %v1785, %v2550
    %v2552 = vpop.f32.mrb[0].mxu0
    %v2553 = vadd.f32 %v1789, %v2552
    %2554 = vmatprep.mubr.bf16.mxu0 %v1573
    %2555 = vmatmul.mubr.bf16.gmra.mrb[0].mxu0 %v1572
    %v2556 = vpop.f32.mrb[0].mxu0
    %v2557 = vadd.f32 %v1785, %v2556
    %v2558 = vpop.f32.mrb[0].mxu0
    %v2559 = vadd.f32 %v1789, %v2558
    %v2560 = vpop.f32.mrb[0].mxu0
    %v2561 = vadd.f32 %v1785, %v2560
    %v2562 = vpop.f32.mrb[0].mxu0
    %v2563 = vadd.f32 %v1789, %v2562
    %2564 = vmatprep.mubr.bf16.mxu0 %v1577
    %2565 = vmatmul.mubr.bf16.gmra.mrb[0].mxu0 %v1576
    %v2566 = vpop.f32.mrb[0].mxu0
    %v2567 = vadd.f32 %v1785, %v2566
    %v2568 = vpop.f32.mrb[0].mxu0
    %v2569 = vadd.f32 %v1789, %v2568
    %v2570 = vpop.f32.mrb[0].mxu0
    %v2571 = vadd.f32 %v1785, %v2570
    %v2572 = vpop.f32.mrb[0].mxu0
    %v2573 = vadd.f32 %v1789, %v2572
    %2574 = vmatprep.mubr.bf16.mxu0 %v1581
    %2575 = vmatmul.mubr.bf16.gmra.mrb[0].mxu0 %v1580
    %v2576 = vpop.f32.mrb[0].mxu0
    %v2577 = vadd.f32 %v1785, %v2576
    %v2578 = vpop.f32.mrb[0].mxu0
    %v2579 = vadd.f32 %v1789, %v2578
    %v2580 = vpop.f32.mrb[0].mxu0
    %v2581 = vadd.f32 %v1785, %v2580
    %v2582 = vpop.f32.mrb[0].mxu0
    %v2583 = vadd.f32 %v1789, %v2582
    %2584 = vmatprep.mubr.bf16.mxu0 %v1585
    %2585 = vmatmul.mubr.bf16.gmra.mrb[0].mxu0 %v1584
    %v2586 = vpop.f32.mrb[0].mxu0
    %v2587 = vadd.f32 %v1785, %v2586
    %v2588 = vpop.f32.mrb[0].mxu0
    %v2589 = vadd.f32 %v1789, %v2588
    %v2590 = vpop.f32.mrb[0].mxu0
    %v2591 = vadd.f32 %v1785, %v2590
    %v2592 = vpop.f32.mrb[0].mxu0
    %v2593 = vadd.f32 %v1789, %v2592
    %2594 = vmatprep.mubr.bf16.mxu0 %v1589
    %2595 = vmatmul.mubr.bf16.gmra.mrb[0].mxu0 %v1588
    %v2596 = vpop.f32.mrb[0].mxu0
    %v2597 = vadd.f32 %v1785, %v2596
    %v2598 = vpop.f32.mrb[0].mxu0
    %v2599 = vadd.f32 %v1789, %v2598
    %v2600 = vpop.f32.mrb[0].mxu0
    %v2601 = vadd.f32 %v1785, %v2600
    %v2602 = vpop.f32.mrb[0].mxu0
    %v2603 = vadd.f32 %v1789, %v2602
    %2604 = vmatprep.mubr.bf16.mxu0 %v1593
    %2605 = vmatmul.mubr.bf16.gmra.mrb[0].mxu0 %v1592
    %v2606 = vpop.f32.mrb[0].mxu0
    %v2607 = vadd.f32 %v1785, %v2606
    %v2608 = vpop.f32.mrb[0].mxu0
    %v2609 = vadd.f32 %v1789, %v2608
    %v2610 = vpop.f32.mrb[0].mxu0
    %v2611 = vadd.f32 %v1785, %v2610
    %v2612 = vpop.f32.mrb[0].mxu0
    %v2613 = vadd.f32 %v1789, %v2612
    %2614 = vmatprep.mubr.bf16.mxu0 %v1597
    %2615 = vmatmul.mubr.bf16.gmra.mrb[0].mxu0 %v1596
    %v2616 = vpop.f32.mrb[0].mxu0
    %v2617 = vadd.f32 %v1785, %v2616
    %v2618 = vpop.f32.mrb[0].mxu0
    %v2619 = vadd.f32 %v1789, %v2618
    %v2620 = vpop.f32.mrb[0].mxu0
    %v2621 = vadd.f32 %v1785, %v2620
    %v2622 = vpop.f32.mrb[0].mxu0
    %v2623 = vadd.f32 %v1789, %v2622
    %2624 = vmatprep.mubr.bf16.mxu0 %v1601
    %2625 = vmatmul.mubr.bf16.gmra.mrb[0].mxu0 %v1600
    %v2626 = vpop.f32.mrb[0].mxu0
    %v2627 = vadd.f32 %v1785, %v2626
    %v2628 = vpop.f32.mrb[0].mxu0
    %v2629 = vadd.f32 %v1789, %v2628
    %v2630 = vpop.f32.mrb[0].mxu0
    %v2631 = vadd.f32 %v1785, %v2630
    %v2632 = vpop.f32.mrb[0].mxu0
    %v2633 = vadd.f32 %v1789, %v2632
    %2634 = vmatprep.mubr.bf16.mxu0 %v1605
    %2635 = vmatmul.mubr.bf16.gmra.mrb[0].mxu0 %v1604
    %v2636 = vpop.f32.mrb[0].mxu0
    %v2637 = vadd.f32 %v1785, %v2636
    %v2638 = vpop.f32.mrb[0].mxu0
    %v2639 = vadd.f32 %v1789, %v2638
    %v2640 = vpop.f32.mrb[0].mxu0
    %v2641 = vadd.f32 %v1785, %v2640
    %v2642 = vpop.f32.mrb[0].mxu0
    %v2643 = vadd.f32 %v1789, %v2642
    %2644 = vmatprep.mubr.bf16.mxu0 %v1609
    %2645 = vmatmul.mubr.bf16.gmra.mrb[0].mxu0 %v1608
    %v2646 = vpop.f32.mrb[0].mxu0
    %v2647 = vadd.f32 %v1785, %v2646
    %v2648 = vpop.f32.mrb[0].mxu0
    %v2649 = vadd.f32 %v1789, %v2648
    %v2650 = vpop.f32.mrb[0].mxu0
    %v2651 = vadd.f32 %v1785, %v2650
    %v2652 = vpop.f32.mrb[0].mxu0
    %v2653 = vadd.f32 %v1789, %v2652
    %2654 = vmatprep.mubr.bf16.mxu0 %v1613
    %2655 = vmatmul.mubr.bf16.gmra.mrb[0].mxu0 %v1612
    %v2656 = vpop.f32.mrb[0].mxu0
    %v2657 = vadd.f32 %v1785, %v2656
    %v2658 = vpop.f32.mrb[0].mxu0
    %v2659 = vadd.f32 %v1789, %v2658
    %v2660 = vpop.f32.mrb[0].mxu0
    %v2661 = vadd.f32 %v1785, %v2660
    %v2662 = vpop.f32.mrb[0].mxu0
    %v2663 = vadd.f32 %v1789, %v2662
    %2664 = vmatprep.mubr.bf16.mxu0 %v1617
    %2665 = vmatmul.mubr.bf16.gmra.mrb[0].mxu0 %v1616
    %v2666 = vpop.f32.mrb[0].mxu0
    %v2667 = vadd.f32 %v1785, %v2666
    %v2668 = vpop.f32.mrb[0].mxu0
    %v2669 = vadd.f32 %v1789, %v2668
    %v2670 = vpop.f32.mrb[0].mxu0
    %v2671 = vadd.f32 %v1785, %v2670
    %v2672 = vpop.f32.mrb[0].mxu0
    %v2673 = vadd.f32 %v1789, %v2672
    %2674 = vmatprep.mubr.bf16.mxu0 %v1621
    %2675 = vmatmul.mubr.bf16.gmra.mrb[0].mxu0 %v1620
    %v2676 = vpop.f32.mrb[0].mxu0
    %v2677 = vadd.f32 %v1785, %v2676
    %v2678 = vpop.f32.mrb[0].mxu0
    %v2679 = vadd.f32 %v1789, %v2678
    %v2680 = vpop.f32.mrb[0].mxu0
    %v2681 = vadd.f32 %v1785, %v2680
    %v2682 = vpop.f32.mrb[0].mxu0
    %v2683 = vadd.f32 %v1789, %v2682
    %2684 = vmatprep.mubr.bf16.mxu0 %v1625
    %2685 = vmatmul.mubr.bf16.gmra.mrb[0].mxu0 %v1624
    %v2686 = vpop.f32.mrb[0].mxu0
    %v2687 = vadd.f32 %v1785, %v2686
    %v2688 = vpop.f32.mrb[0].mxu0
    %v2689 = vadd.f32 %v1789, %v2688
    %v2690 = vpop.f32.mrb[0].mxu0
    %v2691 = vadd.f32 %v1785, %v2690
    %v2692 = vpop.f32.mrb[0].mxu0
    %v2693 = vadd.f32 %v1789, %v2692
    %2694 = vmatprep.mubr.bf16.mxu0 %v1629
    %2695 = vmatmul.mubr.bf16.gmra.mrb[0].mxu0 %v1628
    %v2696 = vpop.f32.mrb[0].mxu0
    %v2697 = vadd.f32 %v1785, %v2696
    %v2698 = vpop.f32.mrb[0].mxu0
    %v2699 = vadd.f32 %v1789, %v2698
    %v2700 = vpop.f32.mrb[0].mxu0
    %v2701 = vadd.f32 %v1785, %v2700
    %v2702 = vpop.f32.mrb[0].mxu0
    %v2703 = vadd.f32 %v1789, %v2702
    %2704 = vmatprep.mubr.bf16.mxu0 %v1633
    %2705 = vmatmul.mubr.bf16.gmra.mrb[0].mxu0 %v1632
    %v2706 = vpop.f32.mrb[0].mxu0
    %v2707 = vadd.f32 %v1785, %v2706
    %v2708 = vpop.f32.mrb[0].mxu0
    %v2709 = vadd.f32 %v1789, %v2708
    %v2710 = vpop.f32.mrb[0].mxu0
    %v2711 = vadd.f32 %v1785, %v2710
    %v2712 = vpop.f32.mrb[0].mxu0
    %v2713 = vadd.f32 %v1789, %v2712
    %2714 = vmatprep.mubr.bf16.mxu0 %v1637
    %2715 = vmatmul.mubr.bf16.gmra.mrb[0].mxu0 %v1636
    %v2716 = vpop.f32.mrb[0].mxu0
    %v2717 = vadd.f32 %v1785, %v2716
    %v2718 = vpop.f32.mrb[0].mxu0
    %v2719 = vadd.f32 %v1789, %v2718
    %v2720 = vpop.f32.mrb[0].mxu0
    %v2721 = vadd.f32 %v1785, %v2720
    %v2722 = vpop.f32.mrb[0].mxu0
    %v2723 = vadd.f32 %v1789, %v2722
    %2724 = vmatprep.mubr.bf16.mxu0 %v1641
    %2725 = vmatmul.mubr.bf16.gmra.mrb[0].mxu0 %v1640
    %v2726 = vpop.f32.mrb[0].mxu0
    %v2727 = vadd.f32 %v1785, %v2726
    %v2728 = vpop.f32.mrb[0].mxu0
    %v2729 = vadd.f32 %v1789, %v2728
    %v2730 = vpop.f32.mrb[0].mxu0
    %v2731 = vadd.f32 %v1785, %v2730
    %v2732 = vpop.f32.mrb[0].mxu0
    %v2733 = vadd.f32 %v1789, %v2732
    %2734 = vmatprep.mubr.bf16.mxu0 %v1645
    %2735 = vmatmul.mubr.bf16.gmra.mrb[0].mxu0 %v1644
    %v2736 = vpop.f32.mrb[0].mxu0
    %v2737 = vadd.f32 %v1785, %v2736
    %v2738 = vpop.f32.mrb[0].mxu0
    %v2739 = vadd.f32 %v1789, %v2738
    %v2740 = vpop.f32.mrb[0].mxu0
    %v2741 = vadd.f32 %v1785, %v2740
    %v2742 = vpop.f32.mrb[0].mxu0
    %v2743 = vadd.f32 %v1789, %v2742
    %2744 = vmatprep.mubr.bf16.mxu0 %v1649
    %2745 = vmatmul.mubr.bf16.gmra.mrb[0].mxu0 %v1648
    %v2746 = vpop.f32.mrb[0].mxu0
    %v2747 = vadd.f32 %v1785, %v2746
    %v2748 = vpop.f32.mrb[0].mxu0
    %v2749 = vadd.f32 %v1789, %v2748
    %v2750 = vpop.f32.mrb[0].mxu0
    %v2751 = vadd.f32 %v1785, %v2750
    %v2752 = vpop.f32.mrb[0].mxu0
    %v2753 = vadd.f32 %v1789, %v2752
    %2754 = vdwg.mxu0
    %2755 = vmatprep.subr.bf16.mxu0 %v2251
    %2756 = vmatpush1.bf16.msra.mxu0 %v2250
    %2757 = vmatprep.subr.bf16.mxu0 %v2255
    %2758 = vmatpush1.bf16.msra.mxu0 %v2254
    %2759 = vmatprep.subr.bf16.mxu0 %v2259
    %2760 = vmatpush1.bf16.msra.mxu0 %v2258
    %2761 = vmatprep.subr.bf16.mxu0 %v2263
    %2762 = vmatpush1.bf16.msra.mxu0 %v2262
    %2763 = vmatprep.subr.bf16.mxu0 %v2267
    %2764 = vmatpush1.bf16.msra.mxu0 %v2266
    %2765 = vmatprep.subr.bf16.mxu0 %v2271
    %2766 = vmatpush1.bf16.msra.mxu0 %v2270
    %2767 = vmatprep.subr.bf16.mxu0 %v2275
    %2768 = vmatpush1.bf16.msra.mxu0 %v2274
    %2769 = vmatprep.subr.bf16.mxu0 %v2279
    %2770 = vmatpush1.bf16.msra.mxu0 %v2278
    %2771 = vmatprep.subr.bf16.mxu0 %v2283
    %2772 = vmatpush1.bf16.msra.mxu0 %v2282
    %2773 = vmatprep.subr.bf16.mxu0 %v2287
    %2774 = vmatpush1.bf16.msra.mxu0 %v2286
    %2775 = vmatprep.subr.bf16.mxu0 %v2291
    %2776 = vmatpush1.bf16.msra.mxu0 %v2290
    %2777 = vmatprep.subr.bf16.mxu0 %v2295
    %2778 = vmatpush1.bf16.msra.mxu0 %v2294
    %2779 = vmatprep.subr.bf16.mxu0 %v2299
    %2780 = vmatpush1.bf16.msra.mxu0 %v2298
    %2781 = vmatprep.subr.bf16.mxu0 %v2303
    %2782 = vmatpush1.bf16.msra.mxu0 %v2302
    %2783 = vmatprep.subr.bf16.mxu0 %v2307
    %2784 = vmatpush1.bf16.msra.mxu0 %v2306
    %2785 = vmatprep.subr.bf16.mxu0 %v2311
    %2786 = vmatpush1.bf16.msra.mxu0 %v2310
    %2787 = vmatprep.mubr.bf16.mxu0 %v1543
    %2788 = vmatmul.mubr.bf16.gmra.mrb[0].mxu0 %v1542
    %v2789 = vpop.f32.mrb[0].mxu0
    %v2790 = vadd.f32 %v2477, %v2789
    %v2791 = vpop.f32.mrb[0].mxu0
    %v2792 = vadd.f32 %v2479, %v2791
    %v2793 = vpop.f32.mrb[0].mxu0
    %v2794 = vadd.f32 %v2481, %v2793
    %v2795 = vpop.f32.mrb[0].mxu0
    %v2796 = vadd.f32 %v2483, %v2795
    %2797 = vmatprep.mubr.bf16.mxu0 %v1547
    %2798 = vmatmul.mubr.bf16.gmra.mrb[0].mxu0 %v1546
    %v2799 = vpop.f32.mrb[0].mxu0
    %v2800 = vadd.f32 %v2487, %v2799
    %v2801 = vpop.f32.mrb[0].mxu0
    %v2802 = vadd.f32 %v2489, %v2801
    %v2803 = vpop.f32.mrb[0].mxu0
    %v2804 = vadd.f32 %v2491, %v2803
    %v2805 = vpop.f32.mrb[0].mxu0
    %v2806 = vadd.f32 %v2493, %v2805
    %2807 = vmatprep.mubr.bf16.mxu0 %v1551
    %2808 = vmatmul.mubr.bf16.gmra.mrb[0].mxu0 %v1550
    %v2809 = vpop.f32.mrb[0].mxu0
    %v2810 = vadd.f32 %v2497, %v2809
    %v2811 = vpop.f32.mrb[0].mxu0
    %v2812 = vadd.f32 %v2499, %v2811
    %v2813 = vpop.f32.mrb[0].mxu0
    %v2814 = vadd.f32 %v2501, %v2813
    %v2815 = vpop.f32.mrb[0].mxu0
    %v2816 = vadd.f32 %v2503, %v2815
    %2817 = vmatprep.mubr.bf16.mxu0 %v1555
    %2818 = vmatmul.mubr.bf16.gmra.mrb[0].mxu0 %v1554
    %v2819 = vpop.f32.mrb[0].mxu0
    %v2820 = vadd.f32 %v2507, %v2819
    %v2821 = vpop.f32.mrb[0].mxu0
    %v2822 = vadd.f32 %v2509, %v2821
    %v2823 = vpop.f32.mrb[0].mxu0
    %v2824 = vadd.f32 %v2511, %v2823
    %v2825 = vpop.f32.mrb[0].mxu0
    %v2826 = vadd.f32 %v2513, %v2825
    %2827 = vmatprep.mubr.bf16.mxu0 %v1559
    %2828 = vmatmul.mubr.bf16.gmra.mrb[0].mxu0 %v1558
    %v2829 = vpop.f32.mrb[0].mxu0
    %v2830 = vadd.f32 %v2517, %v2829
    %v2831 = vpop.f32.mrb[0].mxu0
    %v2832 = vadd.f32 %v2519, %v2831
    %v2833 = vpop.f32.mrb[0].mxu0
    %v2834 = vadd.f32 %v2521, %v2833
    %v2835 = vpop.f32.mrb[0].mxu0
    %v2836 = vadd.f32 %v2523, %v2835
    %2837 = vmatprep.mubr.bf16.mxu0 %v1563
    %2838 = vmatmul.mubr.bf16.gmra.mrb[0].mxu0 %v1562
    %v2839 = vpop.f32.mrb[0].mxu0
    %v2840 = vadd.f32 %v2527, %v2839
    %v2841 = vpop.f32.mrb[0].mxu0
    %v2842 = vadd.f32 %v2529, %v2841
    %v2843 = vpop.f32.mrb[0].mxu0
    %v2844 = vadd.f32 %v2531, %v2843
    %v2845 = vpop.f32.mrb[0].mxu0
    %v2846 = vadd.f32 %v2533, %v2845
    %2847 = vmatprep.mubr.bf16.mxu0 %v1567
    %2848 = vmatmul.mubr.bf16.gmra.mrb[0].mxu0 %v1566
    %v2849 = vpop.f32.mrb[0].mxu0
    %v2850 = vadd.f32 %v2537, %v2849
    %v2851 = vpop.f32.mrb[0].mxu0
    %v2852 = vadd.f32 %v2539, %v2851
    %v2853 = vpop.f32.mrb[0].mxu0
    %v2854 = vadd.f32 %v2541, %v2853
    %v2855 = vpop.f32.mrb[0].mxu0
    %v2856 = vadd.f32 %v2543, %v2855
    %2857 = vmatprep.mubr.bf16.mxu0 %v1571
    %2858 = vmatmul.mubr.bf16.gmra.mrb[0].mxu0 %v1570
    %v2859 = vpop.f32.mrb[0].mxu0
    %v2860 = vadd.f32 %v2547, %v2859
    %v2861 = vpop.f32.mrb[0].mxu0
    %v2862 = vadd.f32 %v2549, %v2861
    %v2863 = vpop.f32.mrb[0].mxu0
    %v2864 = vadd.f32 %v2551, %v2863
    %v2865 = vpop.f32.mrb[0].mxu0
    %v2866 = vadd.f32 %v2553, %v2865
    %2867 = vmatprep.mubr.bf16.mxu0 %v1575
    %2868 = vmatmul.mubr.bf16.gmra.mrb[0].mxu0 %v1574
    %v2869 = vpop.f32.mrb[0].mxu0
    %v2870 = vadd.f32 %v2557, %v2869
    %v2871 = vpop.f32.mrb[0].mxu0
    %v2872 = vadd.f32 %v2559, %v2871
    %v2873 = vpop.f32.mrb[0].mxu0
    %v2874 = vadd.f32 %v2561, %v2873
    %v2875 = vpop.f32.mrb[0].mxu0
    %v2876 = vadd.f32 %v2563, %v2875
    %2877 = vmatprep.mubr.bf16.mxu0 %v1579
    %2878 = vmatmul.mubr.bf16.gmra.mrb[0].mxu0 %v1578
    %v2879 = vpop.f32.mrb[0].mxu0
    %v2880 = vadd.f32 %v2567, %v2879
    %v2881 = vpop.f32.mrb[0].mxu0
    %v2882 = vadd.f32 %v2569, %v2881
    %v2883 = vpop.f32.mrb[0].mxu0
    %v2884 = vadd.f32 %v2571, %v2883
    %v2885 = vpop.f32.mrb[0].mxu0
    %v2886 = vadd.f32 %v2573, %v2885
    %2887 = vmatprep.mubr.bf16.mxu0 %v1583
    %2888 = vmatmul.mubr.bf16.gmra.mrb[0].mxu0 %v1582
    %v2889 = vpop.f32.mrb[0].mxu0
    %v2890 = vadd.f32 %v2577, %v2889
    %v2891 = vpop.f32.mrb[0].mxu0
    %v2892 = vadd.f32 %v2579, %v2891
    %v2893 = vpop.f32.mrb[0].mxu0
    %v2894 = vadd.f32 %v2581, %v2893
    %v2895 = vpop.f32.mrb[0].mxu0
    %v2896 = vadd.f32 %v2583, %v2895
    %2897 = vmatprep.mubr.bf16.mxu0 %v1587
    %2898 = vmatmul.mubr.bf16.gmra.mrb[0].mxu0 %v1586
    %v2899 = vpop.f32.mrb[0].mxu0
    %v2900 = vadd.f32 %v2587, %v2899
    %v2901 = vpop.f32.mrb[0].mxu0
    %v2902 = vadd.f32 %v2589, %v2901
    %v2903 = vpop.f32.mrb[0].mxu0
    %v2904 = vadd.f32 %v2591, %v2903
    %v2905 = vpop.f32.mrb[0].mxu0
    %v2906 = vadd.f32 %v2593, %v2905
    %2907 = vmatprep.mubr.bf16.mxu0 %v1591
    %2908 = vmatmul.mubr.bf16.gmra.mrb[0].mxu0 %v1590
    %v2909 = vpop.f32.mrb[0].mxu0
    %v2910 = vadd.f32 %v2597, %v2909
    %v2911 = vpop.f32.mrb[0].mxu0
    %v2912 = vadd.f32 %v2599, %v2911
    %v2913 = vpop.f32.mrb[0].mxu0
    %v2914 = vadd.f32 %v2601, %v2913
    %v2915 = vpop.f32.mrb[0].mxu0
    %v2916 = vadd.f32 %v2603, %v2915
    %2917 = vmatprep.mubr.bf16.mxu0 %v1595
    %2918 = vmatmul.mubr.bf16.gmra.mrb[0].mxu0 %v1594
    %v2919 = vpop.f32.mrb[0].mxu0
    %v2920 = vadd.f32 %v2607, %v2919
    %v2921 = vpop.f32.mrb[0].mxu0
    %v2922 = vadd.f32 %v2609, %v2921
    %v2923 = vpop.f32.mrb[0].mxu0
    %v2924 = vadd.f32 %v2611, %v2923
    %v2925 = vpop.f32.mrb[0].mxu0
    %v2926 = vadd.f32 %v2613, %v2925
    %2927 = vmatprep.mubr.bf16.mxu0 %v1599
    %2928 = vmatmul.mubr.bf16.gmra.mrb[0].mxu0 %v1598
    %v2929 = vpop.f32.mrb[0].mxu0
    %v2930 = vadd.f32 %v2617, %v2929
    %v2931 = vpop.f32.mrb[0].mxu0
    %v2932 = vadd.f32 %v2619, %v2931
    %v2933 = vpop.f32.mrb[0].mxu0
    %v2934 = vadd.f32 %v2621, %v2933
    %v2935 = vpop.f32.mrb[0].mxu0
    %v2936 = vadd.f32 %v2623, %v2935
    %2937 = vmatprep.mubr.bf16.mxu0 %v1603
    %2938 = vmatmul.mubr.bf16.gmra.mrb[0].mxu0 %v1602
    %v2939 = vpop.f32.mrb[0].mxu0
    %v2940 = vadd.f32 %v2627, %v2939
    %v2941 = vpop.f32.mrb[0].mxu0
    %v2942 = vadd.f32 %v2629, %v2941
    %v2943 = vpop.f32.mrb[0].mxu0
    %v2944 = vadd.f32 %v2631, %v2943
    %v2945 = vpop.f32.mrb[0].mxu0
    %v2946 = vadd.f32 %v2633, %v2945
    %2947 = vmatprep.mubr.bf16.mxu0 %v1607
    %2948 = vmatmul.mubr.bf16.gmra.mrb[0].mxu0 %v1606
    %v2949 = vpop.f32.mrb[0].mxu0
    %v2950 = vadd.f32 %v2637, %v2949
    %v2951 = vpop.f32.mrb[0].mxu0
    %v2952 = vadd.f32 %v2639, %v2951
    %v2953 = vpop.f32.mrb[0].mxu0
    %v2954 = vadd.f32 %v2641, %v2953
    %v2955 = vpop.f32.mrb[0].mxu0
    %v2956 = vadd.f32 %v2643, %v2955
    %2957 = vmatprep.mubr.bf16.mxu0 %v1611
    %2958 = vmatmul.mubr.bf16.gmra.mrb[0].mxu0 %v1610
    %v2959 = vpop.f32.mrb[0].mxu0
    %v2960 = vadd.f32 %v2647, %v2959
    %v2961 = vpop.f32.mrb[0].mxu0
    %v2962 = vadd.f32 %v2649, %v2961
    %v2963 = vpop.f32.mrb[0].mxu0
    %v2964 = vadd.f32 %v2651, %v2963
    %v2965 = vpop.f32.mrb[0].mxu0
    %v2966 = vadd.f32 %v2653, %v2965
    %2967 = vmatprep.mubr.bf16.mxu0 %v1615
    %2968 = vmatmul.mubr.bf16.gmra.mrb[0].mxu0 %v1614
    %v2969 = vpop.f32.mrb[0].mxu0
    %v2970 = vadd.f32 %v2657, %v2969
    %v2971 = vpop.f32.mrb[0].mxu0
    %v2972 = vadd.f32 %v2659, %v2971
    %v2973 = vpop.f32.mrb[0].mxu0
    %v2974 = vadd.f32 %v2661, %v2973
    %v2975 = vpop.f32.mrb[0].mxu0
    %v2976 = vadd.f32 %v2663, %v2975
    %2977 = vmatprep.mubr.bf16.mxu0 %v1619
    %2978 = vmatmul.mubr.bf16.gmra.mrb[0].mxu0 %v1618
    %v2979 = vpop.f32.mrb[0].mxu0
    %v2980 = vadd.f32 %v2667, %v2979
    %v2981 = vpop.f32.mrb[0].mxu0
    %v2982 = vadd.f32 %v2669, %v2981
    %v2983 = vpop.f32.mrb[0].mxu0
    %v2984 = vadd.f32 %v2671, %v2983
    %v2985 = vpop.f32.mrb[0].mxu0
    %v2986 = vadd.f32 %v2673, %v2985
    %2987 = vmatprep.mubr.bf16.mxu0 %v1623
    %2988 = vmatmul.mubr.bf16.gmra.mrb[0].mxu0 %v1622
    %v2989 = vpop.f32.mrb[0].mxu0
    %v2990 = vadd.f32 %v2677, %v2989
    %v2991 = vpop.f32.mrb[0].mxu0
    %v2992 = vadd.f32 %v2679, %v2991
    %v2993 = vpop.f32.mrb[0].mxu0
    %v2994 = vadd.f32 %v2681, %v2993
    %v2995 = vpop.f32.mrb[0].mxu0
    %v2996 = vadd.f32 %v2683, %v2995
    %2997 = vmatprep.mubr.bf16.mxu0 %v1627
    %2998 = vmatmul.mubr.bf16.gmra.mrb[0].mxu0 %v1626
    %v2999 = vpop.f32.mrb[0].mxu0
    %v3000 = vadd.f32 %v2687, %v2999
    %v3001 = vpop.f32.mrb[0].mxu0
    %v3002 = vadd.f32 %v2689, %v3001
    %v3003 = vpop.f32.mrb[0].mxu0
    %v3004 = vadd.f32 %v2691, %v3003
    %v3005 = vpop.f32.mrb[0].mxu0
    %v3006 = vadd.f32 %v2693, %v3005
    %3007 = vmatprep.mubr.bf16.mxu0 %v1631
    %3008 = vmatmul.mubr.bf16.gmra.mrb[0].mxu0 %v1630
    %v3009 = vpop.f32.mrb[0].mxu0
    %v3010 = vadd.f32 %v2697, %v3009
    %v3011 = vpop.f32.mrb[0].mxu0
    %v3012 = vadd.f32 %v2699, %v3011
    %v3013 = vpop.f32.mrb[0].mxu0
    %v3014 = vadd.f32 %v2701, %v3013
    %v3015 = vpop.f32.mrb[0].mxu0
    %v3016 = vadd.f32 %v2703, %v3015
    %3017 = vmatprep.mubr.bf16.mxu0 %v1635
    %3018 = vmatmul.mubr.bf16.gmra.mrb[0].mxu0 %v1634
    %v3019 = vpop.f32.mrb[0].mxu0
    %v3020 = vadd.f32 %v2707, %v3019
    %v3021 = vpop.f32.mrb[0].mxu0
    %v3022 = vadd.f32 %v2709, %v3021
    %v3023 = vpop.f32.mrb[0].mxu0
    %v3024 = vadd.f32 %v2711, %v3023
    %v3025 = vpop.f32.mrb[0].mxu0
    %v3026 = vadd.f32 %v2713, %v3025
    %3027 = vmatprep.mubr.bf16.mxu0 %v1639
    %3028 = vmatmul.mubr.bf16.gmra.mrb[0].mxu0 %v1638
    %v3029 = vpop.f32.mrb[0].mxu0
    %v3030 = vadd.f32 %v2717, %v3029
    %v3031 = vpop.f32.mrb[0].mxu0
    %v3032 = vadd.f32 %v2719, %v3031
    %v3033 = vpop.f32.mrb[0].mxu0
    %v3034 = vadd.f32 %v2721, %v3033
    %v3035 = vpop.f32.mrb[0].mxu0
    %v3036 = vadd.f32 %v2723, %v3035
    %3037 = vmatprep.mubr.bf16.mxu0 %v1643
    %3038 = vmatmul.mubr.bf16.gmra.mrb[0].mxu0 %v1642
    %v3039 = vpop.f32.mrb[0].mxu0
    %v3040 = vadd.f32 %v2727, %v3039
    %v3041 = vpop.f32.mrb[0].mxu0
    %v3042 = vadd.f32 %v2729, %v3041
    %v3043 = vpop.f32.mrb[0].mxu0
    %v3044 = vadd.f32 %v2731, %v3043
    %v3045 = vpop.f32.mrb[0].mxu0
    %v3046 = vadd.f32 %v2733, %v3045
    %3047 = vmatprep.mubr.bf16.mxu0 %v1647
    %3048 = vmatmul.mubr.bf16.gmra.mrb[0].mxu0 %v1646
    %v3049 = vpop.f32.mrb[0].mxu0
    %v3050 = vadd.f32 %v2737, %v3049
    %v3051 = vpop.f32.mrb[0].mxu0
    %v3052 = vadd.f32 %v2739, %v3051
    %v3053 = vpop.f32.mrb[0].mxu0
    %v3054 = vadd.f32 %v2741, %v3053
    %v3055 = vpop.f32.mrb[0].mxu0
    %v3056 = vadd.f32 %v2743, %v3055
    %3057 = vmatprep.mubr.bf16.mxu0 %v1651
    %3058 = vmatmul.mubr.bf16.gmra.mrb[0].mxu0 %v1650
    %v3059 = vpop.f32.mrb[0].mxu0
    %v3060 = vadd.f32 %v2747, %v3059
    %v3061 = vpop.f32.mrb[0].mxu0
    %v3062 = vadd.f32 %v2749, %v3061
    %v3063 = vpop.f32.mrb[0].mxu0
    %v3064 = vadd.f32 %v2751, %v3063
    %v3065 = vpop.f32.mrb[0].mxu0
    %v3066 = vadd.f32 %v2753, %v3065
    %3067 = vdwg.mxu0
    %3068 = vmatprep.subr.bf16.mxu0 %v2189
    %3069 = vmatpush1.bf16.msra.mxu0 %v2188
    %3070 = vmatprep.subr.bf16.mxu0 %v2193
    %3071 = vmatpush1.bf16.msra.mxu0 %v2192
    %3072 = vmatprep.subr.bf16.mxu0 %v2197
    %3073 = vmatpush1.bf16.msra.mxu0 %v2196
    %3074 = vmatprep.subr.bf16.mxu0 %v2201
    %3075 = vmatpush1.bf16.msra.mxu0 %v2200
    %3076 = vmatprep.subr.bf16.mxu0 %v2205
    %3077 = vmatpush1.bf16.msra.mxu0 %v2204
    %3078 = vmatprep.subr.bf16.mxu0 %v2209
    %3079 = vmatpush1.bf16.msra.mxu0 %v2208
    %3080 = vmatprep.subr.bf16.mxu0 %v2213
    %3081 = vmatpush1.bf16.msra.mxu0 %v2212
    %3082 = vmatprep.subr.bf16.mxu0 %v2217
    %3083 = vmatpush1.bf16.msra.mxu0 %v2216
    %3084 = vmatprep.subr.bf16.mxu0 %v2221
    %3085 = vmatpush1.bf16.msra.mxu0 %v2220
    %3086 = vmatprep.subr.bf16.mxu0 %v2225
    %3087 = vmatpush1.bf16.msra.mxu0 %v2224
    %3088 = vmatprep.subr.bf16.mxu0 %v2229
    %3089 = vmatpush1.bf16.msra.mxu0 %v2228
    %3090 = vmatprep.subr.bf16.mxu0 %v2233
    %3091 = vmatpush1.bf16.msra.mxu0 %v2232
    %3092 = vmatprep.subr.bf16.mxu0 %v2237
    %3093 = vmatpush1.bf16.msra.mxu0 %v2236
    %3094 = vmatprep.subr.bf16.mxu0 %v2241
    %3095 = vmatpush1.bf16.msra.mxu0 %v2240
    %3096 = vmatprep.subr.bf16.mxu0 %v2245
    %3097 = vmatpush1.bf16.msra.mxu0 %v2244
    %3098 = vmatprep.subr.bf16.mxu0 %v2249
    %3099 = vmatpush1.bf16.msra.mxu0 %v2248
    %3100 = vmatprep.mubr.bf16.mxu0 %v1541
    %3101 = vmatmul.mubr.bf16.gmra.mrb[0].mxu0 %v1540
    %v3102 = vpop.f32.mrb[0].mxu0
    %v3103 = vadd.f32 %v1793, %v3102
    %v3104 = vpop.f32.mrb[0].mxu0
    %v3105 = vadd.f32 %v1797, %v3104
    %v3106 = vpop.f32.mrb[0].mxu0
    %v3107 = vadd.f32 %v1793, %v3106
    %v3108 = vpop.f32.mrb[0].mxu0
    %v3109 = vadd.f32 %v1797, %v3108
    %3110 = vmatprep.mubr.bf16.mxu0 %v1545
    %3111 = vmatmul.mubr.bf16.gmra.mrb[0].mxu0 %v1544
    %v3112 = vpop.f32.mrb[0].mxu0
    %v3113 = vadd.f32 %v1793, %v3112
    %v3114 = vpop.f32.mrb[0].mxu0
    %v3115 = vadd.f32 %v1797, %v3114
    %v3116 = vpop.f32.mrb[0].mxu0
    %v3117 = vadd.f32 %v1793, %v3116
    %v3118 = vpop.f32.mrb[0].mxu0
    %v3119 = vadd.f32 %v1797, %v3118
    %3120 = vmatprep.mubr.bf16.mxu0 %v1549
    %3121 = vmatmul.mubr.bf16.gmra.mrb[0].mxu0 %v1548
    %v3122 = vpop.f32.mrb[0].mxu0
    %v3123 = vadd.f32 %v1793, %v3122
    %v3124 = vpop.f32.mrb[0].mxu0
    %v3125 = vadd.f32 %v1797, %v3124
    %v3126 = vpop.f32.mrb[0].mxu0
    %v3127 = vadd.f32 %v1793, %v3126
    %v3128 = vpop.f32.mrb[0].mxu0
    %v3129 = vadd.f32 %v1797, %v3128
    %3130 = vmatprep.mubr.bf16.mxu0 %v1553
    %3131 = vmatmul.mubr.bf16.gmra.mrb[0].mxu0 %v1552
    %v3132 = vpop.f32.mrb[0].mxu0
    %v3133 = vadd.f32 %v1793, %v3132
    %v3134 = vpop.f32.mrb[0].mxu0
    %v3135 = vadd.f32 %v1797, %v3134
    %v3136 = vpop.f32.mrb[0].mxu0
    %v3137 = vadd.f32 %v1793, %v3136
    %v3138 = vpop.f32.mrb[0].mxu0
    %v3139 = vadd.f32 %v1797, %v3138
    %3140 = vmatprep.mubr.bf16.mxu0 %v1557
    %3141 = vmatmul.mubr.bf16.gmra.mrb[0].mxu0 %v1556
    %v3142 = vpop.f32.mrb[0].mxu0
    %v3143 = vadd.f32 %v1793, %v3142
    %v3144 = vpop.f32.mrb[0].mxu0
    %v3145 = vadd.f32 %v1797, %v3144
    %v3146 = vpop.f32.mrb[0].mxu0
    %v3147 = vadd.f32 %v1793, %v3146
    %v3148 = vpop.f32.mrb[0].mxu0
    %v3149 = vadd.f32 %v1797, %v3148
    %3150 = vmatprep.mubr.bf16.mxu0 %v1561
    %3151 = vmatmul.mubr.bf16.gmra.mrb[0].mxu0 %v1560
    %v3152 = vpop.f32.mrb[0].mxu0
    %v3153 = vadd.f32 %v1793, %v3152
    %v3154 = vpop.f32.mrb[0].mxu0
    %v3155 = vadd.f32 %v1797, %v3154
    %v3156 = vpop.f32.mrb[0].mxu0
    %v3157 = vadd.f32 %v1793, %v3156
    %v3158 = vpop.f32.mrb[0].mxu0
    %v3159 = vadd.f32 %v1797, %v3158
    %3160 = vmatprep.mubr.bf16.mxu0 %v1565
    %3161 = vmatmul.mubr.bf16.gmra.mrb[0].mxu0 %v1564
    %v3162 = vpop.f32.mrb[0].mxu0
    %v3163 = vadd.f32 %v1793, %v3162
    %v3164 = vpop.f32.mrb[0].mxu0
    %v3165 = vadd.f32 %v1797, %v3164
    %v3166 = vpop.f32.mrb[0].mxu0
    %v3167 = vadd.f32 %v1793, %v3166
    %v3168 = vpop.f32.mrb[0].mxu0
    %v3169 = vadd.f32 %v1797, %v3168
    %3170 = vmatprep.mubr.bf16.mxu0 %v1569
    %3171 = vmatmul.mubr.bf16.gmra.mrb[0].mxu0 %v1568
    %v3172 = vpop.f32.mrb[0].mxu0
    %v3173 = vadd.f32 %v1793, %v3172
    %v3174 = vpop.f32.mrb[0].mxu0
    %v3175 = vadd.f32 %v1797, %v3174
    %v3176 = vpop.f32.mrb[0].mxu0
    %v3177 = vadd.f32 %v1793, %v3176
    %v3178 = vpop.f32.mrb[0].mxu0
    %v3179 = vadd.f32 %v1797, %v3178
    %3180 = vmatprep.mubr.bf16.mxu0 %v1573
    %3181 = vmatmul.mubr.bf16.gmra.mrb[0].mxu0 %v1572
    %v3182 = vpop.f32.mrb[0].mxu0
    %v3183 = vadd.f32 %v1793, %v3182
    %v3184 = vpop.f32.mrb[0].mxu0
    %v3185 = vadd.f32 %v1797, %v3184
    %v3186 = vpop.f32.mrb[0].mxu0
    %v3187 = vadd.f32 %v1793, %v3186
    %v3188 = vpop.f32.mrb[0].mxu0
    %v3189 = vadd.f32 %v1797, %v3188
    %3190 = vmatprep.mubr.bf16.mxu0 %v1577
    %3191 = vmatmul.mubr.bf16.gmra.mrb[0].mxu0 %v1576
    %v3192 = vpop.f32.mrb[0].mxu0
    %v3193 = vadd.f32 %v1793, %v3192
    %v3194 = vpop.f32.mrb[0].mxu0
    %v3195 = vadd.f32 %v1797, %v3194
    %v3196 = vpop.f32.mrb[0].mxu0
    %v3197 = vadd.f32 %v1793, %v3196
    %v3198 = vpop.f32.mrb[0].mxu0
    %v3199 = vadd.f32 %v1797, %v3198
    %3200 = vmatprep.mubr.bf16.mxu0 %v1581
    %3201 = vmatmul.mubr.bf16.gmra.mrb[0].mxu0 %v1580
    %v3202 = vpop.f32.mrb[0].mxu0
    %v3203 = vadd.f32 %v1793, %v3202
    %v3204 = vpop.f32.mrb[0].mxu0
    %v3205 = vadd.f32 %v1797, %v3204
    %v3206 = vpop.f32.mrb[0].mxu0
    %v3207 = vadd.f32 %v1793, %v3206
    %v3208 = vpop.f32.mrb[0].mxu0
    %v3209 = vadd.f32 %v1797, %v3208
    %3210 = vmatprep.mubr.bf16.mxu0 %v1585
    %3211 = vmatmul.mubr.bf16.gmra.mrb[0].mxu0 %v1584
    %v3212 = vpop.f32.mrb[0].mxu0
    %v3213 = vadd.f32 %v1793, %v3212
    %v3214 = vpop.f32.mrb[0].mxu0
    %v3215 = vadd.f32 %v1797, %v3214
    %v3216 = vpop.f32.mrb[0].mxu0
    %v3217 = vadd.f32 %v1793, %v3216
    %v3218 = vpop.f32.mrb[0].mxu0
    %v3219 = vadd.f32 %v1797, %v3218
    %3220 = vmatprep.mubr.bf16.mxu0 %v1589
    %3221 = vmatmul.mubr.bf16.gmra.mrb[0].mxu0 %v1588
    %v3222 = vpop.f32.mrb[0].mxu0
    %v3223 = vadd.f32 %v1793, %v3222
    %v3224 = vpop.f32.mrb[0].mxu0
    %v3225 = vadd.f32 %v1797, %v3224
    %v3226 = vpop.f32.mrb[0].mxu0
    %v3227 = vadd.f32 %v1793, %v3226
    %v3228 = vpop.f32.mrb[0].mxu0
    %v3229 = vadd.f32 %v1797, %v3228
    %3230 = vmatprep.mubr.bf16.mxu0 %v1593
    %3231 = vmatmul.mubr.bf16.gmra.mrb[0].mxu0 %v1592
    %v3232 = vpop.f32.mrb[0].mxu0
    %v3233 = vadd.f32 %v1793, %v3232
    %v3234 = vpop.f32.mrb[0].mxu0
    %v3235 = vadd.f32 %v1797, %v3234
    %v3236 = vpop.f32.mrb[0].mxu0
    %v3237 = vadd.f32 %v1793, %v3236
    %v3238 = vpop.f32.mrb[0].mxu0
    %v3239 = vadd.f32 %v1797, %v3238
    %3240 = vmatprep.mubr.bf16.mxu0 %v1597
    %3241 = vmatmul.mubr.bf16.gmra.mrb[0].mxu0 %v1596
    %v3242 = vpop.f32.mrb[0].mxu0
    %v3243 = vadd.f32 %v1793, %v3242
    %v3244 = vpop.f32.mrb[0].mxu0
    %v3245 = vadd.f32 %v1797, %v3244
    %v3246 = vpop.f32.mrb[0].mxu0
    %v3247 = vadd.f32 %v1793, %v3246
    %v3248 = vpop.f32.mrb[0].mxu0
    %v3249 = vadd.f32 %v1797, %v3248
    %3250 = vmatprep.mubr.bf16.mxu0 %v1601
    %3251 = vmatmul.mubr.bf16.gmra.mrb[0].mxu0 %v1600
    %v3252 = vpop.f32.mrb[0].mxu0
    %v3253 = vadd.f32 %v1793, %v3252
    %v3254 = vpop.f32.mrb[0].mxu0
    %v3255 = vadd.f32 %v1797, %v3254
    %v3256 = vpop.f32.mrb[0].mxu0
    %v3257 = vadd.f32 %v1793, %v3256
    %v3258 = vpop.f32.mrb[0].mxu0
    %v3259 = vadd.f32 %v1797, %v3258
    %3260 = vmatprep.mubr.bf16.mxu0 %v1605
    %3261 = vmatmul.mubr.bf16.gmra.mrb[0].mxu0 %v1604
    %v3262 = vpop.f32.mrb[0].mxu0
    %v3263 = vadd.f32 %v1793, %v3262
    %v3264 = vpop.f32.mrb[0].mxu0
    %v3265 = vadd.f32 %v1797, %v3264
    %v3266 = vpop.f32.mrb[0].mxu0
    %v3267 = vadd.f32 %v1793, %v3266
    %v3268 = vpop.f32.mrb[0].mxu0
    %v3269 = vadd.f32 %v1797, %v3268
    %3270 = vmatprep.mubr.bf16.mxu0 %v1609
    %3271 = vmatmul.mubr.bf16.gmra.mrb[0].mxu0 %v1608
    %v3272 = vpop.f32.mrb[0].mxu0
    %v3273 = vadd.f32 %v1793, %v3272
    %v3274 = vpop.f32.mrb[0].mxu0
    %v3275 = vadd.f32 %v1797, %v3274
    %v3276 = vpop.f32.mrb[0].mxu0
    %v3277 = vadd.f32 %v1793, %v3276
    %v3278 = vpop.f32.mrb[0].mxu0
    %v3279 = vadd.f32 %v1797, %v3278
    %3280 = vmatprep.mubr.bf16.mxu0 %v1613
    %3281 = vmatmul.mubr.bf16.gmra.mrb[0].mxu0 %v1612
    %v3282 = vpop.f32.mrb[0].mxu0
    %v3283 = vadd.f32 %v1793, %v3282
    %v3284 = vpop.f32.mrb[0].mxu0
    %v3285 = vadd.f32 %v1797, %v3284
    %v3286 = vpop.f32.mrb[0].mxu0
    %v3287 = vadd.f32 %v1793, %v3286
    %v3288 = vpop.f32.mrb[0].mxu0
    %v3289 = vadd.f32 %v1797, %v3288
    %3290 = vmatprep.mubr.bf16.mxu0 %v1617
    %3291 = vmatmul.mubr.bf16.gmra.mrb[0].mxu0 %v1616
    %v3292 = vpop.f32.mrb[0].mxu0
    %v3293 = vadd.f32 %v1793, %v3292
    %v3294 = vpop.f32.mrb[0].mxu0
    %v3295 = vadd.f32 %v1797, %v3294
    %v3296 = vpop.f32.mrb[0].mxu0
    %v3297 = vadd.f32 %v1793, %v3296
    %v3298 = vpop.f32.mrb[0].mxu0
    %v3299 = vadd.f32 %v1797, %v3298
    %3300 = vmatprep.mubr.bf16.mxu0 %v1621
    %3301 = vmatmul.mubr.bf16.gmra.mrb[0].mxu0 %v1620
    %v3302 = vpop.f32.mrb[0].mxu0
    %v3303 = vadd.f32 %v1793, %v3302
    %v3304 = vpop.f32.mrb[0].mxu0
    %v3305 = vadd.f32 %v1797, %v3304
    %v3306 = vpop.f32.mrb[0].mxu0
    %v3307 = vadd.f32 %v1793, %v3306
    %v3308 = vpop.f32.mrb[0].mxu0
    %v3309 = vadd.f32 %v1797, %v3308
    %3310 = vmatprep.mubr.bf16.mxu0 %v1625
    %3311 = vmatmul.mubr.bf16.gmra.mrb[0].mxu0 %v1624
    %v3312 = vpop.f32.mrb[0].mxu0
    %v3313 = vadd.f32 %v1793, %v3312
    %v3314 = vpop.f32.mrb[0].mxu0
    %v3315 = vadd.f32 %v1797, %v3314
    %v3316 = vpop.f32.mrb[0].mxu0
    %v3317 = vadd.f32 %v1793, %v3316
    %v3318 = vpop.f32.mrb[0].mxu0
    %v3319 = vadd.f32 %v1797, %v3318
    %3320 = vmatprep.mubr.bf16.mxu0 %v1629
    %3321 = vmatmul.mubr.bf16.gmra.mrb[0].mxu0 %v1628
    %v3322 = vpop.f32.mrb[0].mxu0
    %v3323 = vadd.f32 %v1793, %v3322
    %v3324 = vpop.f32.mrb[0].mxu0
    %v3325 = vadd.f32 %v1797, %v3324
    %v3326 = vpop.f32.mrb[0].mxu0
    %v3327 = vadd.f32 %v1793, %v3326
    %v3328 = vpop.f32.mrb[0].mxu0
    %v3329 = vadd.f32 %v1797, %v3328
    %3330 = vmatprep.mubr.bf16.mxu0 %v1633
    %3331 = vmatmul.mubr.bf16.gmra.mrb[0].mxu0 %v1632
    %v3332 = vpop.f32.mrb[0].mxu0
    %v3333 = vadd.f32 %v1793, %v3332
    %v3334 = vpop.f32.mrb[0].mxu0
    %v3335 = vadd.f32 %v1797, %v3334
    %v3336 = vpop.f32.mrb[0].mxu0
    %v3337 = vadd.f32 %v1793, %v3336
    %v3338 = vpop.f32.mrb[0].mxu0
    %v3339 = vadd.f32 %v1797, %v3338
    %3340 = vmatprep.mubr.bf16.mxu0 %v1637
    %3341 = vmatmul.mubr.bf16.gmra.mrb[0].mxu0 %v1636
    %v3342 = vpop.f32.mrb[0].mxu0
    %v3343 = vadd.f32 %v1793, %v3342
    %v3344 = vpop.f32.mrb[0].mxu0
    %v3345 = vadd.f32 %v1797, %v3344
    %v3346 = vpop.f32.mrb[0].mxu0
    %v3347 = vadd.f32 %v1793, %v3346
    %v3348 = vpop.f32.mrb[0].mxu0
    %v3349 = vadd.f32 %v1797, %v3348
    %3350 = vmatprep.mubr.bf16.mxu0 %v1641
    %3351 = vmatmul.mubr.bf16.gmra.mrb[0].mxu0 %v1640
    %v3352 = vpop.f32.mrb[0].mxu0
    %v3353 = vadd.f32 %v1793, %v3352
    %v3354 = vpop.f32.mrb[0].mxu0
    %v3355 = vadd.f32 %v1797, %v3354
    %v3356 = vpop.f32.mrb[0].mxu0
    %v3357 = vadd.f32 %v1793, %v3356
    %v3358 = vpop.f32.mrb[0].mxu0
    %v3359 = vadd.f32 %v1797, %v3358
    %3360 = vmatprep.mubr.bf16.mxu0 %v1645
    %3361 = vmatmul.mubr.bf16.gmra.mrb[0].mxu0 %v1644
    %v3362 = vpop.f32.mrb[0].mxu0
    %v3363 = vadd.f32 %v1793, %v3362
    %v3364 = vpop.f32.mrb[0].mxu0
    %v3365 = vadd.f32 %v1797, %v3364
    %v3366 = vpop.f32.mrb[0].mxu0
    %v3367 = vadd.f32 %v1793, %v3366
    %v3368 = vpop.f32.mrb[0].mxu0
    %v3369 = vadd.f32 %v1797, %v3368
    %3370 = vmatprep.mubr.bf16.mxu0 %v1649
    %3371 = vmatmul.mubr.bf16.gmra.mrb[0].mxu0 %v1648
    %v3372 = vpop.f32.mrb[0].mxu0
    %v3373 = vadd.f32 %v1793, %v3372
    %v3374 = vpop.f32.mrb[0].mxu0
    %v3375 = vadd.f32 %v1797, %v3374
    %v3376 = vpop.f32.mrb[0].mxu0
    %v3377 = vadd.f32 %v1793, %v3376
    %v3378 = vpop.f32.mrb[0].mxu0
    %v3379 = vadd.f32 %v1797, %v3378
    %3380 = vdwg.mxu0
    %3381 = vmatprep.subr.bf16.mxu0 %v2253
    %3382 = vmatpush1.bf16.msra.mxu0 %v2252
    %3383 = vmatprep.subr.bf16.mxu0 %v2257
    %3384 = vmatpush1.bf16.msra.mxu0 %v2256
    %3385 = vmatprep.subr.bf16.mxu0 %v2261
    %3386 = vmatpush1.bf16.msra.mxu0 %v2260
    %3387 = vmatprep.subr.bf16.mxu0 %v2265
    %3388 = vmatpush1.bf16.msra.mxu0 %v2264
    %3389 = vmatprep.subr.bf16.mxu0 %v2269
    %3390 = vmatpush1.bf16.msra.mxu0 %v2268
    %3391 = vmatprep.subr.bf16.mxu0 %v2273
    %3392 = vmatpush1.bf16.msra.mxu0 %v2272
    %3393 = vmatprep.subr.bf16.mxu0 %v2277
    %3394 = vmatpush1.bf16.msra.mxu0 %v2276
    %3395 = vmatprep.subr.bf16.mxu0 %v2281
    %3396 = vmatpush1.bf16.msra.mxu0 %v2280
    %3397 = vmatprep.subr.bf16.mxu0 %v2285
    %3398 = vmatpush1.bf16.msra.mxu0 %v2284
    %3399 = vmatprep.subr.bf16.mxu0 %v2289
    %3400 = vmatpush1.bf16.msra.mxu0 %v2288
    %3401 = vmatprep.subr.bf16.mxu0 %v2293
    %3402 = vmatpush1.bf16.msra.mxu0 %v2292
    %3403 = vmatprep.subr.bf16.mxu0 %v2297
    %3404 = vmatpush1.bf16.msra.mxu0 %v2296
    %3405 = vmatprep.subr.bf16.mxu0 %v2301
    %3406 = vmatpush1.bf16.msra.mxu0 %v2300
    %3407 = vmatprep.subr.bf16.mxu0 %v2305
    %3408 = vmatpush1.bf16.msra.mxu0 %v2304
    %3409 = vmatprep.subr.bf16.mxu0 %v2309
    %3410 = vmatpush1.bf16.msra.mxu0 %v2308
    %3411 = vmatprep.subr.bf16.mxu0 %v2313
    %3412 = vmatpush1.bf16.msra.mxu0 %v2312
    %3413 = vmatprep.mubr.bf16.mxu0 %v1543
    %3414 = vmatmul.mubr.bf16.gmra.mrb[0].mxu0 %v1542
    %v3415 = vpop.f32.mrb[0].mxu0
    %v3416 = vadd.f32 %v3103, %v3415
    %v3417 = vpop.f32.mrb[0].mxu0
    %v3418 = vadd.f32 %v3105, %v3417
    %v3419 = vpop.f32.mrb[0].mxu0
    %v3420 = vadd.f32 %v3107, %v3419
    %v3421 = vpop.f32.mrb[0].mxu0
    %v3422 = vadd.f32 %v3109, %v3421
    %3423 = vmatprep.mubr.bf16.mxu0 %v1547
    %3424 = vmatmul.mubr.bf16.gmra.mrb[0].mxu0 %v1546
    %v3425 = vpop.f32.mrb[0].mxu0
    %v3426 = vadd.f32 %v3113, %v3425
    %v3427 = vpop.f32.mrb[0].mxu0
    %v3428 = vadd.f32 %v3115, %v3427
    %v3429 = vpop.f32.mrb[0].mxu0
    %v3430 = vadd.f32 %v3117, %v3429
    %v3431 = vpop.f32.mrb[0].mxu0
    %v3432 = vadd.f32 %v3119, %v3431
    %3433 = vmatprep.mubr.bf16.mxu0 %v1551
    %3434 = vmatmul.mubr.bf16.gmra.mrb[0].mxu0 %v1550
    %v3435 = vpop.f32.mrb[0].mxu0
    %v3436 = vadd.f32 %v3123, %v3435
    %v3437 = vpop.f32.mrb[0].mxu0
    %v3438 = vadd.f32 %v3125, %v3437
    %v3439 = vpop.f32.mrb[0].mxu0
    %v3440 = vadd.f32 %v3127, %v3439
    %v3441 = vpop.f32.mrb[0].mxu0
    %v3442 = vadd.f32 %v3129, %v3441
    %3443 = vmatprep.mubr.bf16.mxu0 %v1555
    %3444 = vmatmul.mubr.bf16.gmra.mrb[0].mxu0 %v1554
    %v3445 = vpop.f32.mrb[0].mxu0
    %v3446 = vadd.f32 %v3133, %v3445
    %v3447 = vpop.f32.mrb[0].mxu0
    %v3448 = vadd.f32 %v3135, %v3447
    %v3449 = vpop.f32.mrb[0].mxu0
    %v3450 = vadd.f32 %v3137, %v3449
    %v3451 = vpop.f32.mrb[0].mxu0
    %v3452 = vadd.f32 %v3139, %v3451
    %3453 = vmatprep.mubr.bf16.mxu0 %v1559
    %3454 = vmatmul.mubr.bf16.gmra.mrb[0].mxu0 %v1558
    %v3455 = vpop.f32.mrb[0].mxu0
    %v3456 = vadd.f32 %v3143, %v3455
    %v3457 = vpop.f32.mrb[0].mxu0
    %v3458 = vadd.f32 %v3145, %v3457
    %v3459 = vpop.f32.mrb[0].mxu0
    %v3460 = vadd.f32 %v3147, %v3459
    %v3461 = vpop.f32.mrb[0].mxu0
    %v3462 = vadd.f32 %v3149, %v3461
    %3463 = vmatprep.mubr.bf16.mxu0 %v1563
    %3464 = vmatmul.mubr.bf16.gmra.mrb[0].mxu0 %v1562
    %v3465 = vpop.f32.mrb[0].mxu0
    %v3466 = vadd.f32 %v3153, %v3465
    %v3467 = vpop.f32.mrb[0].mxu0
    %v3468 = vadd.f32 %v3155, %v3467
    %v3469 = vpop.f32.mrb[0].mxu0
    %v3470 = vadd.f32 %v3157, %v3469
    %v3471 = vpop.f32.mrb[0].mxu0
    %v3472 = vadd.f32 %v3159, %v3471
    %3473 = vmatprep.mubr.bf16.mxu0 %v1567
    %3474 = vmatmul.mubr.bf16.gmra.mrb[0].mxu0 %v1566
    %v3475 = vpop.f32.mrb[0].mxu0
    %v3476 = vadd.f32 %v3163, %v3475
    %v3477 = vpop.f32.mrb[0].mxu0
    %v3478 = vadd.f32 %v3165, %v3477
    %v3479 = vpop.f32.mrb[0].mxu0
    %v3480 = vadd.f32 %v3167, %v3479
    %v3481 = vpop.f32.mrb[0].mxu0
    %v3482 = vadd.f32 %v3169, %v3481
    %3483 = vmatprep.mubr.bf16.mxu0 %v1571
    %3484 = vmatmul.mubr.bf16.gmra.mrb[0].mxu0 %v1570
    %v3485 = vpop.f32.mrb[0].mxu0
    %v3486 = vadd.f32 %v3173, %v3485
    %v3487 = vpop.f32.mrb[0].mxu0
    %v3488 = vadd.f32 %v3175, %v3487
    %v3489 = vpop.f32.mrb[0].mxu0
    %v3490 = vadd.f32 %v3177, %v3489
    %v3491 = vpop.f32.mrb[0].mxu0
    %v3492 = vadd.f32 %v3179, %v3491
    %3493 = vmatprep.mubr.bf16.mxu0 %v1575
    %3494 = vmatmul.mubr.bf16.gmra.mrb[0].mxu0 %v1574
    %v3495 = vpop.f32.mrb[0].mxu0
    %v3496 = vadd.f32 %v3183, %v3495
    %v3497 = vpop.f32.mrb[0].mxu0
    %v3498 = vadd.f32 %v3185, %v3497
    %v3499 = vpop.f32.mrb[0].mxu0
    %v3500 = vadd.f32 %v3187, %v3499
    %v3501 = vpop.f32.mrb[0].mxu0
    %v3502 = vadd.f32 %v3189, %v3501
    %3503 = vmatprep.mubr.bf16.mxu0 %v1579
    %3504 = vmatmul.mubr.bf16.gmra.mrb[0].mxu0 %v1578
    %v3505 = vpop.f32.mrb[0].mxu0
    %v3506 = vadd.f32 %v3193, %v3505
    %v3507 = vpop.f32.mrb[0].mxu0
    %v3508 = vadd.f32 %v3195, %v3507
    %v3509 = vpop.f32.mrb[0].mxu0
    %v3510 = vadd.f32 %v3197, %v3509
    %v3511 = vpop.f32.mrb[0].mxu0
    %v3512 = vadd.f32 %v3199, %v3511
    %3513 = vmatprep.mubr.bf16.mxu0 %v1583
    %3514 = vmatmul.mubr.bf16.gmra.mrb[0].mxu0 %v1582
    %v3515 = vpop.f32.mrb[0].mxu0
    %v3516 = vadd.f32 %v3203, %v3515
    %v3517 = vpop.f32.mrb[0].mxu0
    %v3518 = vadd.f32 %v3205, %v3517
    %v3519 = vpop.f32.mrb[0].mxu0
    %v3520 = vadd.f32 %v3207, %v3519
    %v3521 = vpop.f32.mrb[0].mxu0
    %v3522 = vadd.f32 %v3209, %v3521
    %3523 = vmatprep.mubr.bf16.mxu0 %v1587
    %3524 = vmatmul.mubr.bf16.gmra.mrb[0].mxu0 %v1586
    %v3525 = vpop.f32.mrb[0].mxu0
    %v3526 = vadd.f32 %v3213, %v3525
    %v3527 = vpop.f32.mrb[0].mxu0
    %v3528 = vadd.f32 %v3215, %v3527
    %v3529 = vpop.f32.mrb[0].mxu0
    %v3530 = vadd.f32 %v3217, %v3529
    %v3531 = vpop.f32.mrb[0].mxu0
    %v3532 = vadd.f32 %v3219, %v3531
    %3533 = vmatprep.mubr.bf16.mxu0 %v1591
    %3534 = vmatmul.mubr.bf16.gmra.mrb[0].mxu0 %v1590
    %v3535 = vpop.f32.mrb[0].mxu0
    %v3536 = vadd.f32 %v3223, %v3535
    %v3537 = vpop.f32.mrb[0].mxu0
    %v3538 = vadd.f32 %v3225, %v3537
    %v3539 = vpop.f32.mrb[0].mxu0
    %v3540 = vadd.f32 %v3227, %v3539
    %v3541 = vpop.f32.mrb[0].mxu0
    %v3542 = vadd.f32 %v3229, %v3541
    %3543 = vmatprep.mubr.bf16.mxu0 %v1595
    %3544 = vmatmul.mubr.bf16.gmra.mrb[0].mxu0 %v1594
    %v3545 = vpop.f32.mrb[0].mxu0
    %v3546 = vadd.f32 %v3233, %v3545
    %v3547 = vpop.f32.mrb[0].mxu0
    %v3548 = vadd.f32 %v3235, %v3547
    %v3549 = vpop.f32.mrb[0].mxu0
    %v3550 = vadd.f32 %v3237, %v3549
    %v3551 = vpop.f32.mrb[0].mxu0
    %v3552 = vadd.f32 %v3239, %v3551
    %3553 = vmatprep.mubr.bf16.mxu0 %v1599
    %3554 = vmatmul.mubr.bf16.gmra.mrb[0].mxu0 %v1598
    %v3555 = vpop.f32.mrb[0].mxu0
    %v3556 = vadd.f32 %v3243, %v3555
    %v3557 = vpop.f32.mrb[0].mxu0
    %v3558 = vadd.f32 %v3245, %v3557
    %v3559 = vpop.f32.mrb[0].mxu0
    %v3560 = vadd.f32 %v3247, %v3559
    %v3561 = vpop.f32.mrb[0].mxu0
    %v3562 = vadd.f32 %v3249, %v3561
    %3563 = vmatprep.mubr.bf16.mxu0 %v1603
    %3564 = vmatmul.mubr.bf16.gmra.mrb[0].mxu0 %v1602
    %v3565 = vpop.f32.mrb[0].mxu0
    %v3566 = vadd.f32 %v3253, %v3565
    %v3567 = vpop.f32.mrb[0].mxu0
    %v3568 = vadd.f32 %v3255, %v3567
    %v3569 = vpop.f32.mrb[0].mxu0
    %v3570 = vadd.f32 %v3257, %v3569
    %v3571 = vpop.f32.mrb[0].mxu0
    %v3572 = vadd.f32 %v3259, %v3571
    %3573 = vmatprep.mubr.bf16.mxu0 %v1607
    %3574 = vmatmul.mubr.bf16.gmra.mrb[0].mxu0 %v1606
    %v3575 = vpop.f32.mrb[0].mxu0
    %v3576 = vadd.f32 %v3263, %v3575
    %v3577 = vpop.f32.mrb[0].mxu0
    %v3578 = vadd.f32 %v3265, %v3577
    %v3579 = vpop.f32.mrb[0].mxu0
    %v3580 = vadd.f32 %v3267, %v3579
    %v3581 = vpop.f32.mrb[0].mxu0
    %v3582 = vadd.f32 %v3269, %v3581
    %3583 = vmatprep.mubr.bf16.mxu0 %v1611
    %3584 = vmatmul.mubr.bf16.gmra.mrb[0].mxu0 %v1610
    %v3585 = vpop.f32.mrb[0].mxu0
    %v3586 = vadd.f32 %v3273, %v3585
    %v3587 = vpop.f32.mrb[0].mxu0
    %v3588 = vadd.f32 %v3275, %v3587
    %v3589 = vpop.f32.mrb[0].mxu0
    %v3590 = vadd.f32 %v3277, %v3589
    %v3591 = vpop.f32.mrb[0].mxu0
    %v3592 = vadd.f32 %v3279, %v3591
    %3593 = vmatprep.mubr.bf16.mxu0 %v1615
    %3594 = vmatmul.mubr.bf16.gmra.mrb[0].mxu0 %v1614
    %v3595 = vpop.f32.mrb[0].mxu0
    %v3596 = vadd.f32 %v3283, %v3595
    %v3597 = vpop.f32.mrb[0].mxu0
    %v3598 = vadd.f32 %v3285, %v3597
    %v3599 = vpop.f32.mrb[0].mxu0
    %v3600 = vadd.f32 %v3287, %v3599
    %v3601 = vpop.f32.mrb[0].mxu0
    %v3602 = vadd.f32 %v3289, %v3601
    %3603 = vmatprep.mubr.bf16.mxu0 %v1619
    %3604 = vmatmul.mubr.bf16.gmra.mrb[0].mxu0 %v1618
    %v3605 = vpop.f32.mrb[0].mxu0
    %v3606 = vadd.f32 %v3293, %v3605
    %v3607 = vpop.f32.mrb[0].mxu0
    %v3608 = vadd.f32 %v3295, %v3607
    %v3609 = vpop.f32.mrb[0].mxu0
    %v3610 = vadd.f32 %v3297, %v3609
    %v3611 = vpop.f32.mrb[0].mxu0
    %v3612 = vadd.f32 %v3299, %v3611
    %3613 = vmatprep.mubr.bf16.mxu0 %v1623
    %3614 = vmatmul.mubr.bf16.gmra.mrb[0].mxu0 %v1622
    %v3615 = vpop.f32.mrb[0].mxu0
    %v3616 = vadd.f32 %v3303, %v3615
    %v3617 = vpop.f32.mrb[0].mxu0
    %v3618 = vadd.f32 %v3305, %v3617
    %v3619 = vpop.f32.mrb[0].mxu0
    %v3620 = vadd.f32 %v3307, %v3619
    %v3621 = vpop.f32.mrb[0].mxu0
    %v3622 = vadd.f32 %v3309, %v3621
    %3623 = vmatprep.mubr.bf16.mxu0 %v1627
    %3624 = vmatmul.mubr.bf16.gmra.mrb[0].mxu0 %v1626
    %v3625 = vpop.f32.mrb[0].mxu0
    %v3626 = vadd.f32 %v3313, %v3625
    %v3627 = vpop.f32.mrb[0].mxu0
    %v3628 = vadd.f32 %v3315, %v3627
    %v3629 = vpop.f32.mrb[0].mxu0
    %v3630 = vadd.f32 %v3317, %v3629
    %v3631 = vpop.f32.mrb[0].mxu0
    %v3632 = vadd.f32 %v3319, %v3631
    %3633 = vmatprep.mubr.bf16.mxu0 %v1631
    %3634 = vmatmul.mubr.bf16.gmra.mrb[0].mxu0 %v1630
    %v3635 = vpop.f32.mrb[0].mxu0
    %v3636 = vadd.f32 %v3323, %v3635
    %v3637 = vpop.f32.mrb[0].mxu0
    %v3638 = vadd.f32 %v3325, %v3637
    %v3639 = vpop.f32.mrb[0].mxu0
    %v3640 = vadd.f32 %v3327, %v3639
    %v3641 = vpop.f32.mrb[0].mxu0
    %v3642 = vadd.f32 %v3329, %v3641
    %3643 = vmatprep.mubr.bf16.mxu0 %v1635
    %3644 = vmatmul.mubr.bf16.gmra.mrb[0].mxu0 %v1634
    %v3645 = vpop.f32.mrb[0].mxu0
    %v3646 = vadd.f32 %v3333, %v3645
    %v3647 = vpop.f32.mrb[0].mxu0
    %v3648 = vadd.f32 %v3335, %v3647
    %v3649 = vpop.f32.mrb[0].mxu0
    %v3650 = vadd.f32 %v3337, %v3649
    %v3651 = vpop.f32.mrb[0].mxu0
    %v3652 = vadd.f32 %v3339, %v3651
    %3653 = vmatprep.mubr.bf16.mxu0 %v1639
    %3654 = vmatmul.mubr.bf16.gmra.mrb[0].mxu0 %v1638
    %v3655 = vpop.f32.mrb[0].mxu0
    %v3656 = vadd.f32 %v3343, %v3655
    %v3657 = vpop.f32.mrb[0].mxu0
    %v3658 = vadd.f32 %v3345, %v3657
    %v3659 = vpop.f32.mrb[0].mxu0
    %v3660 = vadd.f32 %v3347, %v3659
    %v3661 = vpop.f32.mrb[0].mxu0
    %v3662 = vadd.f32 %v3349, %v3661
    %3663 = vmatprep.mubr.bf16.mxu0 %v1643
    %3664 = vmatmul.mubr.bf16.gmra.mrb[0].mxu0 %v1642
    %v3665 = vpop.f32.mrb[0].mxu0
    %v3666 = vadd.f32 %v3353, %v3665
    %v3667 = vpop.f32.mrb[0].mxu0
    %v3668 = vadd.f32 %v3355, %v3667
    %v3669 = vpop.f32.mrb[0].mxu0
    %v3670 = vadd.f32 %v3357, %v3669
    %v3671 = vpop.f32.mrb[0].mxu0
    %v3672 = vadd.f32 %v3359, %v3671
    %3673 = vmatprep.mubr.bf16.mxu0 %v1647
    %3674 = vmatmul.mubr.bf16.gmra.mrb[0].mxu0 %v1646
    %v3675 = vpop.f32.mrb[0].mxu0
    %v3676 = vadd.f32 %v3363, %v3675
    %v3677 = vpop.f32.mrb[0].mxu0
    %v3678 = vadd.f32 %v3365, %v3677
    %v3679 = vpop.f32.mrb[0].mxu0
    %v3680 = vadd.f32 %v3367, %v3679
    %v3681 = vpop.f32.mrb[0].mxu0
    %v3682 = vadd.f32 %v3369, %v3681
    %3683 = vmatprep.mubr.bf16.mxu0 %v1651
    %3684 = vmatmul.mubr.bf16.gmra.mrb[0].mxu0 %v1650
    %v3685 = vpop.f32.mrb[0].mxu0
    %v3686 = vadd.f32 %v3373, %v3685
    %v3687 = vpop.f32.mrb[0].mxu0
    %v3688 = vadd.f32 %v3375, %v3687
    %v3689 = vpop.f32.mrb[0].mxu0
    %v3690 = vadd.f32 %v3377, %v3689
    %v3691 = vpop.f32.mrb[0].mxu0
    %v3692 = vadd.f32 %v3379, %v3691
    %3693 = vdwg.mxu0
    %v3694 = vmax.f32 %v2790, 0.0
    %v3695 = vmax.f32 %v2792, 0.0
    %v3696 = vmax.f32 %v3416, 0.0
    %v3697 = vmax.f32 %v3418, 0.0
    %v3698 = vmax.f32 %v2794, 0.0
    %v3699 = vmax.f32 %v2796, 0.0
    %v3700 = vmax.f32 %v3420, 0.0
    %v3701 = vmax.f32 %v3422, 0.0
    %v3702 = vmax.f32 %v2800, 0.0
    %v3703 = vmax.f32 %v2802, 0.0
    %v3704 = vmax.f32 %v3426, 0.0
    %v3705 = vmax.f32 %v3428, 0.0
    %v3706 = vmax.f32 %v2804, 0.0
    %v3707 = vmax.f32 %v2806, 0.0
    %v3708 = vmax.f32 %v3430, 0.0
    %v3709 = vmax.f32 %v3432, 0.0
    %v3710 = vmax.f32 %v2810, 0.0
    %v3711 = vmax.f32 %v2812, 0.0
    %v3712 = vmax.f32 %v3436, 0.0
    %v3713 = vmax.f32 %v3438, 0.0
    %v3714 = vmax.f32 %v2814, 0.0
    %v3715 = vmax.f32 %v2816, 0.0
    %v3716 = vmax.f32 %v3440, 0.0
    %v3717 = vmax.f32 %v3442, 0.0
    %v3718 = vmax.f32 %v2820, 0.0
    %v3719 = vmax.f32 %v2822, 0.0
    %v3720 = vmax.f32 %v3446, 0.0
    %v3721 = vmax.f32 %v3448, 0.0
    %v3722 = vmax.f32 %v2824, 0.0
    %v3723 = vmax.f32 %v2826, 0.0
    %v3724 = vmax.f32 %v3450, 0.0
    %v3725 = vmax.f32 %v3452, 0.0
    %v3726 = vmax.f32 %v2830, 0.0
    %v3727 = vmax.f32 %v2832, 0.0
    %v3728 = vmax.f32 %v3456, 0.0
    %v3729 = vmax.f32 %v3458, 0.0
    %v3730 = vmax.f32 %v2834, 0.0
    %v3731 = vmax.f32 %v2836, 0.0
    %v3732 = vmax.f32 %v3460, 0.0
    %v3733 = vmax.f32 %v3462, 0.0
    %v3734 = vmax.f32 %v2840, 0.0
    %v3735 = vmax.f32 %v2842, 0.0
    %v3736 = vmax.f32 %v3466, 0.0
    %v3737 = vmax.f32 %v3468, 0.0
    %v3738 = vmax.f32 %v2844, 0.0
    %v3739 = vmax.f32 %v2846, 0.0
    %v3740 = vmax.f32 %v3470, 0.0
    %v3741 = vmax.f32 %v3472, 0.0
    %v3742 = vmax.f32 %v2850, 0.0
    %v3743 = vmax.f32 %v2852, 0.0
    %v3744 = vmax.f32 %v3476, 0.0
    %v3745 = vmax.f32 %v3478, 0.0
    %v3746 = vmax.f32 %v2854, 0.0
    %v3747 = vmax.f32 %v2856, 0.0
    %v3748 = vmax.f32 %v3480, 0.0
    %v3749 = vmax.f32 %v3482, 0.0
    %v3750 = vmax.f32 %v2860, 0.0
    %v3751 = vmax.f32 %v2862, 0.0
    %v3752 = vmax.f32 %v3486, 0.0
    %v3753 = vmax.f32 %v3488, 0.0
    %v3754 = vmax.f32 %v2864, 0.0
    %v3755 = vmax.f32 %v2866, 0.0
    %v3756 = vmax.f32 %v3490, 0.0
    %v3757 = vmax.f32 %v3492, 0.0
    %v3758 = vmax.f32 %v2870, 0.0
    %v3759 = vmax.f32 %v2872, 0.0
    %v3760 = vmax.f32 %v3496, 0.0
    %v3761 = vmax.f32 %v3498, 0.0
    %v3762 = vmax.f32 %v2874, 0.0
    %v3763 = vmax.f32 %v2876, 0.0
    %v3764 = vmax.f32 %v3500, 0.0
    %v3765 = vmax.f32 %v3502, 0.0
    %v3766 = vmax.f32 %v2880, 0.0
    %v3767 = vmax.f32 %v2882, 0.0
    %v3768 = vmax.f32 %v3506, 0.0
    %v3769 = vmax.f32 %v3508, 0.0
    %v3770 = vmax.f32 %v2884, 0.0
    %v3771 = vmax.f32 %v2886, 0.0
    %v3772 = vmax.f32 %v3510, 0.0
    %v3773 = vmax.f32 %v3512, 0.0
    %v3774 = vmax.f32 %v2890, 0.0
    %v3775 = vmax.f32 %v2892, 0.0
    %v3776 = vmax.f32 %v3516, 0.0
    %v3777 = vmax.f32 %v3518, 0.0
    %v3778 = vmax.f32 %v2894, 0.0
    %v3779 = vmax.f32 %v2896, 0.0
    %v3780 = vmax.f32 %v3520, 0.0
    %v3781 = vmax.f32 %v3522, 0.0
    %v3782 = vmax.f32 %v2900, 0.0
    %v3783 = vmax.f32 %v2902, 0.0
    %v3784 = vmax.f32 %v3526, 0.0
    %v3785 = vmax.f32 %v3528, 0.0
    %v3786 = vmax.f32 %v2904, 0.0
    %v3787 = vmax.f32 %v2906, 0.0
    %v3788 = vmax.f32 %v3530, 0.0
    %v3789 = vmax.f32 %v3532, 0.0
    %v3790 = vmax.f32 %v2910, 0.0
    %v3791 = vmax.f32 %v2912, 0.0
    %v3792 = vmax.f32 %v3536, 0.0
    %v3793 = vmax.f32 %v3538, 0.0
    %v3794 = vmax.f32 %v2914, 0.0
    %v3795 = vmax.f32 %v2916, 0.0
    %v3796 = vmax.f32 %v3540, 0.0
    %v3797 = vmax.f32 %v3542, 0.0
    %v3798 = vmax.f32 %v2920, 0.0
    %v3799 = vmax.f32 %v2922, 0.0
    %v3800 = vmax.f32 %v3546, 0.0
    %v3801 = vmax.f32 %v3548, 0.0
    %v3802 = vmax.f32 %v2924, 0.0
    %v3803 = vmax.f32 %v2926, 0.0
    %v3804 = vmax.f32 %v3550, 0.0
    %v3805 = vmax.f32 %v3552, 0.0
    %v3806 = vmax.f32 %v2930, 0.0
    %v3807 = vmax.f32 %v2932, 0.0
    %v3808 = vmax.f32 %v3556, 0.0
    %v3809 = vmax.f32 %v3558, 0.0
    %v3810 = vmax.f32 %v2934, 0.0
    %v3811 = vmax.f32 %v2936, 0.0
    %v3812 = vmax.f32 %v3560, 0.0
    %v3813 = vmax.f32 %v3562, 0.0
    %v3814 = vmax.f32 %v2940, 0.0
    %v3815 = vmax.f32 %v2942, 0.0
    %v3816 = vmax.f32 %v3566, 0.0
    %v3817 = vmax.f32 %v3568, 0.0
    %v3818 = vmax.f32 %v2944, 0.0
    %v3819 = vmax.f32 %v2946, 0.0
    %v3820 = vmax.f32 %v3570, 0.0
    %v3821 = vmax.f32 %v3572, 0.0
    %v3822 = vmax.f32 %v2950, 0.0
    %v3823 = vmax.f32 %v2952, 0.0
    %v3824 = vmax.f32 %v3576, 0.0
    %v3825 = vmax.f32 %v3578, 0.0
    %v3826 = vmax.f32 %v2954, 0.0
    %v3827 = vmax.f32 %v2956, 0.0
    %v3828 = vmax.f32 %v3580, 0.0
    %v3829 = vmax.f32 %v3582, 0.0
    %v3830 = vmax.f32 %v2960, 0.0
    %v3831 = vmax.f32 %v2962, 0.0
    %v3832 = vmax.f32 %v3586, 0.0
    %v3833 = vmax.f32 %v3588, 0.0
    %v3834 = vmax.f32 %v2964, 0.0
    %v3835 = vmax.f32 %v2966, 0.0
    %v3836 = vmax.f32 %v3590, 0.0
    %v3837 = vmax.f32 %v3592, 0.0
    %v3838 = vmax.f32 %v2970, 0.0
    %v3839 = vmax.f32 %v2972, 0.0
    %v3840 = vmax.f32 %v3596, 0.0
    %v3841 = vmax.f32 %v3598, 0.0
    %v3842 = vmax.f32 %v2974, 0.0
    %v3843 = vmax.f32 %v2976, 0.0
    %v3844 = vmax.f32 %v3600, 0.0
    %v3845 = vmax.f32 %v3602, 0.0
    %v3846 = vmax.f32 %v2980, 0.0
    %v3847 = vmax.f32 %v2982, 0.0
    %v3848 = vmax.f32 %v3606, 0.0
    %v3849 = vmax.f32 %v3608, 0.0
    %v3850 = vmax.f32 %v2984, 0.0
    %v3851 = vmax.f32 %v2986, 0.0
    %v3852 = vmax.f32 %v3610, 0.0
    %v3853 = vmax.f32 %v3612, 0.0
    %v3854 = vmax.f32 %v2990, 0.0
    %v3855 = vmax.f32 %v2992, 0.0
    %v3856 = vmax.f32 %v3616, 0.0
    %v3857 = vmax.f32 %v3618, 0.0
    %v3858 = vmax.f32 %v2994, 0.0
    %v3859 = vmax.f32 %v2996, 0.0
    %v3860 = vmax.f32 %v3620, 0.0
    %v3861 = vmax.f32 %v3622, 0.0
    %v3862 = vmax.f32 %v3000, 0.0
    %v3863 = vmax.f32 %v3002, 0.0
    %v3864 = vmax.f32 %v3626, 0.0
    %v3865 = vmax.f32 %v3628, 0.0
    %v3866 = vmax.f32 %v3004, 0.0
    %v3867 = vmax.f32 %v3006, 0.0
    %v3868 = vmax.f32 %v3630, 0.0
    %v3869 = vmax.f32 %v3632, 0.0
    %v3870 = vmax.f32 %v3010, 0.0
    %v3871 = vmax.f32 %v3012, 0.0
    %v3872 = vmax.f32 %v3636, 0.0
    %v3873 = vmax.f32 %v3638, 0.0
    %v3874 = vmax.f32 %v3014, 0.0
    %v3875 = vmax.f32 %v3016, 0.0
    %v3876 = vmax.f32 %v3640, 0.0
    %v3877 = vmax.f32 %v3642, 0.0
    %v3878 = vmax.f32 %v3020, 0.0
    %v3879 = vmax.f32 %v3022, 0.0
    %v3880 = vmax.f32 %v3646, 0.0
    %v3881 = vmax.f32 %v3648, 0.0
    %v3882 = vmax.f32 %v3024, 0.0
    %v3883 = vmax.f32 %v3026, 0.0
    %v3884 = vmax.f32 %v3650, 0.0
    %v3885 = vmax.f32 %v3652, 0.0
    %v3886 = vmax.f32 %v3030, 0.0
    %v3887 = vmax.f32 %v3032, 0.0
    %v3888 = vmax.f32 %v3656, 0.0
    %v3889 = vmax.f32 %v3658, 0.0
    %v3890 = vmax.f32 %v3034, 0.0
    %v3891 = vmax.f32 %v3036, 0.0
    %v3892 = vmax.f32 %v3660, 0.0
    %v3893 = vmax.f32 %v3662, 0.0
    %v3894 = vmax.f32 %v3040, 0.0
    %v3895 = vmax.f32 %v3042, 0.0
    %v3896 = vmax.f32 %v3666, 0.0
    %v3897 = vmax.f32 %v3668, 0.0
    %v3898 = vmax.f32 %v3044, 0.0
    %v3899 = vmax.f32 %v3046, 0.0
    %v3900 = vmax.f32 %v3670, 0.0
    %v3901 = vmax.f32 %v3672, 0.0
    %v3902 = vmax.f32 %v3050, 0.0
    %v3903 = vmax.f32 %v3052, 0.0
    %v3904 = vmax.f32 %v3676, 0.0
    %v3905 = vmax.f32 %v3678, 0.0
    %v3906 = vmax.f32 %v3054, 0.0
    %v3907 = vmax.f32 %v3056, 0.0
    %v3908 = vmax.f32 %v3680, 0.0
    %v3909 = vmax.f32 %v3682, 0.0
    %v3910 = vmax.f32 %v3060, 0.0
    %v3911 = vmax.f32 %v3062, 0.0
    %v3912 = vmax.f32 %v3686, 0.0
    %v3913 = vmax.f32 %v3688, 0.0
    %v3914 = vmax.f32 %v3064, 0.0
    %v3915 = vmax.f32 %v3066, 0.0
    %v3916 = vmax.f32 %v3690, 0.0
    %v3917 = vmax.f32 %v3692, 0.0
    %v3918 = vld [vmem:[%s7] sm:$0xf]
    %v3920 = vlaneseq
    %v3921 = vshrl.u32 %v3920, 7
    %v3922 = vsub.s32 0, %v3921
    %v3923 = vrot.slane %v3918, %v3922
    %v3924 = vlaneseq
    %v3925 = vshrl.u32 %v3924, 7
    %v3926 = vsub.s32 1, %v3925
    %v3927 = vrot.slane %v3918, %v3926
    %v3928 = vlaneseq
    %v3929 = vshrl.u32 %v3928, 7
    %v3930 = vsub.s32 2, %v3929
    %v3931 = vrot.slane %v3918, %v3930
    %v3932 = vlaneseq
    %v3933 = vshrl.u32 %v3932, 7
    %v3934 = vsub.s32 3, %v3933
    %v3935 = vrot.slane %v3918, %v3934
    %v3940 = vmul.f32 %v3694, %v3923
    %v3941 = vmul.f32 %v3695, %v3927
    %v3942 = vmul.f32 %v3696, %v3931
    %v3943 = vmul.f32 %v3697, %v3935
    %v3944 = vmul.f32 %v3698, %v3923
    %v3945 = vmul.f32 %v3699, %v3927
    %v3946 = vmul.f32 %v3700, %v3931
    %v3947 = vmul.f32 %v3701, %v3935
    %v3948 = vmul.f32 %v3702, %v3923
    %v3949 = vmul.f32 %v3703, %v3927
    %v3950 = vmul.f32 %v3704, %v3931
    %v3951 = vmul.f32 %v3705, %v3935
    %v3952 = vmul.f32 %v3706, %v3923
    %v3953 = vmul.f32 %v3707, %v3927
    %v3954 = vmul.f32 %v3708, %v3931
    %v3955 = vmul.f32 %v3709, %v3935
    %v3956 = vmul.f32 %v3710, %v3923
    %v3957 = vmul.f32 %v3711, %v3927
    %v3958 = vmul.f32 %v3712, %v3931
    %v3959 = vmul.f32 %v3713, %v3935
    %v3960 = vmul.f32 %v3714, %v3923
    %v3961 = vmul.f32 %v3715, %v3927
    %v3962 = vmul.f32 %v3716, %v3931
    %v3963 = vmul.f32 %v3717, %v3935
    %v3964 = vmul.f32 %v3718, %v3923
    %v3965 = vmul.f32 %v3719, %v3927
    %v3966 = vmul.f32 %v3720, %v3931
    %v3967 = vmul.f32 %v3721, %v3935
    %v3968 = vmul.f32 %v3722, %v3923
    %v3969 = vmul.f32 %v3723, %v3927
    %v3970 = vmul.f32 %v3724, %v3931
    %v3971 = vmul.f32 %v3725, %v3935
    %v3972 = vmul.f32 %v3726, %v3923
    %v3973 = vmul.f32 %v3727, %v3927
    %v3974 = vmul.f32 %v3728, %v3931
    %v3975 = vmul.f32 %v3729, %v3935
    %v3976 = vmul.f32 %v3730, %v3923
    %v3977 = vmul.f32 %v3731, %v3927
    %v3978 = vmul.f32 %v3732, %v3931
    %v3979 = vmul.f32 %v3733, %v3935
    %v3980 = vmul.f32 %v3734, %v3923
    %v3981 = vmul.f32 %v3735, %v3927
    %v3982 = vmul.f32 %v3736, %v3931
    %v3983 = vmul.f32 %v3737, %v3935
    %v3984 = vmul.f32 %v3738, %v3923
    %v3985 = vmul.f32 %v3739, %v3927
    %v3986 = vmul.f32 %v3740, %v3931
    %v3987 = vmul.f32 %v3741, %v3935
    %v3988 = vmul.f32 %v3742, %v3923
    %v3989 = vmul.f32 %v3743, %v3927
    %v3990 = vmul.f32 %v3744, %v3931
    %v3991 = vmul.f32 %v3745, %v3935
    %v3992 = vmul.f32 %v3746, %v3923
    %v3993 = vmul.f32 %v3747, %v3927
    %v3994 = vmul.f32 %v3748, %v3931
    %v3995 = vmul.f32 %v3749, %v3935
    %v3996 = vmul.f32 %v3750, %v3923
    %v3997 = vmul.f32 %v3751, %v3927
    %v3998 = vmul.f32 %v3752, %v3931
    %v3999 = vmul.f32 %v3753, %v3935
    %v4000 = vmul.f32 %v3754, %v3923
    %v4001 = vmul.f32 %v3755, %v3927
    %v4002 = vmul.f32 %v3756, %v3931
    %v4003 = vmul.f32 %v3757, %v3935
    %v4004 = vmul.f32 %v3758, %v3923
    %v4005 = vmul.f32 %v3759, %v3927
    %v4006 = vmul.f32 %v3760, %v3931
    %v4007 = vmul.f32 %v3761, %v3935
    %v4008 = vmul.f32 %v3762, %v3923
    %v4009 = vmul.f32 %v3763, %v3927
    %v4010 = vmul.f32 %v3764, %v3931
    %v4011 = vmul.f32 %v3765, %v3935
    %v4012 = vmul.f32 %v3766, %v3923
    %v4013 = vmul.f32 %v3767, %v3927
    %v4014 = vmul.f32 %v3768, %v3931
    %v4015 = vmul.f32 %v3769, %v3935
    %v4016 = vmul.f32 %v3770, %v3923
    %v4017 = vmul.f32 %v3771, %v3927
    %v4018 = vmul.f32 %v3772, %v3931
    %v4019 = vmul.f32 %v3773, %v3935
    %v4020 = vmul.f32 %v3774, %v3923
    %v4021 = vmul.f32 %v3775, %v3927
    %v4022 = vmul.f32 %v3776, %v3931
    %v4023 = vmul.f32 %v3777, %v3935
    %v4024 = vmul.f32 %v3778, %v3923
    %v4025 = vmul.f32 %v3779, %v3927
    %v4026 = vmul.f32 %v3780, %v3931
    %v4027 = vmul.f32 %v3781, %v3935
    %v4028 = vmul.f32 %v3782, %v3923
    %v4029 = vmul.f32 %v3783, %v3927
    %v4030 = vmul.f32 %v3784, %v3931
    %v4031 = vmul.f32 %v3785, %v3935
    %v4032 = vmul.f32 %v3786, %v3923
    %v4033 = vmul.f32 %v3787, %v3927
    %v4034 = vmul.f32 %v3788, %v3931
    %v4035 = vmul.f32 %v3789, %v3935
    %v4036 = vmul.f32 %v3790, %v3923
    %v4037 = vmul.f32 %v3791, %v3927
    %v4038 = vmul.f32 %v3792, %v3931
    %v4039 = vmul.f32 %v3793, %v3935
    %v4040 = vmul.f32 %v3794, %v3923
    %v4041 = vmul.f32 %v3795, %v3927
    %v4042 = vmul.f32 %v3796, %v3931
    %v4043 = vmul.f32 %v3797, %v3935
    %v4044 = vmul.f32 %v3798, %v3923
    %v4045 = vmul.f32 %v3799, %v3927
    %v4046 = vmul.f32 %v3800, %v3931
    %v4047 = vmul.f32 %v3801, %v3935
    %v4048 = vmul.f32 %v3802, %v3923
    %v4049 = vmul.f32 %v3803, %v3927
    %v4050 = vmul.f32 %v3804, %v3931
    %v4051 = vmul.f32 %v3805, %v3935
    %v4052 = vmul.f32 %v3806, %v3923
    %v4053 = vmul.f32 %v3807, %v3927
    %v4054 = vmul.f32 %v3808, %v3931
    %v4055 = vmul.f32 %v3809, %v3935
    %v4056 = vmul.f32 %v3810, %v3923
    %v4057 = vmul.f32 %v3811, %v3927
    %v4058 = vmul.f32 %v3812, %v3931
    %v4059 = vmul.f32 %v3813, %v3935
    %v4060 = vmul.f32 %v3814, %v3923
    %v4061 = vmul.f32 %v3815, %v3927
    %v4062 = vmul.f32 %v3816, %v3931
    %v4063 = vmul.f32 %v3817, %v3935
    %v4064 = vmul.f32 %v3818, %v3923
    %v4065 = vmul.f32 %v3819, %v3927
    %v4066 = vmul.f32 %v3820, %v3931
    %v4067 = vmul.f32 %v3821, %v3935
    %v4068 = vmul.f32 %v3822, %v3923
    %v4069 = vmul.f32 %v3823, %v3927
    %v4070 = vmul.f32 %v3824, %v3931
    %v4071 = vmul.f32 %v3825, %v3935
    %v4072 = vmul.f32 %v3826, %v3923
    %v4073 = vmul.f32 %v3827, %v3927
    %v4074 = vmul.f32 %v3828, %v3931
    %v4075 = vmul.f32 %v3829, %v3935
    %v4076 = vmul.f32 %v3830, %v3923
    %v4077 = vmul.f32 %v3831, %v3927
    %v4078 = vmul.f32 %v3832, %v3931
    %v4079 = vmul.f32 %v3833, %v3935
    %v4080 = vmul.f32 %v3834, %v3923
    %v4081 = vmul.f32 %v3835, %v3927
    %v4082 = vmul.f32 %v3836, %v3931
    %v4083 = vmul.f32 %v3837, %v3935
    %v4084 = vmul.f32 %v3838, %v3923
    %v4085 = vmul.f32 %v3839, %v3927
    %v4086 = vmul.f32 %v3840, %v3931
    %v4087 = vmul.f32 %v3841, %v3935
    %v4088 = vmul.f32 %v3842, %v3923
    %v4089 = vmul.f32 %v3843, %v3927
    %v4090 = vmul.f32 %v3844, %v3931
    %v4091 = vmul.f32 %v3845, %v3935
    %v4092 = vmul.f32 %v3846, %v3923
    %v4093 = vmul.f32 %v3847, %v3927
    %v4094 = vmul.f32 %v3848, %v3931
    %v4095 = vmul.f32 %v3849, %v3935
    %v4096 = vmul.f32 %v3850, %v3923
    %v4097 = vmul.f32 %v3851, %v3927
    %v4098 = vmul.f32 %v3852, %v3931
    %v4099 = vmul.f32 %v3853, %v3935
    %v4100 = vmul.f32 %v3854, %v3923
    %v4101 = vmul.f32 %v3855, %v3927
    %v4102 = vmul.f32 %v3856, %v3931
    %v4103 = vmul.f32 %v3857, %v3935
    %v4104 = vmul.f32 %v3858, %v3923
    %v4105 = vmul.f32 %v3859, %v3927
    %v4106 = vmul.f32 %v3860, %v3931
    %v4107 = vmul.f32 %v3861, %v3935
    %v4108 = vmul.f32 %v3862, %v3923
    %v4109 = vmul.f32 %v3863, %v3927
    %v4110 = vmul.f32 %v3864, %v3931
    %v4111 = vmul.f32 %v3865, %v3935
    %v4112 = vmul.f32 %v3866, %v3923
    %v4113 = vmul.f32 %v3867, %v3927
    %v4114 = vmul.f32 %v3868, %v3931
    %v4115 = vmul.f32 %v3869, %v3935
    %v4116 = vmul.f32 %v3870, %v3923
    %v4117 = vmul.f32 %v3871, %v3927
    %v4118 = vmul.f32 %v3872, %v3931
    %v4119 = vmul.f32 %v3873, %v3935
    %v4120 = vmul.f32 %v3874, %v3923
    %v4121 = vmul.f32 %v3875, %v3927
    %v4122 = vmul.f32 %v3876, %v3931
    %v4123 = vmul.f32 %v3877, %v3935
    %v4124 = vmul.f32 %v3878, %v3923
    %v4125 = vmul.f32 %v3879, %v3927
    %v4126 = vmul.f32 %v3880, %v3931
    %v4127 = vmul.f32 %v3881, %v3935
    %v4128 = vmul.f32 %v3882, %v3923
    %v4129 = vmul.f32 %v3883, %v3927
    %v4130 = vmul.f32 %v3884, %v3931
    %v4131 = vmul.f32 %v3885, %v3935
    %v4132 = vmul.f32 %v3886, %v3923
    %v4133 = vmul.f32 %v3887, %v3927
    %v4134 = vmul.f32 %v3888, %v3931
    %v4135 = vmul.f32 %v3889, %v3935
    %v4136 = vmul.f32 %v3890, %v3923
    %v4137 = vmul.f32 %v3891, %v3927
    %v4138 = vmul.f32 %v3892, %v3931
    %v4139 = vmul.f32 %v3893, %v3935
    %v4140 = vmul.f32 %v3894, %v3923
    %v4141 = vmul.f32 %v3895, %v3927
    %v4142 = vmul.f32 %v3896, %v3931
    %v4143 = vmul.f32 %v3897, %v3935
    %v4144 = vmul.f32 %v3898, %v3923
    %v4145 = vmul.f32 %v3899, %v3927
    %v4146 = vmul.f32 %v3900, %v3931
    %v4147 = vmul.f32 %v3901, %v3935
    %v4148 = vmul.f32 %v3902, %v3923
    %v4149 = vmul.f32 %v3903, %v3927
    %v4150 = vmul.f32 %v3904, %v3931
    %v4151 = vmul.f32 %v3905, %v3935
    %v4152 = vmul.f32 %v3906, %v3923
    %v4153 = vmul.f32 %v3907, %v3927
    %v4154 = vmul.f32 %v3908, %v3931
    %v4155 = vmul.f32 %v3909, %v3935
    %v4156 = vmul.f32 %v3910, %v3923
    %v4157 = vmul.f32 %v3911, %v3927
    %v4158 = vmul.f32 %v3912, %v3931
    %v4159 = vmul.f32 %v3913, %v3935
    %v4160 = vmul.f32 %v3914, %v3923
    %v4161 = vmul.f32 %v3915, %v3927
    %v4162 = vmul.f32 %v3916, %v3931
    %v4163 = vmul.f32 %v3917, %v3935
    %v4164 = vadd.f32 %v3940, %v3941
    %v4165 = vadd.f32 %v4164, %v3942
    %v4166 = vadd.f32 %v4165, %v3943
    %4167 = vadd.xlane.f32.xlu0 %v4166
    %v4168 = vpop.xlane.xlu0 %4167
    %v4169 = vadd.f32 %v3944, %v3945
    %v4170 = vadd.f32 %v4169, %v3946
    %v4171 = vadd.f32 %v4170, %v3947
    %4172 = vadd.xlane.f32.xlu0 %v4171
    %v4173 = vpop.xlane.xlu0 %4172
    %v4174 = vadd.f32 %v3948, %v3949
    %v4175 = vadd.f32 %v4174, %v3950
    %v4176 = vadd.f32 %v4175, %v3951
    %4177 = vadd.xlane.f32.xlu0 %v4176
    %v4178 = vpop.xlane.xlu0 %4177
    %v4179 = vadd.f32 %v3952, %v3953
    %v4180 = vadd.f32 %v4179, %v3954
    %v4181 = vadd.f32 %v4180, %v3955
    %4182 = vadd.xlane.f32.xlu0 %v4181
    %v4183 = vpop.xlane.xlu0 %4182
    %v4184 = vadd.f32 %v3956, %v3957
    %v4185 = vadd.f32 %v4184, %v3958
    %v4186 = vadd.f32 %v4185, %v3959
    %4187 = vadd.xlane.f32.xlu0 %v4186
    %v4188 = vpop.xlane.xlu0 %4187
    %v4189 = vadd.f32 %v3960, %v3961
    %v4190 = vadd.f32 %v4189, %v3962
    %v4191 = vadd.f32 %v4190, %v3963
    %4192 = vadd.xlane.f32.xlu0 %v4191
    %v4193 = vpop.xlane.xlu0 %4192
    %v4194 = vadd.f32 %v3964, %v3965
    %v4195 = vadd.f32 %v4194, %v3966
    %v4196 = vadd.f32 %v4195, %v3967
    %4197 = vadd.xlane.f32.xlu0 %v4196
    %v4198 = vpop.xlane.xlu0 %4197
    %v4199 = vadd.f32 %v3968, %v3969
    %v4200 = vadd.f32 %v4199, %v3970
    %v4201 = vadd.f32 %v4200, %v3971
    %4202 = vadd.xlane.f32.xlu0 %v4201
    %v4203 = vpop.xlane.xlu0 %4202
    %v4204 = vadd.f32 %v3972, %v3973
    %v4205 = vadd.f32 %v4204, %v3974
    %v4206 = vadd.f32 %v4205, %v3975
    %4207 = vadd.xlane.f32.xlu0 %v4206
    %v4208 = vpop.xlane.xlu0 %4207
    %v4209 = vadd.f32 %v3976, %v3977
    %v4210 = vadd.f32 %v4209, %v3978
    %v4211 = vadd.f32 %v4210, %v3979
    %4212 = vadd.xlane.f32.xlu0 %v4211
    %v4213 = vpop.xlane.xlu0 %4212
    %v4214 = vadd.f32 %v3980, %v3981
    %v4215 = vadd.f32 %v4214, %v3982
    %v4216 = vadd.f32 %v4215, %v3983
    %4217 = vadd.xlane.f32.xlu0 %v4216
    %v4218 = vpop.xlane.xlu0 %4217
    %v4219 = vadd.f32 %v3984, %v3985
    %v4220 = vadd.f32 %v4219, %v3986
    %v4221 = vadd.f32 %v4220, %v3987
    %4222 = vadd.xlane.f32.xlu0 %v4221
    %v4223 = vpop.xlane.xlu0 %4222
    %v4224 = vadd.f32 %v3988, %v3989
    %v4225 = vadd.f32 %v4224, %v3990
    %v4226 = vadd.f32 %v4225, %v3991
    %4227 = vadd.xlane.f32.xlu0 %v4226
    %v4228 = vpop.xlane.xlu0 %4227
    %v4229 = vadd.f32 %v3992, %v3993
    %v4230 = vadd.f32 %v4229, %v3994
    %v4231 = vadd.f32 %v4230, %v3995
    %4232 = vadd.xlane.f32.xlu0 %v4231
    %v4233 = vpop.xlane.xlu0 %4232
    %v4234 = vadd.f32 %v3996, %v3997
    %v4235 = vadd.f32 %v4234, %v3998
    %v4236 = vadd.f32 %v4235, %v3999
    %4237 = vadd.xlane.f32.xlu0 %v4236
    %v4238 = vpop.xlane.xlu0 %4237
    %v4239 = vadd.f32 %v4000, %v4001
    %v4240 = vadd.f32 %v4239, %v4002
    %v4241 = vadd.f32 %v4240, %v4003
    %4242 = vadd.xlane.f32.xlu0 %v4241
    %v4243 = vpop.xlane.xlu0 %4242
    %v4244 = vadd.f32 %v4004, %v4005
    %v4245 = vadd.f32 %v4244, %v4006
    %v4246 = vadd.f32 %v4245, %v4007
    %4247 = vadd.xlane.f32.xlu0 %v4246
    %v4248 = vpop.xlane.xlu0 %4247
    %v4249 = vadd.f32 %v4008, %v4009
    %v4250 = vadd.f32 %v4249, %v4010
    %v4251 = vadd.f32 %v4250, %v4011
    %4252 = vadd.xlane.f32.xlu0 %v4251
    %v4253 = vpop.xlane.xlu0 %4252
    %v4254 = vadd.f32 %v4012, %v4013
    %v4255 = vadd.f32 %v4254, %v4014
    %v4256 = vadd.f32 %v4255, %v4015
    %4257 = vadd.xlane.f32.xlu0 %v4256
    %v4258 = vpop.xlane.xlu0 %4257
    %v4259 = vadd.f32 %v4016, %v4017
    %v4260 = vadd.f32 %v4259, %v4018
    %v4261 = vadd.f32 %v4260, %v4019
    %4262 = vadd.xlane.f32.xlu0 %v4261
    %v4263 = vpop.xlane.xlu0 %4262
    %v4264 = vadd.f32 %v4020, %v4021
    %v4265 = vadd.f32 %v4264, %v4022
    %v4266 = vadd.f32 %v4265, %v4023
    %4267 = vadd.xlane.f32.xlu0 %v4266
    %v4268 = vpop.xlane.xlu0 %4267
    %v4269 = vadd.f32 %v4024, %v4025
    %v4270 = vadd.f32 %v4269, %v4026
    %v4271 = vadd.f32 %v4270, %v4027
    %4272 = vadd.xlane.f32.xlu0 %v4271
    %v4273 = vpop.xlane.xlu0 %4272
    %v4274 = vadd.f32 %v4028, %v4029
    %v4275 = vadd.f32 %v4274, %v4030
    %v4276 = vadd.f32 %v4275, %v4031
    %4277 = vadd.xlane.f32.xlu0 %v4276
    %v4278 = vpop.xlane.xlu0 %4277
    %v4279 = vadd.f32 %v4032, %v4033
    %v4280 = vadd.f32 %v4279, %v4034
    %v4281 = vadd.f32 %v4280, %v4035
    %4282 = vadd.xlane.f32.xlu0 %v4281
    %v4283 = vpop.xlane.xlu0 %4282
    %v4284 = vadd.f32 %v4036, %v4037
    %v4285 = vadd.f32 %v4284, %v4038
    %v4286 = vadd.f32 %v4285, %v4039
    %4287 = vadd.xlane.f32.xlu0 %v4286
    %v4288 = vpop.xlane.xlu0 %4287
    %v4289 = vadd.f32 %v4040, %v4041
    %v4290 = vadd.f32 %v4289, %v4042
    %v4291 = vadd.f32 %v4290, %v4043
    %4292 = vadd.xlane.f32.xlu0 %v4291
    %v4293 = vpop.xlane.xlu0 %4292
    %v4294 = vadd.f32 %v4044, %v4045
    %v4295 = vadd.f32 %v4294, %v4046
    %v4296 = vadd.f32 %v4295, %v4047
    %4297 = vadd.xlane.f32.xlu0 %v4296
    %v4298 = vpop.xlane.xlu0 %4297
    %v4299 = vadd.f32 %v4048, %v4049
    %v4300 = vadd.f32 %v4299, %v4050
    %v4301 = vadd.f32 %v4300, %v4051
    %4302 = vadd.xlane.f32.xlu0 %v4301
    %v4303 = vpop.xlane.xlu0 %4302
    %v4304 = vadd.f32 %v4052, %v4053
    %v4305 = vadd.f32 %v4304, %v4054
    %v4306 = vadd.f32 %v4305, %v4055
    %4307 = vadd.xlane.f32.xlu0 %v4306
    %v4308 = vpop.xlane.xlu0 %4307
    %v4309 = vadd.f32 %v4056, %v4057
    %v4310 = vadd.f32 %v4309, %v4058
    %v4311 = vadd.f32 %v4310, %v4059
    %4312 = vadd.xlane.f32.xlu0 %v4311
    %v4313 = vpop.xlane.xlu0 %4312
    %v4314 = vadd.f32 %v4060, %v4061
    %v4315 = vadd.f32 %v4314, %v4062
    %v4316 = vadd.f32 %v4315, %v4063
    %4317 = vadd.xlane.f32.xlu0 %v4316
    %v4318 = vpop.xlane.xlu0 %4317
    %v4319 = vadd.f32 %v4064, %v4065
    %v4320 = vadd.f32 %v4319, %v4066
    %v4321 = vadd.f32 %v4320, %v4067
    %4322 = vadd.xlane.f32.xlu0 %v4321
    %v4323 = vpop.xlane.xlu0 %4322
    %v4324 = vadd.f32 %v4068, %v4069
    %v4325 = vadd.f32 %v4324, %v4070
    %v4326 = vadd.f32 %v4325, %v4071
    %4327 = vadd.xlane.f32.xlu0 %v4326
    %v4328 = vpop.xlane.xlu0 %4327
    %v4329 = vadd.f32 %v4072, %v4073
    %v4330 = vadd.f32 %v4329, %v4074
    %v4331 = vadd.f32 %v4330, %v4075
    %4332 = vadd.xlane.f32.xlu0 %v4331
    %v4333 = vpop.xlane.xlu0 %4332
    %v4334 = vadd.f32 %v4076, %v4077
    %v4335 = vadd.f32 %v4334, %v4078
    %v4336 = vadd.f32 %v4335, %v4079
    %4337 = vadd.xlane.f32.xlu0 %v4336
    %v4338 = vpop.xlane.xlu0 %4337
    %v4339 = vadd.f32 %v4080, %v4081
    %v4340 = vadd.f32 %v4339, %v4082
    %v4341 = vadd.f32 %v4340, %v4083
    %4342 = vadd.xlane.f32.xlu0 %v4341
    %v4343 = vpop.xlane.xlu0 %4342
    %v4344 = vadd.f32 %v4084, %v4085
    %v4345 = vadd.f32 %v4344, %v4086
    %v4346 = vadd.f32 %v4345, %v4087
    %4347 = vadd.xlane.f32.xlu0 %v4346
    %v4348 = vpop.xlane.xlu0 %4347
    %v4349 = vadd.f32 %v4088, %v4089
    %v4350 = vadd.f32 %v4349, %v4090
    %v4351 = vadd.f32 %v4350, %v4091
    %4352 = vadd.xlane.f32.xlu0 %v4351
    %v4353 = vpop.xlane.xlu0 %4352
    %v4354 = vadd.f32 %v4092, %v4093
    %v4355 = vadd.f32 %v4354, %v4094
    %v4356 = vadd.f32 %v4355, %v4095
    %4357 = vadd.xlane.f32.xlu0 %v4356
    %v4358 = vpop.xlane.xlu0 %4357
    %v4359 = vadd.f32 %v4096, %v4097
    %v4360 = vadd.f32 %v4359, %v4098
    %v4361 = vadd.f32 %v4360, %v4099
    %4362 = vadd.xlane.f32.xlu0 %v4361
    %v4363 = vpop.xlane.xlu0 %4362
    %v4364 = vadd.f32 %v4100, %v4101
    %v4365 = vadd.f32 %v4364, %v4102
    %v4366 = vadd.f32 %v4365, %v4103
    %4367 = vadd.xlane.f32.xlu0 %v4366
    %v4368 = vpop.xlane.xlu0 %4367
    %v4369 = vadd.f32 %v4104, %v4105
    %v4370 = vadd.f32 %v4369, %v4106
    %v4371 = vadd.f32 %v4370, %v4107
    %4372 = vadd.xlane.f32.xlu0 %v4371
    %v4373 = vpop.xlane.xlu0 %4372
    %v4374 = vadd.f32 %v4108, %v4109
    %v4375 = vadd.f32 %v4374, %v4110
    %v4376 = vadd.f32 %v4375, %v4111
    %4377 = vadd.xlane.f32.xlu0 %v4376
    %v4378 = vpop.xlane.xlu0 %4377
    %v4379 = vadd.f32 %v4112, %v4113
    %v4380 = vadd.f32 %v4379, %v4114
    %v4381 = vadd.f32 %v4380, %v4115
    %4382 = vadd.xlane.f32.xlu0 %v4381
    %v4383 = vpop.xlane.xlu0 %4382
    %v4384 = vadd.f32 %v4116, %v4117
    %v4385 = vadd.f32 %v4384, %v4118
    %v4386 = vadd.f32 %v4385, %v4119
    %4387 = vadd.xlane.f32.xlu0 %v4386
    %v4388 = vpop.xlane.xlu0 %4387
    %v4389 = vadd.f32 %v4120, %v4121
    %v4390 = vadd.f32 %v4389, %v4122
    %v4391 = vadd.f32 %v4390, %v4123
    %4392 = vadd.xlane.f32.xlu0 %v4391
    %v4393 = vpop.xlane.xlu0 %4392
    %v4394 = vadd.f32 %v4124, %v4125
    %v4395 = vadd.f32 %v4394, %v4126
    %v4396 = vadd.f32 %v4395, %v4127
    %4397 = vadd.xlane.f32.xlu0 %v4396
    %v4398 = vpop.xlane.xlu0 %4397
    %v4399 = vadd.f32 %v4128, %v4129
    %v4400 = vadd.f32 %v4399, %v4130
    %v4401 = vadd.f32 %v4400, %v4131
    %4402 = vadd.xlane.f32.xlu0 %v4401
    %v4403 = vpop.xlane.xlu0 %4402
    %v4404 = vadd.f32 %v4132, %v4133
    %v4405 = vadd.f32 %v4404, %v4134
    %v4406 = vadd.f32 %v4405, %v4135
    %4407 = vadd.xlane.f32.xlu0 %v4406
    %v4408 = vpop.xlane.xlu0 %4407
    %v4409 = vadd.f32 %v4136, %v4137
    %v4410 = vadd.f32 %v4409, %v4138
    %v4411 = vadd.f32 %v4410, %v4139
    %4412 = vadd.xlane.f32.xlu0 %v4411
    %v4413 = vpop.xlane.xlu0 %4412
    %v4414 = vadd.f32 %v4140, %v4141
    %v4415 = vadd.f32 %v4414, %v4142
    %v4416 = vadd.f32 %v4415, %v4143
    %4417 = vadd.xlane.f32.xlu0 %v4416
    %v4418 = vpop.xlane.xlu0 %4417
    %v4419 = vadd.f32 %v4144, %v4145
    %v4420 = vadd.f32 %v4419, %v4146
    %v4421 = vadd.f32 %v4420, %v4147
    %4422 = vadd.xlane.f32.xlu0 %v4421
    %v4423 = vpop.xlane.xlu0 %4422
    %v4424 = vadd.f32 %v4148, %v4149
    %v4425 = vadd.f32 %v4424, %v4150
    %v4426 = vadd.f32 %v4425, %v4151
    %4427 = vadd.xlane.f32.xlu0 %v4426
    %v4428 = vpop.xlane.xlu0 %4427
    %v4429 = vadd.f32 %v4152, %v4153
    %v4430 = vadd.f32 %v4429, %v4154
    %v4431 = vadd.f32 %v4430, %v4155
    %4432 = vadd.xlane.f32.xlu0 %v4431
    %v4433 = vpop.xlane.xlu0 %4432
    %v4434 = vadd.f32 %v4156, %v4157
    %v4435 = vadd.f32 %v4434, %v4158
    %v4436 = vadd.f32 %v4435, %v4159
    %4437 = vadd.xlane.f32.xlu0 %v4436
    %v4438 = vpop.xlane.xlu0 %4437
    %v4439 = vadd.f32 %v4160, %v4161
    %v4440 = vadd.f32 %v4439, %v4162
    %v4441 = vadd.f32 %v4440, %v4163
    %4442 = vadd.xlane.f32.xlu0 %v4441
    %v4443 = vpop.xlane.xlu0 %4442
    %v4444 = vld [vmem:[#allocation3] sm:$0x1]
    %v4446 = vlaneseq
    %v4447 = vshrl.u32 %v4446, 7
    %v4448 = vsub.s32 0, %v4447
    %v4449 = vrot.slane %v4444, %v4448
    %v4451 = vadd.f32 %v4168, %v4449
    %v4452 = vadd.f32 %v4173, %v4449
    %v4453 = vadd.f32 %v4178, %v4449
    %v4454 = vadd.f32 %v4183, %v4449
    %v4455 = vadd.f32 %v4188, %v4449
    %v4456 = vadd.f32 %v4193, %v4449
    %v4457 = vadd.f32 %v4198, %v4449
    %v4458 = vadd.f32 %v4203, %v4449
    %v4459 = vadd.f32 %v4208, %v4449
    %v4460 = vadd.f32 %v4213, %v4449
    %v4461 = vadd.f32 %v4218, %v4449
    %v4462 = vadd.f32 %v4223, %v4449
    %v4463 = vadd.f32 %v4228, %v4449
    %v4464 = vadd.f32 %v4233, %v4449
    %v4465 = vadd.f32 %v4238, %v4449
    %v4466 = vadd.f32 %v4243, %v4449
    %v4467 = vadd.f32 %v4248, %v4449
    %v4468 = vadd.f32 %v4253, %v4449
    %v4469 = vadd.f32 %v4258, %v4449
    %v4470 = vadd.f32 %v4263, %v4449
    %v4471 = vadd.f32 %v4268, %v4449
    %v4472 = vadd.f32 %v4273, %v4449
    %v4473 = vadd.f32 %v4278, %v4449
    %v4474 = vadd.f32 %v4283, %v4449
    %v4475 = vadd.f32 %v4288, %v4449
    %v4476 = vadd.f32 %v4293, %v4449
    %v4477 = vadd.f32 %v4298, %v4449
    %v4478 = vadd.f32 %v4303, %v4449
    %v4479 = vadd.f32 %v4308, %v4449
    %v4480 = vadd.f32 %v4313, %v4449
    %v4481 = vadd.f32 %v4318, %v4449
    %v4482 = vadd.f32 %v4323, %v4449
    %v4483 = vadd.f32 %v4328, %v4449
    %v4484 = vadd.f32 %v4333, %v4449
    %v4485 = vadd.f32 %v4338, %v4449
    %v4486 = vadd.f32 %v4343, %v4449
    %v4487 = vadd.f32 %v4348, %v4449
    %v4488 = vadd.f32 %v4353, %v4449
    %v4489 = vadd.f32 %v4358, %v4449
    %v4490 = vadd.f32 %v4363, %v4449
    %v4491 = vadd.f32 %v4368, %v4449
    %v4492 = vadd.f32 %v4373, %v4449
    %v4493 = vadd.f32 %v4378, %v4449
    %v4494 = vadd.f32 %v4383, %v4449
    %v4495 = vadd.f32 %v4388, %v4449
    %v4496 = vadd.f32 %v4393, %v4449
    %v4497 = vadd.f32 %v4398, %v4449
    %v4498 = vadd.f32 %v4403, %v4449
    %v4499 = vadd.f32 %v4408, %v4449
    %v4500 = vadd.f32 %v4413, %v4449
    %v4501 = vadd.f32 %v4418, %v4449
    %v4502 = vadd.f32 %v4423, %v4449
    %v4503 = vadd.f32 %v4428, %v4449
    %v4504 = vadd.f32 %v4433, %v4449
    %v4505 = vadd.f32 %v4438, %v4449
    %v4506 = vadd.f32 %v4443, %v4449
    %vm4507 = vcmask 7168
    %4508 = vst.msk [vmem:[%s9] sm:$0xff] %vm4507, %v4451
    %4509 = vst.msk [vmem:[%s9 + $0x8] sm:$0xff] %vm4507, %v4452
    %4510 = vst.msk [vmem:[%s9 + $0x10] sm:$0xff] %vm4507, %v4453
    %4511 = vst.msk [vmem:[%s9 + $0x18] sm:$0xff] %vm4507, %v4454
    %4512 = vst.msk [vmem:[%s9 + $0x20] sm:$0xff] %vm4507, %v4455
    %4513 = vst.msk [vmem:[%s9 + $0x28] sm:$0xff] %vm4507, %v4456
    %4514 = vst.msk [vmem:[%s9 + $0x30] sm:$0xff] %vm4507, %v4457
    %4515 = vst.msk [vmem:[%s9 + $0x38] sm:$0xff] %vm4507, %v4458
    %4516 = vst.msk [vmem:[%s9 + $0x40] sm:$0xff] %vm4507, %v4459
    %4517 = vst.msk [vmem:[%s9 + $0x48] sm:$0xff] %vm4507, %v4460
    %4518 = vst.msk [vmem:[%s9 + $0x50] sm:$0xff] %vm4507, %v4461
    %4519 = vst.msk [vmem:[%s9 + $0x58] sm:$0xff] %vm4507, %v4462
    %4520 = vst.msk [vmem:[%s9 + $0x60] sm:$0xff] %vm4507, %v4463
    %4521 = vst.msk [vmem:[%s9 + $0x68] sm:$0xff] %vm4507, %v4464
    %4522 = vst.msk [vmem:[%s9 + $0x70] sm:$0xff] %vm4507, %v4465
    %4523 = vst.msk [vmem:[%s9 + $0x78] sm:$0xff] %vm4507, %v4466
    %4524 = vst.msk [vmem:[%s9 + $0x80] sm:$0xff] %vm4507, %v4467
    %4525 = vst.msk [vmem:[%s9 + $0x88] sm:$0xff] %vm4507, %v4468
    %4526 = vst.msk [vmem:[%s9 + $0x90] sm:$0xff] %vm4507, %v4469
    %4527 = vst.msk [vmem:[%s9 + $0x98] sm:$0xff] %vm4507, %v4470
    %4528 = vst.msk [vmem:[%s9 + $0xa0] sm:$0xff] %vm4507, %v4471
    %4529 = vst.msk [vmem:[%s9 + $0xa8] sm:$0xff] %vm4507, %v4472
    %4530 = vst.msk [vmem:[%s9 + $0xb0] sm:$0xff] %vm4507, %v4473
    %4531 = vst.msk [vmem:[%s9 + $0xb8] sm:$0xff] %vm4507, %v4474
    %4532 = vst.msk [vmem:[%s9 + $0xc0] sm:$0xff] %vm4507, %v4475
    %4533 = vst.msk [vmem:[%s9 + $0xc8] sm:$0xff] %vm4507, %v4476
    %4534 = vst.msk [vmem:[%s9 + $0xd0] sm:$0xff] %vm4507, %v4477
    %4535 = vst.msk [vmem:[%s9 + $0xd8] sm:$0xff] %vm4507, %v4478
    %4536 = vst.msk [vmem:[%s9 + $0xe0] sm:$0xff] %vm4507, %v4479
    %4537 = vst.msk [vmem:[%s9 + $0xe8] sm:$0xff] %vm4507, %v4480
    %4538 = vst.msk [vmem:[%s9 + $0xf0] sm:$0xff] %vm4507, %v4481
    %4539 = vst.msk [vmem:[%s9 + $0xf8] sm:$0xff] %vm4507, %v4482
    %4540 = vst.msk [vmem:[%s9 + $0x100] sm:$0xff] %vm4507, %v4483
    %4541 = vst.msk [vmem:[%s9 + $0x108] sm:$0xff] %vm4507, %v4484
    %4542 = vst.msk [vmem:[%s9 + $0x110] sm:$0xff] %vm4507, %v4485
    %4543 = vst.msk [vmem:[%s9 + $0x118] sm:$0xff] %vm4507, %v4486
    %4544 = vst.msk [vmem:[%s9 + $0x120] sm:$0xff] %vm4507, %v4487
    %4545 = vst.msk [vmem:[%s9 + $0x128] sm:$0xff] %vm4507, %v4488
    %4546 = vst.msk [vmem:[%s9 + $0x130] sm:$0xff] %vm4507, %v4489
    %4547 = vst.msk [vmem:[%s9 + $0x138] sm:$0xff] %vm4507, %v4490
    %4548 = vst.msk [vmem:[%s9 + $0x140] sm:$0xff] %vm4507, %v4491
    %4549 = vst.msk [vmem:[%s9 + $0x148] sm:$0xff] %vm4507, %v4492
    %4550 = vst.msk [vmem:[%s9 + $0x150] sm:$0xff] %vm4507, %v4493
    %4551 = vst.msk [vmem:[%s9 + $0x158] sm:$0xff] %vm4507, %v4494
    %4552 = vst.msk [vmem:[%s9 + $0x160] sm:$0xff] %vm4507, %v4495
    %4553 = vst.msk [vmem:[%s9 + $0x168] sm:$0xff] %vm4507, %v4496
    %4554 = vst.msk [vmem:[%s9 + $0x170] sm:$0xff] %vm4507, %v4497
    %4555 = vst.msk [vmem:[%s9 + $0x178] sm:$0xff] %vm4507, %v4498
    %4556 = vst.msk [vmem:[%s9 + $0x180] sm:$0xff] %vm4507, %v4499
    %4557 = vst.msk [vmem:[%s9 + $0x188] sm:$0xff] %vm4507, %v4500
    %4558 = vst.msk [vmem:[%s9 + $0x190] sm:$0xff] %vm4507, %v4501
    %4559 = vst.msk [vmem:[%s9 + $0x198] sm:$0xff] %vm4507, %v4502
    %4560 = vst.msk [vmem:[%s9 + $0x1a0] sm:$0xff] %vm4507, %v4503
    %4561 = vst.msk [vmem:[%s9 + $0x1a8] sm:$0xff] %vm4507, %v4504
    %4562 = vst.msk [vmem:[%s9 + $0x1b0] sm:$0xff] %vm4507, %v4505
    %4563 = vst.msk [vmem:[%s9 + $0x1b8] sm:$0xff] %vm4507, %v4506
    // Predicated region
    $region42: #{critic_forward.1} parent=1 // pred_check
      _
    $region43: #{critic_forward.1} parent=1 // pred_check_branch
      %4565 = sbr.rel (0) target = $region45
    $region44: #{critic_forward.1} parent=1 // pred_region
      _
    $region45: #{critic_forward.1} parent=1 // pred_fallthru
      _
    // Predicated region
    $region46: #{critic_forward.1} parent=1 // pred_check
      _
    $region47: #{critic_forward.1} parent=1 // pred_check_branch
      %4567 = sbr.rel (0) target = $region49
    $region48: #{critic_forward.1} parent=1 // pred_region
      _
    $region49: #{critic_forward.1} parent=1 // pred_fallthru
      _
    %4568 = vsyncpa [#allocation5], 1

</llo_original>
